<compile_context>
chip_gen: v7x
topology: tpu7x:2x2x1
jax: 0.10.0
libtpu: 0.0.40
codegen_flags: <defaults>
</compile_context>

<pallas_src>
import functools

import jax
import jax.numpy as jnp
from jax.experimental import pallas as pl
from jax.experimental.pallas import tpu as pltpu

LANE = 128
PH = 10   # max horizontal pad in pixel groups (1x21 conv)
PV = 10   # max vertical pad in rows          (21x1 conv)
RVT = 8   # hbuf top-row halo (>= 2 needed for 5x5; 8 for sublane alignment)
RVB = 2   # hbuf bottom-row halo (5x5 conv)
VT = 16   # vbuf top-row halo (>= 10 needed; 16 for sublane alignment)


def _round_up(x, m):
    return (x + m - 1) // m * m


def _taps(buf_ref, w_ref, r0, c0, cstride, H, WL, n_acc=4):
    """sum_{ki,kj} w_ref[ki,kj,:] * buf[r0+ki : r0+ki+H, c0+kj*cstride :+WL].

    Weight rows are sliced one-at-a-time from the Ref; partial sums are
    spread over `n_acc` interleaved accumulators and tree-summed.
    """
    kh, kw = w_ref.shape[0], w_ref.shape[1]
    n = max(1, min(n_acc, kh * kw))
    accs = [None] * n
    idx = 0
    for ki in range(kh):
        for kj in range(kw):
            c = c0 + kj * cstride
            t = w_ref[ki, kj:kj + 1, :] * buf_ref[r0 + ki:r0 + ki + H, c:c + WL]
            a = idx % n
            accs[a] = t if accs[a] is None else accs[a] + t
            idx += 1
    accs = [a for a in accs if a is not None]
    while len(accs) > 1:
        nxt = []
        for i in range(0, len(accs), 2):
            nxt.append(accs[i] + accs[i + 1] if i + 1 < len(accs) else accs[i])
        accs = nxt
    return accs[0]


def _mscaa_kernel(x_ref,
                  w0_ref, b0_ref,
                  w01_ref, b01_ref, w02_ref, b02_ref,
                  w11_ref, b11_ref, w12_ref, b12_ref,
                  w21_ref, b21_ref, w22_ref, b22_ref,
                  wc_ref, b3_ref,
                  o_ref,
                  hbuf, vbuf, *, C, WC, col0):
    H = x_ref.shape[1]
    WL = x_ref.shape[2]          # lane-padded slab width (multiple of 128)
    f32 = jnp.float32
    hrows, hcols = hbuf.shape
    vrows = vbuf.shape[0]

    # ---- zero the halo strips (lane-aligned, interiors always rewritten) ---
    hbuf[:, :col0] = jnp.zeros((hrows, col0), f32)
    hbuf[:, col0 + WL:] = jnp.zeros((hrows, hcols - col0 - WL), f32)
    hbuf[:RVT, col0:col0 + WL] = jnp.zeros((RVT, WL), f32)
    hbuf[RVT + H:, col0:col0 + WL] = jnp.zeros((hrows - RVT - H, WL), f32)
    vbuf[:VT, :] = jnp.zeros((VT, WL), f32)
    vbuf[VT + H:, :] = jnp.zeros((vrows - VT - H, WL), f32)

    # Padded lanes (>= W*C) must stay zero when re-stored into hbuf, since
    # they double as part of the right conv halo.
    lane = jax.lax.broadcasted_iota(jnp.int32, (1, WL), 1)
    valid = lane < WC

    # ---- 5x5 depthwise conv (padding 2) on the input ------------------------
    x = x_ref[0]
    hbuf[RVT:RVT + H, col0:col0 + WL] = x
    attn = _taps(hbuf, w0_ref, RVT - 2, col0 - 2 * C, C, H, WL) + b0_ref[...]
    attn = jnp.where(valid, attn, 0.0)

    # attn feeds all three 1xK convs: stash it (halo already zero).
    hbuf[RVT:RVT + H, col0:col0 + WL] = attn
    s = attn                               # running branch sum

    # ---- fused 1x7 / 1x11 / 1x21 horizontal convs over one shift loop ------
    hw = ((w01_ref, 3), (w11_ref, 5), (w21_ref, 10))
    hb = (b01_ref, b11_ref, b21_ref)
    acc = [[None, None] for _ in range(3)]
    for j in range(-PH, PH + 1):
        win = None
        for bi, (w_ref, p) in enumerate(hw):
            if abs(j) <= p:
                if win is None:
                    c = col0 + j * C
                    win = hbuf[RVT:RVT + H, c:c + WL]
                t = w_ref[0, j + p:j + p + 1, :] * win
                sl = (j + PH) & 1
                a = acc[bi][sl]
                acc[bi][sl] = t if a is None else a + t
    t_h = []
    for bi in range(3):
        a0, a1 = acc[bi]
        th = a0 if a1 is None else (a1 if a0 is None else a0 + a1)
        t_h.append(th + hb[bi][...])

    # ---- Kx1 vertical convs (per branch, reusing vbuf) ----------------------
    vw = ((w02_ref, b02_ref, 3), (w12_ref, b12_ref, 5), (w22_ref, b22_ref, 10))
    for bi, (w_ref, b_ref, p) in enumerate(vw):
        vbuf[VT:VT + H, :] = t_h[bi]
        t = _taps(vbuf, w_ref, VT - p, 0, C, H, WL) + b_ref[...]
        s = s + t

    # ---- 1x1 pointwise conv as 2C-1 diagonal row FMAs on the VPU ------------
    hbuf[RVT:RVT + H, col0:col0 + WL] = jnp.where(valid, s, 0.0)
    out = _taps(hbuf, wc_ref, RVT, col0 - (C - 1), 1, H, WL) + b3_ref[...]

    # Attention gating: out * u
    o_ref[0] = (out * x).astype(o_ref.dtype)


def mscaa_pallas(x_nchw, params):
    B, C, H, W = x_nchw.shape
    WC = W * C
    WL = _round_up(WC, LANE)                 # lane-dense slab width
    col0 = _round_up(PH * C, LANE)           # interior starts lane-aligned
    hcols = _round_up(col0 + WL + PH * C, LANE)

    xf = jnp.transpose(x_nchw.astype(jnp.float32), (0, 2, 3, 1)).reshape(B, H, WC)
    xf = jnp.pad(xf, ((0, 0), (0, 0), (0, WL - WC)))

    def dw_rows(w):                          # (C, kh, kw) -> (kh, kw, WL)
        kh, kw = w.shape[1], w.shape[2]
        wt = jnp.transpose(w, (1, 2, 0))                      # (kh, kw, C)
        wt = jnp.tile(wt[:, :, None, :], (1, 1, W, 1)).reshape(kh, kw, WC)
        return jnp.pad(wt, ((0, 0), (0, 0), (0, WL - WC)))

    def bias_row(b):                         # (C,) -> (1, WL)
        return jnp.pad(jnp.tile(b, W), (0, WL - WC)).reshape(1, WL)

    # 1x1 conv (Cout, Cin) decomposed into 2C-1 diagonals over the lane axis:
    # out[w*C+co] = sum_j wc[j, w*C+co] * s[w*C+co+j],  wc masked where
    # co+j falls outside [0, C).
    w3 = params['w3']                        # (Cout=C, Cin=C)
    co = jnp.arange(C)
    diag_rows = []
    for j in range(-(C - 1), C):
        ci = co + j
        ok = (ci >= 0) & (ci < C)
        pat = jnp.where(ok, w3[co, jnp.clip(ci, 0, C - 1)], 0.0)   # (C,)
        diag_rows.append(jnp.pad(jnp.tile(pat, W), (0, WL - WC)))
    wc = jnp.stack(diag_rows).reshape(1, 2 * C - 1, WL)

    args = [
        xf,
        dw_rows(params['w0']),   bias_row(params['b0']),
        dw_rows(params['w0_1']), bias_row(params['b0_1']),
        dw_rows(params['w0_2']), bias_row(params['b0_2']),
        dw_rows(params['w1_1']), bias_row(params['b1_1']),
        dw_rows(params['w1_2']), bias_row(params['b1_2']),
        dw_rows(params['w2_1']), bias_row(params['b2_1']),
        dw_rows(params['w2_2']), bias_row(params['b2_2']),
        wc,                      bias_row(params['b3']),
    ]

    def const_spec(a):
        # Whole (small) parameter array as one block, same for every step.
        return pl.BlockSpec(a.shape, lambda b, _n=a.ndim: (0,) * _n)

    in_specs = [pl.BlockSpec((1, H, WL), lambda b: (b, 0, 0))]
    in_specs += [const_spec(a) for a in args[1:]]

    kernel = functools.partial(_mscaa_kernel, C=C, WC=WC, col0=col0)

    out = pl.pallas_call(
        kernel,
        out_shape=jax.ShapeDtypeStruct((B, H, WL), jnp.float32),
        grid_spec=pltpu.PrefetchScalarGridSpec(
            num_scalar_prefetch=0,
            grid=(B,),
            in_specs=in_specs,
            out_specs=pl.BlockSpec((1, H, WL), lambda b: (b, 0, 0)),
            scratch_shapes=[
                pltpu.VMEM((RVT + H + RVB, hcols), jnp.float32),  # hbuf
                pltpu.VMEM((VT + H + PV, WL), jnp.float32),       # vbuf
            ],
        ),
        compiler_params=pltpu.CompilerParams(
            dimension_semantics=("parallel",),
            vmem_limit_bytes=32 * 1024 * 1024),
    )(*args)

    out = out[:, :, :WC].reshape(B, H, W, C)
    return jnp.transpose(out, (0, 3, 1, 2))      # back to NCHW


def init_params(key, C):
    """Deterministic synthetic init (nn.Conv2d-style uniform(-1/sqrt(fan_in)))."""
    keys = jax.random.split(key, 16)

    def w(k, shape, fan_in):
        bound = 1.0 / jnp.sqrt(float(fan_in))
        return jax.random.uniform(k, shape, jnp.float32, -bound, bound)

    p = {}
    p['w0'] = w(keys[0], (C, 5, 5), 25);     p['b0'] = w(keys[1], (C,), 25)
    p['w0_1'] = w(keys[2], (C, 1, 7), 7);    p['b0_1'] = w(keys[3], (C,), 7)
    p['w0_2'] = w(keys[4], (C, 7, 1), 7);    p['b0_2'] = w(keys[5], (C,), 7)
    p['w1_1'] = w(keys[6], (C, 1, 11), 11);  p['b1_1'] = w(keys[7], (C,), 11)
    p['w1_2'] = w(keys[8], (C, 11, 1), 11);  p['b1_2'] = w(keys[9], (C,), 11)
    p['w2_1'] = w(keys[10], (C, 1, 21), 21); p['b2_1'] = w(keys[11], (C,), 21)
    p['w2_2'] = w(keys[12], (C, 21, 1), 21); p['b2_2'] = w(keys[13], (C,), 21)
    p['w3'] = w(keys[14], (C, C), C);        p['b3'] = w(keys[15], (C,), C)
    return p


def mscaa_ref(x, p):
    """Pure-JAX (XLA conv) reference of the PyTorch forward, NCHW."""
    C = x.shape[1]

    def dw(v, w, b, pad):
        out = jax.lax.conv_general_dilated(
            v, w[:, None, :, :], (1, 1),
            ((pad[0], pad[0]), (pad[1], pad[1])),
            dimension_numbers=('NCHW', 'OIHW', 'NCHW'),
            feature_group_count=C)
        return out + b[None, :, None, None]

    u = x
    attn = dw(x, p['w0'], p['b0'], (2, 2))
    a0 = dw(dw(attn, p['w0_1'], p['b0_1'], (0, 3)), p['w0_2'], p['b0_2'], (3, 0))
    a1 = dw(dw(attn, p['w1_1'], p['b1_1'], (0, 5)), p['w1_2'], p['b1_2'], (5, 0))
    a2 = dw(dw(attn, p['w2_1'], p['b2_1'], (0, 10)), p['w2_2'], p['b2_2'], (10, 0))
    s = attn + a0 + a1 + a2
    out = jax.lax.conv_general_dilated(
        s, p['w3'][:, :, None, None], (1, 1), ((0, 0), (0, 0)),
        dimension_numbers=('NCHW', 'OIHW', 'NCHW'))
    out = out + p['b3'][None, :, None, None]
    return out * u


if __name__ == "__main__":
    key = jax.random.PRNGKey(0)
    kx, kp = jax.random.split(key)

    B, C, H, W = 2, 4, 16, 16
    x = jax.random.normal(kx, (B, C, H, W), jnp.float32)
    params = init_params(kp, C)

    out = mscaa_pallas(x, params)
    out = jax.block_until_ready(out)

    ref = mscaa_ref(x, params)
    assert out.shape == ref.shape == (B, C, H, W)
    max_err = float(jnp.max(jnp.abs(out - ref)))
    if max_err > 1e-4:
        raise AssertionError(f"Pallas/ref mismatch: max abs err = {max_err}")

    print("KERNEL_OK")
</pallas_src>

<mosaic_0001>
module attributes {stable_mosaic.version = 11 : i64} {
  func.func @_mscaa_kernel(%arg0: i32, %arg1: memref<1x16x128xf32, #tpu.memory_space<vmem>>, %arg2: memref<5x5x128xf32, #tpu.memory_space<vmem>>, %arg3: memref<1x128xf32, #tpu.memory_space<vmem>>, %arg4: memref<1x7x128xf32, #tpu.memory_space<vmem>>, %arg5: memref<1x128xf32, #tpu.memory_space<vmem>>, %arg6: memref<7x1x128xf32, #tpu.memory_space<vmem>>, %arg7: memref<1x128xf32, #tpu.memory_space<vmem>>, %arg8: memref<1x11x128xf32, #tpu.memory_space<vmem>>, %arg9: memref<1x128xf32, #tpu.memory_space<vmem>>, %arg10: memref<11x1x128xf32, #tpu.memory_space<vmem>>, %arg11: memref<1x128xf32, #tpu.memory_space<vmem>>, %arg12: memref<1x21x128xf32, #tpu.memory_space<vmem>>, %arg13: memref<1x128xf32, #tpu.memory_space<vmem>>, %arg14: memref<21x1x128xf32, #tpu.memory_space<vmem>>, %arg15: memref<1x128xf32, #tpu.memory_space<vmem>>, %arg16: memref<1x7x128xf32, #tpu.memory_space<vmem>>, %arg17: memref<1x128xf32, #tpu.memory_space<vmem>>, %arg18: memref<1x16x128xf32, #tpu.memory_space<vmem>>, %arg19: memref<26x384xf32, #tpu.memory_space<vmem>>, %arg20: memref<42x128xf32, #tpu.memory_space<vmem>>) attributes {dimension_semantics = [#tpu.dimension_semantics<parallel>], iteration_bounds = array<i64: 2>, scalar_prefetch = 0 : i64, scratch_operands = 2 : i64, tpu.core_type = #tpu.core_type<tc>, window_params = [{transform_indices = @transform_0, window_bounds = array<i64: 1, 16, 128>}, {pipeline_mode = #tpu.pipeline_mode<synchronous>, transform_indices = @transform_1, window_bounds = array<i64: 5, 5, 128>}, {pipeline_mode = #tpu.pipeline_mode<synchronous>, transform_indices = @transform_2, window_bounds = array<i64: 1, 128>}, {pipeline_mode = #tpu.pipeline_mode<synchronous>, transform_indices = @transform_3, window_bounds = array<i64: 1, 7, 128>}, {pipeline_mode = #tpu.pipeline_mode<synchronous>, transform_indices = @transform_4, window_bounds = array<i64: 1, 128>}, {pipeline_mode = #tpu.pipeline_mode<synchronous>, transform_indices = @transform_5, window_bounds = array<i64: 7, 1, 128>}, {pipeline_mode = #tpu.pipeline_mode<synchronous>, transform_indices = @transform_6, window_bounds = array<i64: 1, 128>}, {pipeline_mode = #tpu.pipeline_mode<synchronous>, transform_indices = @transform_7, window_bounds = array<i64: 1, 11, 128>}, {pipeline_mode = #tpu.pipeline_mode<synchronous>, transform_indices = @transform_8, window_bounds = array<i64: 1, 128>}, {pipeline_mode = #tpu.pipeline_mode<synchronous>, transform_indices = @transform_9, window_bounds = array<i64: 11, 1, 128>}, {pipeline_mode = #tpu.pipeline_mode<synchronous>, transform_indices = @transform_10, window_bounds = array<i64: 1, 128>}, {pipeline_mode = #tpu.pipeline_mode<synchronous>, transform_indices = @transform_11, window_bounds = array<i64: 1, 21, 128>}, {pipeline_mode = #tpu.pipeline_mode<synchronous>, transform_indices = @transform_12, window_bounds = array<i64: 1, 128>}, {pipeline_mode = #tpu.pipeline_mode<synchronous>, transform_indices = @transform_13, window_bounds = array<i64: 21, 1, 128>}, {pipeline_mode = #tpu.pipeline_mode<synchronous>, transform_indices = @transform_14, window_bounds = array<i64: 1, 128>}, {pipeline_mode = #tpu.pipeline_mode<synchronous>, transform_indices = @transform_15, window_bounds = array<i64: 1, 7, 128>}, {pipeline_mode = #tpu.pipeline_mode<synchronous>, transform_indices = @transform_16, window_bounds = array<i64: 1, 128>}, {transform_indices = @transform_17, window_bounds = array<i64: 1, 16, 128>}]} {
    %cst = arith.constant 0.000000e+00 : f32
    %0 = vector.broadcast %cst : f32 to vector<26x128xf32>
    %c0 = arith.constant 0 : index
    %c0_0 = arith.constant 0 : index
    %1 = vector.load %arg19[%c0, %c0_0] : memref<26x384xf32, #tpu.memory_space<vmem>>, vector<26x128xf32>
    tpu.vector_store %arg19[%c0, %c0_0], %0 {strides = array<i32>} : memref<26x384xf32, #tpu.memory_space<vmem>>, vector<26x128xf32>,
    %cst_1 = arith.constant 0.000000e+00 : f32
    %2 = vector.broadcast %cst_1 : f32 to vector<26x128xf32>
    %c0_2 = arith.constant 0 : index
    %c256 = arith.constant 256 : index
    %3 = vector.load %arg19[%c0_2, %c256] : memref<26x384xf32, #tpu.memory_space<vmem>>, vector<26x128xf32>
    tpu.vector_store %arg19[%c0_2, %c256], %2 {strides = array<i32>} : memref<26x384xf32, #tpu.memory_space<vmem>>, vector<26x128xf32>,
    %cst_3 = arith.constant 0.000000e+00 : f32
    %4 = vector.broadcast %cst_3 : f32 to vector<8x128xf32>
    %c0_4 = arith.constant 0 : index
    %c128 = arith.constant 128 : index
    %5 = vector.load %arg19[%c0_4, %c128] : memref<26x384xf32, #tpu.memory_space<vmem>>, vector<8x128xf32>
    tpu.vector_store %arg19[%c0_4, %c128], %4 {strides = array<i32>} : memref<26x384xf32, #tpu.memory_space<vmem>>, vector<8x128xf32>,
    %cst_5 = arith.constant 0.000000e+00 : f32
    %6 = vector.broadcast %cst_5 : f32 to vector<2x128xf32>
    %c24 = arith.constant 24 : index
    %c128_6 = arith.constant 128 : index
    %7 = vector.load %arg19[%c24, %c128_6] : memref<26x384xf32, #tpu.memory_space<vmem>>, vector<2x128xf32>
    tpu.vector_store %arg19[%c24, %c128_6], %6 {strides = array<i32>} : memref<26x384xf32, #tpu.memory_space<vmem>>, vector<2x128xf32>,
    %cst_7 = arith.constant 0.000000e+00 : f32
    %8 = vector.broadcast %cst_7 : f32 to vector<16x128xf32>
    %c0_8 = arith.constant 0 : index
    %c0_9 = arith.constant 0 : index
    %9 = vector.load %arg20[%c0_8, %c0_9] : memref<42x128xf32, #tpu.memory_space<vmem>>, vector<16x128xf32>
    tpu.vector_store %arg20[%c0_8, %c0_9], %8 {strides = array<i32>} : memref<42x128xf32, #tpu.memory_space<vmem>>, vector<16x128xf32>,
    %cst_10 = arith.constant 0.000000e+00 : f32
    %10 = vector.broadcast %cst_10 : f32 to vector<10x128xf32>
    %c32 = arith.constant 32 : index
    %c0_11 = arith.constant 0 : index
    %11 = vector.load %arg20[%c32, %c0_11] : memref<42x128xf32, #tpu.memory_space<vmem>>, vector<10x128xf32>
    tpu.vector_store %arg20[%c32, %c0_11], %10 {strides = array<i32>} : memref<42x128xf32, #tpu.memory_space<vmem>>, vector<10x128xf32>,
    %12 = tpu.iota {dimensions = array<i32: 1>} : vector<1x128xi32>
    %c64_i32 = arith.constant 64 : i32
    %13 = vector.broadcast %c64_i32 : i32 to vector<1x128xi32>
    %14 = arith.cmpi slt, %12, %13 : vector<1x128xi32>
    %c0_12 = arith.constant 0 : index
    %c0_13 = arith.constant 0 : index
    %c0_14 = arith.constant 0 : index
    %15 = vector.load %arg1[%c0_12, %c0_13, %c0_14] : memref<1x16x128xf32, #tpu.memory_space<vmem>>, vector<1x16x128xf32>
    %16 = vector.shape_cast %15 : vector<1x16x128xf32> to vector<16x128xf32>
    %c8 = arith.constant 8 : index
    %c128_15 = arith.constant 128 : index
    %17 = vector.load %arg19[%c8, %c128_15] : memref<26x384xf32, #tpu.memory_space<vmem>>, vector<16x128xf32>
    tpu.vector_store %arg19[%c8, %c128_15], %16 {strides = array<i32>} : memref<26x384xf32, #tpu.memory_space<vmem>>, vector<16x128xf32>,
    %c0_16 = arith.constant 0 : index
    %c0_17 = arith.constant 0 : index
    %c0_18 = arith.constant 0 : index
    %18 = vector.load %arg2[%c0_16, %c0_17, %c0_18] : memref<5x5x128xf32, #tpu.memory_space<vmem>>, vector<1x1x128xf32>
    %19 = vector.shape_cast %18 : vector<1x1x128xf32> to vector<1x128xf32>
    %c6 = arith.constant 6 : index
    %c120 = arith.constant 120 : index
    %20 = vector.load %arg19[%c6, %c120] : memref<26x384xf32, #tpu.memory_space<vmem>>, vector<16x128xf32>
    %21 = vector.broadcast %19 : vector<1x128xf32> to vector<16x128xf32>
    %22 = arith.mulf %21, %20 : vector<16x128xf32>
    %c0_19 = arith.constant 0 : index
    %c1 = arith.constant 1 : index
    %c0_20 = arith.constant 0 : index
    %23 = vector.load %arg2[%c0_19, %c1, %c0_20] : memref<5x5x128xf32, #tpu.memory_space<vmem>>, vector<1x1x128xf32>
    %24 = vector.shape_cast %23 : vector<1x1x128xf32> to vector<1x128xf32>
    %c6_21 = arith.constant 6 : index
    %c124 = arith.constant 124 : index
    %25 = vector.load %arg19[%c6_21, %c124] : memref<26x384xf32, #tpu.memory_space<vmem>>, vector<16x128xf32>
    %26 = vector.broadcast %24 : vector<1x128xf32> to vector<16x128xf32>
    %27 = arith.mulf %26, %25 : vector<16x128xf32>
    %c0_22 = arith.constant 0 : index
    %c2 = arith.constant 2 : index
    %c0_23 = arith.constant 0 : index
    %28 = vector.load %arg2[%c0_22, %c2, %c0_23] : memref<5x5x128xf32, #tpu.memory_space<vmem>>, vector<1x1x128xf32>
    %29 = vector.shape_cast %28 : vector<1x1x128xf32> to vector<1x128xf32>
    %c6_24 = arith.constant 6 : index
    %c128_25 = arith.constant 128 : index
    %30 = vector.load %arg19[%c6_24, %c128_25] : memref<26x384xf32, #tpu.memory_space<vmem>>, vector<16x128xf32>
    %31 = vector.broadcast %29 : vector<1x128xf32> to vector<16x128xf32>
    %32 = arith.mulf %31, %30 : vector<16x128xf32>
    %c0_26 = arith.constant 0 : index
    %c3 = arith.constant 3 : index
    %c0_27 = arith.constant 0 : index
    %33 = vector.load %arg2[%c0_26, %c3, %c0_27] : memref<5x5x128xf32, #tpu.memory_space<vmem>>, vector<1x1x128xf32>
    %34 = vector.shape_cast %33 : vector<1x1x128xf32> to vector<1x128xf32>
    %c6_28 = arith.constant 6 : index
    %c132 = arith.constant 132 : index
    %35 = vector.load %arg19[%c6_28, %c132] : memref<26x384xf32, #tpu.memory_space<vmem>>, vector<16x128xf32>
    %36 = vector.broadcast %34 : vector<1x128xf32> to vector<16x128xf32>
    %37 = arith.mulf %36, %35 : vector<16x128xf32>
    %c0_29 = arith.constant 0 : index
    %c4 = arith.constant 4 : index
    %c0_30 = arith.constant 0 : index
    %38 = vector.load %arg2[%c0_29, %c4, %c0_30] : memref<5x5x128xf32, #tpu.memory_space<vmem>>, vector<1x1x128xf32>
    %39 = vector.shape_cast %38 : vector<1x1x128xf32> to vector<1x128xf32>
    %c6_31 = arith.constant 6 : index
    %c136 = arith.constant 136 : index
    %40 = vector.load %arg19[%c6_31, %c136] : memref<26x384xf32, #tpu.memory_space<vmem>>, vector<16x128xf32>
    %41 = vector.broadcast %39 : vector<1x128xf32> to vector<16x128xf32>
    %42 = arith.mulf %41, %40 : vector<16x128xf32>
    %43 = arith.addf %22, %42 : vector<16x128xf32>
    %c1_32 = arith.constant 1 : index
    %c0_33 = arith.constant 0 : index
    %c0_34 = arith.constant 0 : index
    %44 = vector.load %arg2[%c1_32, %c0_33, %c0_34] : memref<5x5x128xf32, #tpu.memory_space<vmem>>, vector<1x1x128xf32>
    %45 = vector.shape_cast %44 : vector<1x1x128xf32> to vector<1x128xf32>
    %c7 = arith.constant 7 : index
    %c120_35 = arith.constant 120 : index
    %46 = vector.load %arg19[%c7, %c120_35] : memref<26x384xf32, #tpu.memory_space<vmem>>, vector<16x128xf32>
    %47 = vector.broadcast %45 : vector<1x128xf32> to vector<16x128xf32>
    %48 = arith.mulf %47, %46 : vector<16x128xf32>
    %49 = arith.addf %27, %48 : vector<16x128xf32>
    %c1_36 = arith.constant 1 : index
    %c1_37 = arith.constant 1 : index
    %c0_38 = arith.constant 0 : index
    %50 = vector.load %arg2[%c1_36, %c1_37, %c0_38] : memref<5x5x128xf32, #tpu.memory_space<vmem>>, vector<1x1x128xf32>
    %51 = vector.shape_cast %50 : vector<1x1x128xf32> to vector<1x128xf32>
    %c7_39 = arith.constant 7 : index
    %c124_40 = arith.constant 124 : index
    %52 = vector.load %arg19[%c7_39, %c124_40] : memref<26x384xf32, #tpu.memory_space<vmem>>, vector<16x128xf32>
    %53 = vector.broadcast %51 : vector<1x128xf32> to vector<16x128xf32>
    %54 = arith.mulf %53, %52 : vector<16x128xf32>
    %55 = arith.addf %32, %54 : vector<16x128xf32>
    %c1_41 = arith.constant 1 : index
    %c2_42 = arith.constant 2 : index
    %c0_43 = arith.constant 0 : index
    %56 = vector.load %arg2[%c1_41, %c2_42, %c0_43] : memref<5x5x128xf32, #tpu.memory_space<vmem>>, vector<1x1x128xf32>
    %57 = vector.shape_cast %56 : vector<1x1x128xf32> to vector<1x128xf32>
    %c7_44 = arith.constant 7 : index
    %c128_45 = arith.constant 128 : index
    %58 = vector.load %arg19[%c7_44, %c128_45] : memref<26x384xf32, #tpu.memory_space<vmem>>, vector<16x128xf32>
    %59 = vector.broadcast %57 : vector<1x128xf32> to vector<16x128xf32>
    %60 = arith.mulf %59, %58 : vector<16x128xf32>
    %61 = arith.addf %37, %60 : vector<16x128xf32>
    %c1_46 = arith.constant 1 : index
    %c3_47 = arith.constant 3 : index
    %c0_48 = arith.constant 0 : index
    %62 = vector.load %arg2[%c1_46, %c3_47, %c0_48] : memref<5x5x128xf32, #tpu.memory_space<vmem>>, vector<1x1x128xf32>
    %63 = vector.shape_cast %62 : vector<1x1x128xf32> to vector<1x128xf32>
    %c7_49 = arith.constant 7 : index
    %c132_50 = arith.constant 132 : index
    %64 = vector.load %arg19[%c7_49, %c132_50] : memref<26x384xf32, #tpu.memory_space<vmem>>, vector<16x128xf32>
    %65 = vector.broadcast %63 : vector<1x128xf32> to vector<16x128xf32>
    %66 = arith.mulf %65, %64 : vector<16x128xf32>
    %67 = arith.addf %43, %66 : vector<16x128xf32>
    %c1_51 = arith.constant 1 : index
    %c4_52 = arith.constant 4 : index
    %c0_53 = arith.constant 0 : index
    %68 = vector.load %arg2[%c1_51, %c4_52, %c0_53] : memref<5x5x128xf32, #tpu.memory_space<vmem>>, vector<1x1x128xf32>
    %69 = vector.shape_cast %68 : vector<1x1x128xf32> to vector<1x128xf32>
    %c7_54 = arith.constant 7 : index
    %c136_55 = arith.constant 136 : index
    %70 = vector.load %arg19[%c7_54, %c136_55] : memref<26x384xf32, #tpu.memory_space<vmem>>, vector<16x128xf32>
    %71 = vector.broadcast %69 : vector<1x128xf32> to vector<16x128xf32>
    %72 = arith.mulf %71, %70 : vector<16x128xf32>
    %73 = arith.addf %49, %72 : vector<16x128xf32>
    %c2_56 = arith.constant 2 : index
    %c0_57 = arith.constant 0 : index
    %c0_58 = arith.constant 0 : index
    %74 = vector.load %arg2[%c2_56, %c0_57, %c0_58] : memref<5x5x128xf32, #tpu.memory_space<vmem>>, vector<1x1x128xf32>
    %75 = vector.shape_cast %74 : vector<1x1x128xf32> to vector<1x128xf32>
    %c8_59 = arith.constant 8 : index
    %c120_60 = arith.constant 120 : index
    %76 = vector.load %arg19[%c8_59, %c120_60] : memref<26x384xf32, #tpu.memory_space<vmem>>, vector<16x128xf32>
    %77 = vector.broadcast %75 : vector<1x128xf32> to vector<16x128xf32>
    %78 = arith.mulf %77, %76 : vector<16x128xf32>
    %79 = arith.addf %55, %78 : vector<16x128xf32>
    %c2_61 = arith.constant 2 : index
    %c1_62 = arith.constant 1 : index
    %c0_63 = arith.constant 0 : index
    %80 = vector.load %arg2[%c2_61, %c1_62, %c0_63] : memref<5x5x128xf32, #tpu.memory_space<vmem>>, vector<1x1x128xf32>
    %81 = vector.shape_cast %80 : vector<1x1x128xf32> to vector<1x128xf32>
    %c8_64 = arith.constant 8 : index
    %c124_65 = arith.constant 124 : index
    %82 = vector.load %arg19[%c8_64, %c124_65] : memref<26x384xf32, #tpu.memory_space<vmem>>, vector<16x128xf32>
    %83 = vector.broadcast %81 : vector<1x128xf32> to vector<16x128xf32>
    %84 = arith.mulf %83, %82 : vector<16x128xf32>
    %85 = arith.addf %61, %84 : vector<16x128xf32>
    %c2_66 = arith.constant 2 : index
    %c2_67 = arith.constant 2 : index
    %c0_68 = arith.constant 0 : index
    %86 = vector.load %arg2[%c2_66, %c2_67, %c0_68] : memref<5x5x128xf32, #tpu.memory_space<vmem>>, vector<1x1x128xf32>
    %87 = vector.shape_cast %86 : vector<1x1x128xf32> to vector<1x128xf32>
    %c8_69 = arith.constant 8 : index
    %c128_70 = arith.constant 128 : index
    %88 = vector.load %arg19[%c8_69, %c128_70] : memref<26x384xf32, #tpu.memory_space<vmem>>, vector<16x128xf32>
    %89 = vector.broadcast %87 : vector<1x128xf32> to vector<16x128xf32>
    %90 = arith.mulf %89, %88 : vector<16x128xf32>
    %91 = arith.addf %67, %90 : vector<16x128xf32>
    %c2_71 = arith.constant 2 : index
    %c3_72 = arith.constant 3 : index
    %c0_73 = arith.constant 0 : index
    %92 = vector.load %arg2[%c2_71, %c3_72, %c0_73] : memref<5x5x128xf32, #tpu.memory_space<vmem>>, vector<1x1x128xf32>
    %93 = vector.shape_cast %92 : vector<1x1x128xf32> to vector<1x128xf32>
    %c8_74 = arith.constant 8 : index
    %c132_75 = arith.constant 132 : index
    %94 = vector.load %arg19[%c8_74, %c132_75] : memref<26x384xf32, #tpu.memory_space<vmem>>, vector<16x128xf32>
    %95 = vector.broadcast %93 : vector<1x128xf32> to vector<16x128xf32>
    %96 = arith.mulf %95, %94 : vector<16x128xf32>
    %97 = arith.addf %73, %96 : vector<16x128xf32>
    %c2_76 = arith.constant 2 : index
    %c4_77 = arith.constant 4 : index
    %c0_78 = arith.constant 0 : index
    %98 = vector.load %arg2[%c2_76, %c4_77, %c0_78] : memref<5x5x128xf32, #tpu.memory_space<vmem>>, vector<1x1x128xf32>
    %99 = vector.shape_cast %98 : vector<1x1x128xf32> to vector<1x128xf32>
    %c8_79 = arith.constant 8 : index
    %c136_80 = arith.constant 136 : index
    %100 = vector.load %arg19[%c8_79, %c136_80] : memref<26x384xf32, #tpu.memory_space<vmem>>, vector<16x128xf32>
    %101 = vector.broadcast %99 : vector<1x128xf32> to vector<16x128xf32>
    %102 = arith.mulf %101, %100 : vector<16x128xf32>
    %103 = arith.addf %79, %102 : vector<16x128xf32>
    %c3_81 = arith.constant 3 : index
    %c0_82 = arith.constant 0 : index
    %c0_83 = arith.constant 0 : index
    %104 = vector.load %arg2[%c3_81, %c0_82, %c0_83] : memref<5x5x128xf32, #tpu.memory_space<vmem>>, vector<1x1x128xf32>
    %105 = vector.shape_cast %104 : vector<1x1x128xf32> to vector<1x128xf32>
    %c9 = arith.constant 9 : index
    %c120_84 = arith.constant 120 : index
    %106 = vector.load %arg19[%c9, %c120_84] : memref<26x384xf32, #tpu.memory_space<vmem>>, vector<16x128xf32>
    %107 = vector.broadcast %105 : vector<1x128xf32> to vector<16x128xf32>
    %108 = arith.mulf %107, %106 : vector<16x128xf32>
    %109 = arith.addf %85, %108 : vector<16x128xf32>
    %c3_85 = arith.constant 3 : index
    %c1_86 = arith.constant 1 : index
    %c0_87 = arith.constant 0 : index
    %110 = vector.load %arg2[%c3_85, %c1_86, %c0_87] : memref<5x5x128xf32, #tpu.memory_space<vmem>>, vector<1x1x128xf32>
    %111 = vector.shape_cast %110 : vector<1x1x128xf32> to vector<1x128xf32>
    %c9_88 = arith.constant 9 : index
    %c124_89 = arith.constant 124 : index
    %112 = vector.load %arg19[%c9_88, %c124_89] : memref<26x384xf32, #tpu.memory_space<vmem>>, vector<16x128xf32>
    %113 = vector.broadcast %111 : vector<1x128xf32> to vector<16x128xf32>
    %114 = arith.mulf %113, %112 : vector<16x128xf32>
    %115 = arith.addf %91, %114 : vector<16x128xf32>
    %c3_90 = arith.constant 3 : index
    %c2_91 = arith.constant 2 : index
    %c0_92 = arith.constant 0 : index
    %116 = vector.load %arg2[%c3_90, %c2_91, %c0_92] : memref<5x5x128xf32, #tpu.memory_space<vmem>>, vector<1x1x128xf32>
    %117 = vector.shape_cast %116 : vector<1x1x128xf32> to vector<1x128xf32>
    %c9_93 = arith.constant 9 : index
    %c128_94 = arith.constant 128 : index
    %118 = vector.load %arg19[%c9_93, %c128_94] : memref<26x384xf32, #tpu.memory_space<vmem>>, vector<16x128xf32>
    %119 = vector.broadcast %117 : vector<1x128xf32> to vector<16x128xf32>
    %120 = arith.mulf %119, %118 : vector<16x128xf32>
    %121 = arith.addf %97, %120 : vector<16x128xf32>
    %c3_95 = arith.constant 3 : index
    %c3_96 = arith.constant 3 : index
    %c0_97 = arith.constant 0 : index
    %122 = vector.load %arg2[%c3_95, %c3_96, %c0_97] : memref<5x5x128xf32, #tpu.memory_space<vmem>>, vector<1x1x128xf32>
    %123 = vector.shape_cast %122 : vector<1x1x128xf32> to vector<1x128xf32>
    %c9_98 = arith.constant 9 : index
    %c132_99 = arith.constant 132 : index
    %124 = vector.load %arg19[%c9_98, %c132_99] : memref<26x384xf32, #tpu.memory_space<vmem>>, vector<16x128xf32>
    %125 = vector.broadcast %123 : vector<1x128xf32> to vector<16x128xf32>
    %126 = arith.mulf %125, %124 : vector<16x128xf32>
    %127 = arith.addf %103, %126 : vector<16x128xf32>
    %c3_100 = arith.constant 3 : index
    %c4_101 = arith.constant 4 : index
    %c0_102 = arith.constant 0 : index
    %128 = vector.load %arg2[%c3_100, %c4_101, %c0_102] : memref<5x5x128xf32, #tpu.memory_space<vmem>>, vector<1x1x128xf32>
    %129 = vector.shape_cast %128 : vector<1x1x128xf32> to vector<1x128xf32>
    %c9_103 = arith.constant 9 : index
    %c136_104 = arith.constant 136 : index
    %130 = vector.load %arg19[%c9_103, %c136_104] : memref<26x384xf32, #tpu.memory_space<vmem>>, vector<16x128xf32>
    %131 = vector.broadcast %129 : vector<1x128xf32> to vector<16x128xf32>
    %132 = arith.mulf %131, %130 : vector<16x128xf32>
    %133 = arith.addf %109, %132 : vector<16x128xf32>
    %c4_105 = arith.constant 4 : index
    %c0_106 = arith.constant 0 : index
    %c0_107 = arith.constant 0 : index
    %134 = vector.load %arg2[%c4_105, %c0_106, %c0_107] : memref<5x5x128xf32, #tpu.memory_space<vmem>>, vector<1x1x128xf32>
    %135 = vector.shape_cast %134 : vector<1x1x128xf32> to vector<1x128xf32>
    %c10 = arith.constant 10 : index
    %c120_108 = arith.constant 120 : index
    %136 = vector.load %arg19[%c10, %c120_108] : memref<26x384xf32, #tpu.memory_space<vmem>>, vector<16x128xf32>
    %137 = vector.broadcast %135 : vector<1x128xf32> to vector<16x128xf32>
    %138 = arith.mulf %137, %136 : vector<16x128xf32>
    %139 = arith.addf %115, %138 : vector<16x128xf32>
    %c4_109 = arith.constant 4 : index
    %c1_110 = arith.constant 1 : index
    %c0_111 = arith.constant 0 : index
    %140 = vector.load %arg2[%c4_109, %c1_110, %c0_111] : memref<5x5x128xf32, #tpu.memory_space<vmem>>, vector<1x1x128xf32>
    %141 = vector.shape_cast %140 : vector<1x1x128xf32> to vector<1x128xf32>
    %c10_112 = arith.constant 10 : index
    %c124_113 = arith.constant 124 : index
    %142 = vector.load %arg19[%c10_112, %c124_113] : memref<26x384xf32, #tpu.memory_space<vmem>>, vector<16x128xf32>
    %143 = vector.broadcast %141 : vector<1x128xf32> to vector<16x128xf32>
    %144 = arith.mulf %143, %142 : vector<16x128xf32>
    %145 = arith.addf %121, %144 : vector<16x128xf32>
    %c4_114 = arith.constant 4 : index
    %c2_115 = arith.constant 2 : index
    %c0_116 = arith.constant 0 : index
    %146 = vector.load %arg2[%c4_114, %c2_115, %c0_116] : memref<5x5x128xf32, #tpu.memory_space<vmem>>, vector<1x1x128xf32>
    %147 = vector.shape_cast %146 : vector<1x1x128xf32> to vector<1x128xf32>
    %c10_117 = arith.constant 10 : index
    %c128_118 = arith.constant 128 : index
    %148 = vector.load %arg19[%c10_117, %c128_118] : memref<26x384xf32, #tpu.memory_space<vmem>>, vector<16x128xf32>
    %149 = vector.broadcast %147 : vector<1x128xf32> to vector<16x128xf32>
    %150 = arith.mulf %149, %148 : vector<16x128xf32>
    %151 = arith.addf %127, %150 : vector<16x128xf32>
    %c4_119 = arith.constant 4 : index
    %c3_120 = arith.constant 3 : index
    %c0_121 = arith.constant 0 : index
    %152 = vector.load %arg2[%c4_119, %c3_120, %c0_121] : memref<5x5x128xf32, #tpu.memory_space<vmem>>, vector<1x1x128xf32>
    %153 = vector.shape_cast %152 : vector<1x1x128xf32> to vector<1x128xf32>
    %c10_122 = arith.constant 10 : index
    %c132_123 = arith.constant 132 : index
    %154 = vector.load %arg19[%c10_122, %c132_123] : memref<26x384xf32, #tpu.memory_space<vmem>>, vector<16x128xf32>
    %155 = vector.broadcast %153 : vector<1x128xf32> to vector<16x128xf32>
    %156 = arith.mulf %155, %154 : vector<16x128xf32>
    %157 = arith.addf %133, %156 : vector<16x128xf32>
    %c4_124 = arith.constant 4 : index
    %c4_125 = arith.constant 4 : index
    %c0_126 = arith.constant 0 : index
    %158 = vector.load %arg2[%c4_124, %c4_125, %c0_126] : memref<5x5x128xf32, #tpu.memory_space<vmem>>, vector<1x1x128xf32>
    %159 = vector.shape_cast %158 : vector<1x1x128xf32> to vector<1x128xf32>
    %c10_127 = arith.constant 10 : index
    %c136_128 = arith.constant 136 : index
    %160 = vector.load %arg19[%c10_127, %c136_128] : memref<26x384xf32, #tpu.memory_space<vmem>>, vector<16x128xf32>
    %161 = vector.broadcast %159 : vector<1x128xf32> to vector<16x128xf32>
    %162 = arith.mulf %161, %160 : vector<16x128xf32>
    %163 = arith.addf %139, %162 : vector<16x128xf32>
    %164 = arith.addf %163, %145 : vector<16x128xf32>
    %165 = arith.addf %151, %157 : vector<16x128xf32>
    %166 = arith.addf %164, %165 : vector<16x128xf32>
    %c0_129 = arith.constant 0 : index
    %c0_130 = arith.constant 0 : index
    %167 = vector.load %arg3[%c0_129, %c0_130] : memref<1x128xf32, #tpu.memory_space<vmem>>, vector<1x128xf32>
    %168 = vector.broadcast %167 : vector<1x128xf32> to vector<16x128xf32>
    %169 = arith.addf %166, %168 : vector<16x128xf32>
    %cst_131 = arith.constant 0.000000e+00 : f32
    %170 = vector.shape_cast %14 : vector<1x128xi1> to vector<1x128xi1>
    %171 = vector.broadcast %170 : vector<1x128xi1> to vector<16x128xi1>
    %172 = vector.broadcast %cst_131 : f32 to vector<16x128xf32>
    %173 = arith.select %171, %169, %172 : vector<16x128xi1>, vector<16x128xf32>
    %c8_132 = arith.constant 8 : index
    %c128_133 = arith.constant 128 : index
    %174 = vector.load %arg19[%c8_132, %c128_133] : memref<26x384xf32, #tpu.memory_space<vmem>>, vector<16x128xf32>
    tpu.vector_store %arg19[%c8_132, %c128_133], %173 {strides = array<i32>} : memref<26x384xf32, #tpu.memory_space<vmem>>, vector<16x128xf32>,
    %c8_134 = arith.constant 8 : index
    %c88 = arith.constant 88 : index
    %175 = vector.load %arg19[%c8_134, %c88] : memref<26x384xf32, #tpu.memory_space<vmem>>, vector<16x128xf32>
    %c0_135 = arith.constant 0 : index
    %c0_136 = arith.constant 0 : index
    %c0_137 = arith.constant 0 : index
    %176 = vector.load %arg12[%c0_135, %c0_136, %c0_137] : memref<1x21x128xf32, #tpu.memory_space<vmem>>, vector<1x1x128xf32>
    %177 = vector.shape_cast %176 : vector<1x1x128xf32> to vector<1x128xf32>
    %178 = vector.broadcast %177 : vector<1x128xf32> to vector<16x128xf32>
    %179 = arith.mulf %178, %175 : vector<16x128xf32>
    %c8_138 = arith.constant 8 : index
    %c92 = arith.constant 92 : index
    %180 = vector.load %arg19[%c8_138, %c92] : memref<26x384xf32, #tpu.memory_space<vmem>>, vector<16x128xf32>
    %c0_139 = arith.constant 0 : index
    %c1_140 = arith.constant 1 : index
    %c0_141 = arith.constant 0 : index
    %181 = vector.load %arg12[%c0_139, %c1_140, %c0_141] : memref<1x21x128xf32, #tpu.memory_space<vmem>>, vector<1x1x128xf32>
    %182 = vector.shape_cast %181 : vector<1x1x128xf32> to vector<1x128xf32>
    %183 = vector.broadcast %182 : vector<1x128xf32> to vector<16x128xf32>
    %184 = arith.mulf %183, %180 : vector<16x128xf32>
    %c8_142 = arith.constant 8 : index
    %c96 = arith.constant 96 : index
    %185 = vector.load %arg19[%c8_142, %c96] : memref<26x384xf32, #tpu.memory_space<vmem>>, vector<16x128xf32>
    %c0_143 = arith.constant 0 : index
    %c2_144 = arith.constant 2 : index
    %c0_145 = arith.constant 0 : index
    %186 = vector.load %arg12[%c0_143, %c2_144, %c0_145] : memref<1x21x128xf32, #tpu.memory_space<vmem>>, vector<1x1x128xf32>
    %187 = vector.shape_cast %186 : vector<1x1x128xf32> to vector<1x128xf32>
    %188 = vector.broadcast %187 : vector<1x128xf32> to vector<16x128xf32>
    %189 = arith.mulf %188, %185 : vector<16x128xf32>
    %190 = arith.addf %179, %189 : vector<16x128xf32>
    %c8_146 = arith.constant 8 : index
    %c100 = arith.constant 100 : index
    %191 = vector.load %arg19[%c8_146, %c100] : memref<26x384xf32, #tpu.memory_space<vmem>>, vector<16x128xf32>
    %c0_147 = arith.constant 0 : index
    %c3_148 = arith.constant 3 : index
    %c0_149 = arith.constant 0 : index
    %192 = vector.load %arg12[%c0_147, %c3_148, %c0_149] : memref<1x21x128xf32, #tpu.memory_space<vmem>>, vector<1x1x128xf32>
    %193 = vector.shape_cast %192 : vector<1x1x128xf32> to vector<1x128xf32>
    %194 = vector.broadcast %193 : vector<1x128xf32> to vector<16x128xf32>
    %195 = arith.mulf %194, %191 : vector<16x128xf32>
    %196 = arith.addf %184, %195 : vector<16x128xf32>
    %c8_150 = arith.constant 8 : index
    %c104 = arith.constant 104 : index
    %197 = vector.load %arg19[%c8_150, %c104] : memref<26x384xf32, #tpu.memory_space<vmem>>, vector<16x128xf32>
    %c0_151 = arith.constant 0 : index
    %c4_152 = arith.constant 4 : index
    %c0_153 = arith.constant 0 : index
    %198 = vector.load %arg12[%c0_151, %c4_152, %c0_153] : memref<1x21x128xf32, #tpu.memory_space<vmem>>, vector<1x1x128xf32>
    %199 = vector.shape_cast %198 : vector<1x1x128xf32> to vector<1x128xf32>
    %200 = vector.broadcast %199 : vector<1x128xf32> to vector<16x128xf32>
    %201 = arith.mulf %200, %197 : vector<16x128xf32>
    %202 = arith.addf %190, %201 : vector<16x128xf32>
    %c8_154 = arith.constant 8 : index
    %c108 = arith.constant 108 : index
    %203 = vector.load %arg19[%c8_154, %c108] : memref<26x384xf32, #tpu.memory_space<vmem>>, vector<16x128xf32>
    %c0_155 = arith.constant 0 : index
    %c0_156 = arith.constant 0 : index
    %c0_157 = arith.constant 0 : index
    %204 = vector.load %arg8[%c0_155, %c0_156, %c0_157] : memref<1x11x128xf32, #tpu.memory_space<vmem>>, vector<1x1x128xf32>
    %205 = vector.shape_cast %204 : vector<1x1x128xf32> to vector<1x128xf32>
    %206 = vector.broadcast %205 : vector<1x128xf32> to vector<16x128xf32>
    %207 = arith.mulf %206, %203 : vector<16x128xf32>
    %c0_158 = arith.constant 0 : index
    %c5 = arith.constant 5 : index
    %c0_159 = arith.constant 0 : index
    %208 = vector.load %arg12[%c0_158, %c5, %c0_159] : memref<1x21x128xf32, #tpu.memory_space<vmem>>, vector<1x1x128xf32>
    %209 = vector.shape_cast %208 : vector<1x1x128xf32> to vector<1x128xf32>
    %210 = vector.broadcast %209 : vector<1x128xf32> to vector<16x128xf32>
    %211 = arith.mulf %210, %203 : vector<16x128xf32>
    %212 = arith.addf %196, %211 : vector<16x128xf32>
    %c8_160 = arith.constant 8 : index
    %c112 = arith.constant 112 : index
    %213 = vector.load %arg19[%c8_160, %c112] : memref<26x384xf32, #tpu.memory_space<vmem>>, vector<16x128xf32>
    %c0_161 = arith.constant 0 : index
    %c1_162 = arith.constant 1 : index
    %c0_163 = arith.constant 0 : index
    %214 = vector.load %arg8[%c0_161, %c1_162, %c0_163] : memref<1x11x128xf32, #tpu.memory_space<vmem>>, vector<1x1x128xf32>
    %215 = vector.shape_cast %214 : vector<1x1x128xf32> to vector<1x128xf32>
    %216 = vector.broadcast %215 : vector<1x128xf32> to vector<16x128xf32>
    %217 = arith.mulf %216, %213 : vector<16x128xf32>
    %c0_164 = arith.constant 0 : index
    %c6_165 = arith.constant 6 : index
    %c0_166 = arith.constant 0 : index
    %218 = vector.load %arg12[%c0_164, %c6_165, %c0_166] : memref<1x21x128xf32, #tpu.memory_space<vmem>>, vector<1x1x128xf32>
    %219 = vector.shape_cast %218 : vector<1x1x128xf32> to vector<1x128xf32>
    %220 = vector.broadcast %219 : vector<1x128xf32> to vector<16x128xf32>
    %221 = arith.mulf %220, %213 : vector<16x128xf32>
    %222 = arith.addf %202, %221 : vector<16x128xf32>
    %c8_167 = arith.constant 8 : index
    %c116 = arith.constant 116 : index
    %223 = vector.load %arg19[%c8_167, %c116] : memref<26x384xf32, #tpu.memory_space<vmem>>, vector<16x128xf32>
    %c0_168 = arith.constant 0 : index
    %c0_169 = arith.constant 0 : index
    %c0_170 = arith.constant 0 : index
    %224 = vector.load %arg4[%c0_168, %c0_169, %c0_170] : memref<1x7x128xf32, #tpu.memory_space<vmem>>, vector<1x1x128xf32>
    %225 = vector.shape_cast %224 : vector<1x1x128xf32> to vector<1x128xf32>
    %226 = vector.broadcast %225 : vector<1x128xf32> to vector<16x128xf32>
    %227 = arith.mulf %226, %223 : vector<16x128xf32>
    %c0_171 = arith.constant 0 : index
    %c2_172 = arith.constant 2 : index
    %c0_173 = arith.constant 0 : index
    %228 = vector.load %arg8[%c0_171, %c2_172, %c0_173] : memref<1x11x128xf32, #tpu.memory_space<vmem>>, vector<1x1x128xf32>
    %229 = vector.shape_cast %228 : vector<1x1x128xf32> to vector<1x128xf32>
    %230 = vector.broadcast %229 : vector<1x128xf32> to vector<16x128xf32>
    %231 = arith.mulf %230, %223 : vector<16x128xf32>
    %232 = arith.addf %207, %231 : vector<16x128xf32>
    %c0_174 = arith.constant 0 : index
    %c7_175 = arith.constant 7 : index
    %c0_176 = arith.constant 0 : index
    %233 = vector.load %arg12[%c0_174, %c7_175, %c0_176] : memref<1x21x128xf32, #tpu.memory_space<vmem>>, vector<1x1x128xf32>
    %234 = vector.shape_cast %233 : vector<1x1x128xf32> to vector<1x128xf32>
    %235 = vector.broadcast %234 : vector<1x128xf32> to vector<16x128xf32>
    %236 = arith.mulf %235, %223 : vector<16x128xf32>
    %237 = arith.addf %212, %236 : vector<16x128xf32>
    %c8_177 = arith.constant 8 : index
    %c120_178 = arith.constant 120 : index
    %238 = vector.load %arg19[%c8_177, %c120_178] : memref<26x384xf32, #tpu.memory_space<vmem>>, vector<16x128xf32>
    %c0_179 = arith.constant 0 : index
    %c1_180 = arith.constant 1 : index
    %c0_181 = arith.constant 0 : index
    %239 = vector.load %arg4[%c0_179, %c1_180, %c0_181] : memref<1x7x128xf32, #tpu.memory_space<vmem>>, vector<1x1x128xf32>
    %240 = vector.shape_cast %239 : vector<1x1x128xf32> to vector<1x128xf32>
    %241 = vector.broadcast %240 : vector<1x128xf32> to vector<16x128xf32>
    %242 = arith.mulf %241, %238 : vector<16x128xf32>
    %c0_182 = arith.constant 0 : index
    %c3_183 = arith.constant 3 : index
    %c0_184 = arith.constant 0 : index
    %243 = vector.load %arg8[%c0_182, %c3_183, %c0_184] : memref<1x11x128xf32, #tpu.memory_space<vmem>>, vector<1x1x128xf32>
    %244 = vector.shape_cast %243 : vector<1x1x128xf32> to vector<1x128xf32>
    %245 = vector.broadcast %244 : vector<1x128xf32> to vector<16x128xf32>
    %246 = arith.mulf %245, %238 : vector<16x128xf32>
    %247 = arith.addf %217, %246 : vector<16x128xf32>
    %c0_185 = arith.constant 0 : index
    %c8_186 = arith.constant 8 : index
    %c0_187 = arith.constant 0 : index
    %248 = vector.load %arg12[%c0_185, %c8_186, %c0_187] : memref<1x21x128xf32, #tpu.memory_space<vmem>>, vector<1x1x128xf32>
    %249 = vector.shape_cast %248 : vector<1x1x128xf32> to vector<1x128xf32>
    %250 = vector.broadcast %249 : vector<1x128xf32> to vector<16x128xf32>
    %251 = arith.mulf %250, %238 : vector<16x128xf32>
    %252 = arith.addf %222, %251 : vector<16x128xf32>
    %c8_188 = arith.constant 8 : index
    %c124_189 = arith.constant 124 : index
    %253 = vector.load %arg19[%c8_188, %c124_189] : memref<26x384xf32, #tpu.memory_space<vmem>>, vector<16x128xf32>
    %c0_190 = arith.constant 0 : index
    %c2_191 = arith.constant 2 : index
    %c0_192 = arith.constant 0 : index
    %254 = vector.load %arg4[%c0_190, %c2_191, %c0_192] : memref<1x7x128xf32, #tpu.memory_space<vmem>>, vector<1x1x128xf32>
    %255 = vector.shape_cast %254 : vector<1x1x128xf32> to vector<1x128xf32>
    %256 = vector.broadcast %255 : vector<1x128xf32> to vector<16x128xf32>
    %257 = arith.mulf %256, %253 : vector<16x128xf32>
    %258 = arith.addf %227, %257 : vector<16x128xf32>
    %c0_193 = arith.constant 0 : index
    %c4_194 = arith.constant 4 : index
    %c0_195 = arith.constant 0 : index
    %259 = vector.load %arg8[%c0_193, %c4_194, %c0_195] : memref<1x11x128xf32, #tpu.memory_space<vmem>>, vector<1x1x128xf32>
    %260 = vector.shape_cast %259 : vector<1x1x128xf32> to vector<1x128xf32>
    %261 = vector.broadcast %260 : vector<1x128xf32> to vector<16x128xf32>
    %262 = arith.mulf %261, %253 : vector<16x128xf32>
    %263 = arith.addf %232, %262 : vector<16x128xf32>
    %c0_196 = arith.constant 0 : index
    %c9_197 = arith.constant 9 : index
    %c0_198 = arith.constant 0 : index
    %264 = vector.load %arg12[%c0_196, %c9_197, %c0_198] : memref<1x21x128xf32, #tpu.memory_space<vmem>>, vector<1x1x128xf32>
    %265 = vector.shape_cast %264 : vector<1x1x128xf32> to vector<1x128xf32>
    %266 = vector.broadcast %265 : vector<1x128xf32> to vector<16x128xf32>
    %267 = arith.mulf %266, %253 : vector<16x128xf32>
    %268 = arith.addf %237, %267 : vector<16x128xf32>
    %c8_199 = arith.constant 8 : index
    %c128_200 = arith.constant 128 : index
    %269 = vector.load %arg19[%c8_199, %c128_200] : memref<26x384xf32, #tpu.memory_space<vmem>>, vector<16x128xf32>
    %c0_201 = arith.constant 0 : index
    %c3_202 = arith.constant 3 : index
    %c0_203 = arith.constant 0 : index
    %270 = vector.load %arg4[%c0_201, %c3_202, %c0_203] : memref<1x7x128xf32, #tpu.memory_space<vmem>>, vector<1x1x128xf32>
    %271 = vector.shape_cast %270 : vector<1x1x128xf32> to vector<1x128xf32>
    %272 = vector.broadcast %271 : vector<1x128xf32> to vector<16x128xf32>
    %273 = arith.mulf %272, %269 : vector<16x128xf32>
    %274 = arith.addf %242, %273 : vector<16x128xf32>
    %c0_204 = arith.constant 0 : index
    %c5_205 = arith.constant 5 : index
    %c0_206 = arith.constant 0 : index
    %275 = vector.load %arg8[%c0_204, %c5_205, %c0_206] : memref<1x11x128xf32, #tpu.memory_space<vmem>>, vector<1x1x128xf32>
    %276 = vector.shape_cast %275 : vector<1x1x128xf32> to vector<1x128xf32>
    %277 = vector.broadcast %276 : vector<1x128xf32> to vector<16x128xf32>
    %278 = arith.mulf %277, %269 : vector<16x128xf32>
    %279 = arith.addf %247, %278 : vector<16x128xf32>
    %c0_207 = arith.constant 0 : index
    %c10_208 = arith.constant 10 : index
    %c0_209 = arith.constant 0 : index
    %280 = vector.load %arg12[%c0_207, %c10_208, %c0_209] : memref<1x21x128xf32, #tpu.memory_space<vmem>>, vector<1x1x128xf32>
    %281 = vector.shape_cast %280 : vector<1x1x128xf32> to vector<1x128xf32>
    %282 = vector.broadcast %281 : vector<1x128xf32> to vector<16x128xf32>
    %283 = arith.mulf %282, %269 : vector<16x128xf32>
    %284 = arith.addf %252, %283 : vector<16x128xf32>
    %c8_210 = arith.constant 8 : index
    %c132_211 = arith.constant 132 : index
    %285 = vector.load %arg19[%c8_210, %c132_211] : memref<26x384xf32, #tpu.memory_space<vmem>>, vector<16x128xf32>
    %c0_212 = arith.constant 0 : index
    %c4_213 = arith.constant 4 : index
    %c0_214 = arith.constant 0 : index
    %286 = vector.load %arg4[%c0_212, %c4_213, %c0_214] : memref<1x7x128xf32, #tpu.memory_space<vmem>>, vector<1x1x128xf32>
    %287 = vector.shape_cast %286 : vector<1x1x128xf32> to vector<1x128xf32>
    %288 = vector.broadcast %287 : vector<1x128xf32> to vector<16x128xf32>
    %289 = arith.mulf %288, %285 : vector<16x128xf32>
    %290 = arith.addf %258, %289 : vector<16x128xf32>
    %c0_215 = arith.constant 0 : index
    %c6_216 = arith.constant 6 : index
    %c0_217 = arith.constant 0 : index
    %291 = vector.load %arg8[%c0_215, %c6_216, %c0_217] : memref<1x11x128xf32, #tpu.memory_space<vmem>>, vector<1x1x128xf32>
    %292 = vector.shape_cast %291 : vector<1x1x128xf32> to vector<1x128xf32>
    %293 = vector.broadcast %292 : vector<1x128xf32> to vector<16x128xf32>
    %294 = arith.mulf %293, %285 : vector<16x128xf32>
    %295 = arith.addf %263, %294 : vector<16x128xf32>
    %c0_218 = arith.constant 0 : index
    %c11 = arith.constant 11 : index
    %c0_219 = arith.constant 0 : index
    %296 = vector.load %arg12[%c0_218, %c11, %c0_219] : memref<1x21x128xf32, #tpu.memory_space<vmem>>, vector<1x1x128xf32>
    %297 = vector.shape_cast %296 : vector<1x1x128xf32> to vector<1x128xf32>
    %298 = vector.broadcast %297 : vector<1x128xf32> to vector<16x128xf32>
    %299 = arith.mulf %298, %285 : vector<16x128xf32>
    %300 = arith.addf %268, %299 : vector<16x128xf32>
    %c8_220 = arith.constant 8 : index
    %c136_221 = arith.constant 136 : index
    %301 = vector.load %arg19[%c8_220, %c136_221] : memref<26x384xf32, #tpu.memory_space<vmem>>, vector<16x128xf32>
    %c0_222 = arith.constant 0 : index
    %c5_223 = arith.constant 5 : index
    %c0_224 = arith.constant 0 : index
    %302 = vector.load %arg4[%c0_222, %c5_223, %c0_224] : memref<1x7x128xf32, #tpu.memory_space<vmem>>, vector<1x1x128xf32>
    %303 = vector.shape_cast %302 : vector<1x1x128xf32> to vector<1x128xf32>
    %304 = vector.broadcast %303 : vector<1x128xf32> to vector<16x128xf32>
    %305 = arith.mulf %304, %301 : vector<16x128xf32>
    %306 = arith.addf %274, %305 : vector<16x128xf32>
    %c0_225 = arith.constant 0 : index
    %c7_226 = arith.constant 7 : index
    %c0_227 = arith.constant 0 : index
    %307 = vector.load %arg8[%c0_225, %c7_226, %c0_227] : memref<1x11x128xf32, #tpu.memory_space<vmem>>, vector<1x1x128xf32>
    %308 = vector.shape_cast %307 : vector<1x1x128xf32> to vector<1x128xf32>
    %309 = vector.broadcast %308 : vector<1x128xf32> to vector<16x128xf32>
    %310 = arith.mulf %309, %301 : vector<16x128xf32>
    %311 = arith.addf %279, %310 : vector<16x128xf32>
    %c0_228 = arith.constant 0 : index
    %c12 = arith.constant 12 : index
    %c0_229 = arith.constant 0 : index
    %312 = vector.load %arg12[%c0_228, %c12, %c0_229] : memref<1x21x128xf32, #tpu.memory_space<vmem>>, vector<1x1x128xf32>
    %313 = vector.shape_cast %312 : vector<1x1x128xf32> to vector<1x128xf32>
    %314 = vector.broadcast %313 : vector<1x128xf32> to vector<16x128xf32>
    %315 = arith.mulf %314, %301 : vector<16x128xf32>
    %316 = arith.addf %284, %315 : vector<16x128xf32>
    %c8_230 = arith.constant 8 : index
    %c140 = arith.constant 140 : index
    %317 = vector.load %arg19[%c8_230, %c140] : memref<26x384xf32, #tpu.memory_space<vmem>>, vector<16x128xf32>
    %c0_231 = arith.constant 0 : index
    %c6_232 = arith.constant 6 : index
    %c0_233 = arith.constant 0 : index
    %318 = vector.load %arg4[%c0_231, %c6_232, %c0_233] : memref<1x7x128xf32, #tpu.memory_space<vmem>>, vector<1x1x128xf32>
    %319 = vector.shape_cast %318 : vector<1x1x128xf32> to vector<1x128xf32>
    %320 = vector.broadcast %319 : vector<1x128xf32> to vector<16x128xf32>
    %321 = arith.mulf %320, %317 : vector<16x128xf32>
    %322 = arith.addf %290, %321 : vector<16x128xf32>
    %c0_234 = arith.constant 0 : index
    %c8_235 = arith.constant 8 : index
    %c0_236 = arith.constant 0 : index
    %323 = vector.load %arg8[%c0_234, %c8_235, %c0_236] : memref<1x11x128xf32, #tpu.memory_space<vmem>>, vector<1x1x128xf32>
    %324 = vector.shape_cast %323 : vector<1x1x128xf32> to vector<1x128xf32>
    %325 = vector.broadcast %324 : vector<1x128xf32> to vector<16x128xf32>
    %326 = arith.mulf %325, %317 : vector<16x128xf32>
    %327 = arith.addf %295, %326 : vector<16x128xf32>
    %c0_237 = arith.constant 0 : index
    %c13 = arith.constant 13 : index
    %c0_238 = arith.constant 0 : index
    %328 = vector.load %arg12[%c0_237, %c13, %c0_238] : memref<1x21x128xf32, #tpu.memory_space<vmem>>, vector<1x1x128xf32>
    %329 = vector.shape_cast %328 : vector<1x1x128xf32> to vector<1x128xf32>
    %330 = vector.broadcast %329 : vector<1x128xf32> to vector<16x128xf32>
    %331 = arith.mulf %330, %317 : vector<16x128xf32>
    %332 = arith.addf %300, %331 : vector<16x128xf32>
    %c8_239 = arith.constant 8 : index
    %c144 = arith.constant 144 : index
    %333 = vector.load %arg19[%c8_239, %c144] : memref<26x384xf32, #tpu.memory_space<vmem>>, vector<16x128xf32>
    %c0_240 = arith.constant 0 : index
    %c9_241 = arith.constant 9 : index
    %c0_242 = arith.constant 0 : index
    %334 = vector.load %arg8[%c0_240, %c9_241, %c0_242] : memref<1x11x128xf32, #tpu.memory_space<vmem>>, vector<1x1x128xf32>
    %335 = vector.shape_cast %334 : vector<1x1x128xf32> to vector<1x128xf32>
    %336 = vector.broadcast %335 : vector<1x128xf32> to vector<16x128xf32>
    %337 = arith.mulf %336, %333 : vector<16x128xf32>
    %338 = arith.addf %311, %337 : vector<16x128xf32>
    %c0_243 = arith.constant 0 : index
    %c14 = arith.constant 14 : index
    %c0_244 = arith.constant 0 : index
    %339 = vector.load %arg12[%c0_243, %c14, %c0_244] : memref<1x21x128xf32, #tpu.memory_space<vmem>>, vector<1x1x128xf32>
    %340 = vector.shape_cast %339 : vector<1x1x128xf32> to vector<1x128xf32>
    %341 = vector.broadcast %340 : vector<1x128xf32> to vector<16x128xf32>
    %342 = arith.mulf %341, %333 : vector<16x128xf32>
    %343 = arith.addf %316, %342 : vector<16x128xf32>
    %c8_245 = arith.constant 8 : index
    %c148 = arith.constant 148 : index
    %344 = vector.load %arg19[%c8_245, %c148] : memref<26x384xf32, #tpu.memory_space<vmem>>, vector<16x128xf32>
    %c0_246 = arith.constant 0 : index
    %c10_247 = arith.constant 10 : index
    %c0_248 = arith.constant 0 : index
    %345 = vector.load %arg8[%c0_246, %c10_247, %c0_248] : memref<1x11x128xf32, #tpu.memory_space<vmem>>, vector<1x1x128xf32>
    %346 = vector.shape_cast %345 : vector<1x1x128xf32> to vector<1x128xf32>
    %347 = vector.broadcast %346 : vector<1x128xf32> to vector<16x128xf32>
    %348 = arith.mulf %347, %344 : vector<16x128xf32>
    %349 = arith.addf %327, %348 : vector<16x128xf32>
    %c0_249 = arith.constant 0 : index
    %c15 = arith.constant 15 : index
    %c0_250 = arith.constant 0 : index
    %350 = vector.load %arg12[%c0_249, %c15, %c0_250] : memref<1x21x128xf32, #tpu.memory_space<vmem>>, vector<1x1x128xf32>
    %351 = vector.shape_cast %350 : vector<1x1x128xf32> to vector<1x128xf32>
    %352 = vector.broadcast %351 : vector<1x128xf32> to vector<16x128xf32>
    %353 = arith.mulf %352, %344 : vector<16x128xf32>
    %354 = arith.addf %332, %353 : vector<16x128xf32>
    %c8_251 = arith.constant 8 : index
    %c152 = arith.constant 152 : index
    %355 = vector.load %arg19[%c8_251, %c152] : memref<26x384xf32, #tpu.memory_space<vmem>>, vector<16x128xf32>
    %c0_252 = arith.constant 0 : index
    %c16 = arith.constant 16 : index
    %c0_253 = arith.constant 0 : index
    %356 = vector.load %arg12[%c0_252, %c16, %c0_253] : memref<1x21x128xf32, #tpu.memory_space<vmem>>, vector<1x1x128xf32>
    %357 = vector.shape_cast %356 : vector<1x1x128xf32> to vector<1x128xf32>
    %358 = vector.broadcast %357 : vector<1x128xf32> to vector<16x128xf32>
    %359 = arith.mulf %358, %355 : vector<16x128xf32>
    %360 = arith.addf %343, %359 : vector<16x128xf32>
    %c8_254 = arith.constant 8 : index
    %c156 = arith.constant 156 : index
    %361 = vector.load %arg19[%c8_254, %c156] : memref<26x384xf32, #tpu.memory_space<vmem>>, vector<16x128xf32>
    %c0_255 = arith.constant 0 : index
    %c17 = arith.constant 17 : index
    %c0_256 = arith.constant 0 : index
    %362 = vector.load %arg12[%c0_255, %c17, %c0_256] : memref<1x21x128xf32, #tpu.memory_space<vmem>>, vector<1x1x128xf32>
    %363 = vector.shape_cast %362 : vector<1x1x128xf32> to vector<1x128xf32>
    %364 = vector.broadcast %363 : vector<1x128xf32> to vector<16x128xf32>
    %365 = arith.mulf %364, %361 : vector<16x128xf32>
    %366 = arith.addf %354, %365 : vector<16x128xf32>
    %c8_257 = arith.constant 8 : index
    %c160 = arith.constant 160 : index
    %367 = vector.load %arg19[%c8_257, %c160] : memref<26x384xf32, #tpu.memory_space<vmem>>, vector<16x128xf32>
    %c0_258 = arith.constant 0 : index
    %c18 = arith.constant 18 : index
    %c0_259 = arith.constant 0 : index
    %368 = vector.load %arg12[%c0_258, %c18, %c0_259] : memref<1x21x128xf32, #tpu.memory_space<vmem>>, vector<1x1x128xf32>
    %369 = vector.shape_cast %368 : vector<1x1x128xf32> to vector<1x128xf32>
    %370 = vector.broadcast %369 : vector<1x128xf32> to vector<16x128xf32>
    %371 = arith.mulf %370, %367 : vector<16x128xf32>
    %372 = arith.addf %360, %371 : vector<16x128xf32>
    %c8_260 = arith.constant 8 : index
    %c164 = arith.constant 164 : index
    %373 = vector.load %arg19[%c8_260, %c164] : memref<26x384xf32, #tpu.memory_space<vmem>>, vector<16x128xf32>
    %c0_261 = arith.constant 0 : index
    %c19 = arith.constant 19 : index
    %c0_262 = arith.constant 0 : index
    %374 = vector.load %arg12[%c0_261, %c19, %c0_262] : memref<1x21x128xf32, #tpu.memory_space<vmem>>, vector<1x1x128xf32>
    %375 = vector.shape_cast %374 : vector<1x1x128xf32> to vector<1x128xf32>
    %376 = vector.broadcast %375 : vector<1x128xf32> to vector<16x128xf32>
    %377 = arith.mulf %376, %373 : vector<16x128xf32>
    %378 = arith.addf %366, %377 : vector<16x128xf32>
    %c8_263 = arith.constant 8 : index
    %c168 = arith.constant 168 : index
    %379 = vector.load %arg19[%c8_263, %c168] : memref<26x384xf32, #tpu.memory_space<vmem>>, vector<16x128xf32>
    %c0_264 = arith.constant 0 : index
    %c20 = arith.constant 20 : index
    %c0_265 = arith.constant 0 : index
    %380 = vector.load %arg12[%c0_264, %c20, %c0_265] : memref<1x21x128xf32, #tpu.memory_space<vmem>>, vector<1x1x128xf32>
    %381 = vector.shape_cast %380 : vector<1x1x128xf32> to vector<1x128xf32>
    %382 = vector.broadcast %381 : vector<1x128xf32> to vector<16x128xf32>
    %383 = arith.mulf %382, %379 : vector<16x128xf32>
    %384 = arith.addf %372, %383 : vector<16x128xf32>
    %385 = arith.addf %306, %322 : vector<16x128xf32>
    %c0_266 = arith.constant 0 : index
    %c0_267 = arith.constant 0 : index
    %386 = vector.load %arg5[%c0_266, %c0_267] : memref<1x128xf32, #tpu.memory_space<vmem>>, vector<1x128xf32>
    %387 = vector.broadcast %386 : vector<1x128xf32> to vector<16x128xf32>
    %388 = arith.addf %385, %387 : vector<16x128xf32>
    %389 = arith.addf %338, %349 : vector<16x128xf32>
    %c0_268 = arith.constant 0 : index
    %c0_269 = arith.constant 0 : index
    %390 = vector.load %arg9[%c0_268, %c0_269] : memref<1x128xf32, #tpu.memory_space<vmem>>, vector<1x128xf32>
    %391 = vector.broadcast %390 : vector<1x128xf32> to vector<16x128xf32>
    %392 = arith.addf %389, %391 : vector<16x128xf32>
    %393 = arith.addf %384, %378 : vector<16x128xf32>
    %c0_270 = arith.constant 0 : index
    %c0_271 = arith.constant 0 : index
    %394 = vector.load %arg13[%c0_270, %c0_271] : memref<1x128xf32, #tpu.memory_space<vmem>>, vector<1x128xf32>
    %395 = vector.broadcast %394 : vector<1x128xf32> to vector<16x128xf32>
    %396 = arith.addf %393, %395 : vector<16x128xf32>
    %c16_272 = arith.constant 16 : index
    %c0_273 = arith.constant 0 : index
    %397 = vector.load %arg20[%c16_272, %c0_273] : memref<42x128xf32, #tpu.memory_space<vmem>>, vector<16x128xf32>
    tpu.vector_store %arg20[%c16_272, %c0_273], %388 {strides = array<i32>} : memref<42x128xf32, #tpu.memory_space<vmem>>, vector<16x128xf32>,
    %c0_274 = arith.constant 0 : index
    %c0_275 = arith.constant 0 : index
    %c0_276 = arith.constant 0 : index
    %398 = vector.load %arg6[%c0_274, %c0_275, %c0_276] : memref<7x1x128xf32, #tpu.memory_space<vmem>>, vector<1x1x128xf32>
    %399 = vector.shape_cast %398 : vector<1x1x128xf32> to vector<1x128xf32>
    %c13_277 = arith.constant 13 : index
    %c0_278 = arith.constant 0 : index
    %400 = vector.load %arg20[%c13_277, %c0_278] : memref<42x128xf32, #tpu.memory_space<vmem>>, vector<16x128xf32>
    %401 = vector.broadcast %399 : vector<1x128xf32> to vector<16x128xf32>
    %402 = arith.mulf %401, %400 : vector<16x128xf32>
    %c1_279 = arith.constant 1 : index
    %c0_280 = arith.constant 0 : index
    %c0_281 = arith.constant 0 : index
    %403 = vector.load %arg6[%c1_279, %c0_280, %c0_281] : memref<7x1x128xf32, #tpu.memory_space<vmem>>, vector<1x1x128xf32>
    %404 = vector.shape_cast %403 : vector<1x1x128xf32> to vector<1x128xf32>
    %c14_282 = arith.constant 14 : index
    %c0_283 = arith.constant 0 : index
    %405 = vector.load %arg20[%c14_282, %c0_283] : memref<42x128xf32, #tpu.memory_space<vmem>>, vector<16x128xf32>
    %406 = vector.broadcast %404 : vector<1x128xf32> to vector<16x128xf32>
    %407 = arith.mulf %406, %405 : vector<16x128xf32>
    %c2_284 = arith.constant 2 : index
    %c0_285 = arith.constant 0 : index
    %c0_286 = arith.constant 0 : index
    %408 = vector.load %arg6[%c2_284, %c0_285, %c0_286] : memref<7x1x128xf32, #tpu.memory_space<vmem>>, vector<1x1x128xf32>
    %409 = vector.shape_cast %408 : vector<1x1x128xf32> to vector<1x128xf32>
    %c15_287 = arith.constant 15 : index
    %c0_288 = arith.constant 0 : index
    %410 = vector.load %arg20[%c15_287, %c0_288] : memref<42x128xf32, #tpu.memory_space<vmem>>, vector<16x128xf32>
    %411 = vector.broadcast %409 : vector<1x128xf32> to vector<16x128xf32>
    %412 = arith.mulf %411, %410 : vector<16x128xf32>
    %c3_289 = arith.constant 3 : index
    %c0_290 = arith.constant 0 : index
    %c0_291 = arith.constant 0 : index
    %413 = vector.load %arg6[%c3_289, %c0_290, %c0_291] : memref<7x1x128xf32, #tpu.memory_space<vmem>>, vector<1x1x128xf32>
    %414 = vector.shape_cast %413 : vector<1x1x128xf32> to vector<1x128xf32>
    %c16_292 = arith.constant 16 : index
    %c0_293 = arith.constant 0 : index
    %415 = vector.load %arg20[%c16_292, %c0_293] : memref<42x128xf32, #tpu.memory_space<vmem>>, vector<16x128xf32>
    %416 = vector.broadcast %414 : vector<1x128xf32> to vector<16x128xf32>
    %417 = arith.mulf %416, %415 : vector<16x128xf32>
    %c4_294 = arith.constant 4 : index
    %c0_295 = arith.constant 0 : index
    %c0_296 = arith.constant 0 : index
    %418 = vector.load %arg6[%c4_294, %c0_295, %c0_296] : memref<7x1x128xf32, #tpu.memory_space<vmem>>, vector<1x1x128xf32>
    %419 = vector.shape_cast %418 : vector<1x1x128xf32> to vector<1x128xf32>
    %c17_297 = arith.constant 17 : index
    %c0_298 = arith.constant 0 : index
    %420 = vector.load %arg20[%c17_297, %c0_298] : memref<42x128xf32, #tpu.memory_space<vmem>>, vector<16x128xf32>
    %421 = vector.broadcast %419 : vector<1x128xf32> to vector<16x128xf32>
    %422 = arith.mulf %421, %420 : vector<16x128xf32>
    %423 = arith.addf %402, %422 : vector<16x128xf32>
    %c5_299 = arith.constant 5 : index
    %c0_300 = arith.constant 0 : index
    %c0_301 = arith.constant 0 : index
    %424 = vector.load %arg6[%c5_299, %c0_300, %c0_301] : memref<7x1x128xf32, #tpu.memory_space<vmem>>, vector<1x1x128xf32>
    %425 = vector.shape_cast %424 : vector<1x1x128xf32> to vector<1x128xf32>
    %c18_302 = arith.constant 18 : index
    %c0_303 = arith.constant 0 : index
    %426 = vector.load %arg20[%c18_302, %c0_303] : memref<42x128xf32, #tpu.memory_space<vmem>>, vector<16x128xf32>
    %427 = vector.broadcast %425 : vector<1x128xf32> to vector<16x128xf32>
    %428 = arith.mulf %427, %426 : vector<16x128xf32>
    %429 = arith.addf %407, %428 : vector<16x128xf32>
    %c6_304 = arith.constant 6 : index
    %c0_305 = arith.constant 0 : index
    %c0_306 = arith.constant 0 : index
    %430 = vector.load %arg6[%c6_304, %c0_305, %c0_306] : memref<7x1x128xf32, #tpu.memory_space<vmem>>, vector<1x1x128xf32>
    %431 = vector.shape_cast %430 : vector<1x1x128xf32> to vector<1x128xf32>
    %c19_307 = arith.constant 19 : index
    %c0_308 = arith.constant 0 : index
    %432 = vector.load %arg20[%c19_307, %c0_308] : memref<42x128xf32, #tpu.memory_space<vmem>>, vector<16x128xf32>
    %433 = vector.broadcast %431 : vector<1x128xf32> to vector<16x128xf32>
    %434 = arith.mulf %433, %432 : vector<16x128xf32>
    %435 = arith.addf %412, %434 : vector<16x128xf32>
    %436 = arith.addf %423, %429 : vector<16x128xf32>
    %437 = arith.addf %435, %417 : vector<16x128xf32>
    %438 = arith.addf %436, %437 : vector<16x128xf32>
    %c0_309 = arith.constant 0 : index
    %c0_310 = arith.constant 0 : index
    %439 = vector.load %arg7[%c0_309, %c0_310] : memref<1x128xf32, #tpu.memory_space<vmem>>, vector<1x128xf32>
    %440 = vector.broadcast %439 : vector<1x128xf32> to vector<16x128xf32>
    %441 = arith.addf %438, %440 : vector<16x128xf32>
    %442 = arith.addf %173, %441 : vector<16x128xf32>
    %c16_311 = arith.constant 16 : index
    %c0_312 = arith.constant 0 : index
    %443 = vector.load %arg20[%c16_311, %c0_312] : memref<42x128xf32, #tpu.memory_space<vmem>>, vector<16x128xf32>
    tpu.vector_store %arg20[%c16_311, %c0_312], %392 {strides = array<i32>} : memref<42x128xf32, #tpu.memory_space<vmem>>, vector<16x128xf32>,
    %c0_313 = arith.constant 0 : index
    %c0_314 = arith.constant 0 : index
    %c0_315 = arith.constant 0 : index
    %444 = vector.load %arg10[%c0_313, %c0_314, %c0_315] : memref<11x1x128xf32, #tpu.memory_space<vmem>>, vector<1x1x128xf32>
    %445 = vector.shape_cast %444 : vector<1x1x128xf32> to vector<1x128xf32>
    %c11_316 = arith.constant 11 : index
    %c0_317 = arith.constant 0 : index
    %446 = vector.load %arg20[%c11_316, %c0_317] : memref<42x128xf32, #tpu.memory_space<vmem>>, vector<16x128xf32>
    %447 = vector.broadcast %445 : vector<1x128xf32> to vector<16x128xf32>
    %448 = arith.mulf %447, %446 : vector<16x128xf32>
    %c1_318 = arith.constant 1 : index
    %c0_319 = arith.constant 0 : index
    %c0_320 = arith.constant 0 : index
    %449 = vector.load %arg10[%c1_318, %c0_319, %c0_320] : memref<11x1x128xf32, #tpu.memory_space<vmem>>, vector<1x1x128xf32>
    %450 = vector.shape_cast %449 : vector<1x1x128xf32> to vector<1x128xf32>
    %c12_321 = arith.constant 12 : index
    %c0_322 = arith.constant 0 : index
    %451 = vector.load %arg20[%c12_321, %c0_322] : memref<42x128xf32, #tpu.memory_space<vmem>>, vector<16x128xf32>
    %452 = vector.broadcast %450 : vector<1x128xf32> to vector<16x128xf32>
    %453 = arith.mulf %452, %451 : vector<16x128xf32>
    %c2_323 = arith.constant 2 : index
    %c0_324 = arith.constant 0 : index
    %c0_325 = arith.constant 0 : index
    %454 = vector.load %arg10[%c2_323, %c0_324, %c0_325] : memref<11x1x128xf32, #tpu.memory_space<vmem>>, vector<1x1x128xf32>
    %455 = vector.shape_cast %454 : vector<1x1x128xf32> to vector<1x128xf32>
    %c13_326 = arith.constant 13 : index
    %c0_327 = arith.constant 0 : index
    %456 = vector.load %arg20[%c13_326, %c0_327] : memref<42x128xf32, #tpu.memory_space<vmem>>, vector<16x128xf32>
    %457 = vector.broadcast %455 : vector<1x128xf32> to vector<16x128xf32>
    %458 = arith.mulf %457, %456 : vector<16x128xf32>
    %c3_328 = arith.constant 3 : index
    %c0_329 = arith.constant 0 : index
    %c0_330 = arith.constant 0 : index
    %459 = vector.load %arg10[%c3_328, %c0_329, %c0_330] : memref<11x1x128xf32, #tpu.memory_space<vmem>>, vector<1x1x128xf32>
    %460 = vector.shape_cast %459 : vector<1x1x128xf32> to vector<1x128xf32>
    %c14_331 = arith.constant 14 : index
    %c0_332 = arith.constant 0 : index
    %461 = vector.load %arg20[%c14_331, %c0_332] : memref<42x128xf32, #tpu.memory_space<vmem>>, vector<16x128xf32>
    %462 = vector.broadcast %460 : vector<1x128xf32> to vector<16x128xf32>
    %463 = arith.mulf %462, %461 : vector<16x128xf32>
    %c4_333 = arith.constant 4 : index
    %c0_334 = arith.constant 0 : index
    %c0_335 = arith.constant 0 : index
    %464 = vector.load %arg10[%c4_333, %c0_334, %c0_335] : memref<11x1x128xf32, #tpu.memory_space<vmem>>, vector<1x1x128xf32>
    %465 = vector.shape_cast %464 : vector<1x1x128xf32> to vector<1x128xf32>
    %c15_336 = arith.constant 15 : index
    %c0_337 = arith.constant 0 : index
    %466 = vector.load %arg20[%c15_336, %c0_337] : memref<42x128xf32, #tpu.memory_space<vmem>>, vector<16x128xf32>
    %467 = vector.broadcast %465 : vector<1x128xf32> to vector<16x128xf32>
    %468 = arith.mulf %467, %466 : vector<16x128xf32>
    %469 = arith.addf %448, %468 : vector<16x128xf32>
    %c5_338 = arith.constant 5 : index
    %c0_339 = arith.constant 0 : index
    %c0_340 = arith.constant 0 : index
    %470 = vector.load %arg10[%c5_338, %c0_339, %c0_340] : memref<11x1x128xf32, #tpu.memory_space<vmem>>, vector<1x1x128xf32>
    %471 = vector.shape_cast %470 : vector<1x1x128xf32> to vector<1x128xf32>
    %c16_341 = arith.constant 16 : index
    %c0_342 = arith.constant 0 : index
    %472 = vector.load %arg20[%c16_341, %c0_342] : memref<42x128xf32, #tpu.memory_space<vmem>>, vector<16x128xf32>
    %473 = vector.broadcast %471 : vector<1x128xf32> to vector<16x128xf32>
    %474 = arith.mulf %473, %472 : vector<16x128xf32>
    %475 = arith.addf %453, %474 : vector<16x128xf32>
    %c6_343 = arith.constant 6 : index
    %c0_344 = arith.constant 0 : index
    %c0_345 = arith.constant 0 : index
    %476 = vector.load %arg10[%c6_343, %c0_344, %c0_345] : memref<11x1x128xf32, #tpu.memory_space<vmem>>, vector<1x1x128xf32>
    %477 = vector.shape_cast %476 : vector<1x1x128xf32> to vector<1x128xf32>
    %c17_346 = arith.constant 17 : index
    %c0_347 = arith.constant 0 : index
    %478 = vector.load %arg20[%c17_346, %c0_347] : memref<42x128xf32, #tpu.memory_space<vmem>>, vector<16x128xf32>
    %479 = vector.broadcast %477 : vector<1x128xf32> to vector<16x128xf32>
    %480 = arith.mulf %479, %478 : vector<16x128xf32>
    %481 = arith.addf %458, %480 : vector<16x128xf32>
    %c7_348 = arith.constant 7 : index
    %c0_349 = arith.constant 0 : index
    %c0_350 = arith.constant 0 : index
    %482 = vector.load %arg10[%c7_348, %c0_349, %c0_350] : memref<11x1x128xf32, #tpu.memory_space<vmem>>, vector<1x1x128xf32>
    %483 = vector.shape_cast %482 : vector<1x1x128xf32> to vector<1x128xf32>
    %c18_351 = arith.constant 18 : index
    %c0_352 = arith.constant 0 : index
    %484 = vector.load %arg20[%c18_351, %c0_352] : memref<42x128xf32, #tpu.memory_space<vmem>>, vector<16x128xf32>
    %485 = vector.broadcast %483 : vector<1x128xf32> to vector<16x128xf32>
    %486 = arith.mulf %485, %484 : vector<16x128xf32>
    %487 = arith.addf %463, %486 : vector<16x128xf32>
    %c8_353 = arith.constant 8 : index
    %c0_354 = arith.constant 0 : index
    %c0_355 = arith.constant 0 : index
    %488 = vector.load %arg10[%c8_353, %c0_354, %c0_355] : memref<11x1x128xf32, #tpu.memory_space<vmem>>, vector<1x1x128xf32>
    %489 = vector.shape_cast %488 : vector<1x1x128xf32> to vector<1x128xf32>
    %c19_356 = arith.constant 19 : index
    %c0_357 = arith.constant 0 : index
    %490 = vector.load %arg20[%c19_356, %c0_357] : memref<42x128xf32, #tpu.memory_space<vmem>>, vector<16x128xf32>
    %491 = vector.broadcast %489 : vector<1x128xf32> to vector<16x128xf32>
    %492 = arith.mulf %491, %490 : vector<16x128xf32>
    %493 = arith.addf %469, %492 : vector<16x128xf32>
    %c9_358 = arith.constant 9 : index
    %c0_359 = arith.constant 0 : index
    %c0_360 = arith.constant 0 : index
    %494 = vector.load %arg10[%c9_358, %c0_359, %c0_360] : memref<11x1x128xf32, #tpu.memory_space<vmem>>, vector<1x1x128xf32>
    %495 = vector.shape_cast %494 : vector<1x1x128xf32> to vector<1x128xf32>
    %c20_361 = arith.constant 20 : index
    %c0_362 = arith.constant 0 : index
    %496 = vector.load %arg20[%c20_361, %c0_362] : memref<42x128xf32, #tpu.memory_space<vmem>>, vector<16x128xf32>
    %497 = vector.broadcast %495 : vector<1x128xf32> to vector<16x128xf32>
    %498 = arith.mulf %497, %496 : vector<16x128xf32>
    %499 = arith.addf %475, %498 : vector<16x128xf32>
    %c10_363 = arith.constant 10 : index
    %c0_364 = arith.constant 0 : index
    %c0_365 = arith.constant 0 : index
    %500 = vector.load %arg10[%c10_363, %c0_364, %c0_365] : memref<11x1x128xf32, #tpu.memory_space<vmem>>, vector<1x1x128xf32>
    %501 = vector.shape_cast %500 : vector<1x1x128xf32> to vector<1x128xf32>
    %c21 = arith.constant 21 : index
    %c0_366 = arith.constant 0 : index
    %502 = vector.load %arg20[%c21, %c0_366] : memref<42x128xf32, #tpu.memory_space<vmem>>, vector<16x128xf32>
    %503 = vector.broadcast %501 : vector<1x128xf32> to vector<16x128xf32>
    %504 = arith.mulf %503, %502 : vector<16x128xf32>
    %505 = arith.addf %481, %504 : vector<16x128xf32>
    %506 = arith.addf %493, %499 : vector<16x128xf32>
    %507 = arith.addf %505, %487 : vector<16x128xf32>
    %508 = arith.addf %506, %507 : vector<16x128xf32>
    %c0_367 = arith.constant 0 : index
    %c0_368 = arith.constant 0 : index
    %509 = vector.load %arg11[%c0_367, %c0_368] : memref<1x128xf32, #tpu.memory_space<vmem>>, vector<1x128xf32>
    %510 = vector.broadcast %509 : vector<1x128xf32> to vector<16x128xf32>
    %511 = arith.addf %508, %510 : vector<16x128xf32>
    %512 = arith.addf %442, %511 : vector<16x128xf32>
    %c16_369 = arith.constant 16 : index
    %c0_370 = arith.constant 0 : index
    %513 = vector.load %arg20[%c16_369, %c0_370] : memref<42x128xf32, #tpu.memory_space<vmem>>, vector<16x128xf32>
    tpu.vector_store %arg20[%c16_369, %c0_370], %396 {strides = array<i32>} : memref<42x128xf32, #tpu.memory_space<vmem>>, vector<16x128xf32>,
    %c0_371 = arith.constant 0 : index
    %c0_372 = arith.constant 0 : index
    %c0_373 = arith.constant 0 : index
    %514 = vector.load %arg14[%c0_371, %c0_372, %c0_373] : memref<21x1x128xf32, #tpu.memory_space<vmem>>, vector<1x1x128xf32>
    %515 = vector.shape_cast %514 : vector<1x1x128xf32> to vector<1x128xf32>
    %c6_374 = arith.constant 6 : index
    %c0_375 = arith.constant 0 : index
    %516 = vector.load %arg20[%c6_374, %c0_375] : memref<42x128xf32, #tpu.memory_space<vmem>>, vector<16x128xf32>
    %517 = vector.broadcast %515 : vector<1x128xf32> to vector<16x128xf32>
    %518 = arith.mulf %517, %516 : vector<16x128xf32>
    %c1_376 = arith.constant 1 : index
    %c0_377 = arith.constant 0 : index
    %c0_378 = arith.constant 0 : index
    %519 = vector.load %arg14[%c1_376, %c0_377, %c0_378] : memref<21x1x128xf32, #tpu.memory_space<vmem>>, vector<1x1x128xf32>
    %520 = vector.shape_cast %519 : vector<1x1x128xf32> to vector<1x128xf32>
    %c7_379 = arith.constant 7 : index
    %c0_380 = arith.constant 0 : index
    %521 = vector.load %arg20[%c7_379, %c0_380] : memref<42x128xf32, #tpu.memory_space<vmem>>, vector<16x128xf32>
    %522 = vector.broadcast %520 : vector<1x128xf32> to vector<16x128xf32>
    %523 = arith.mulf %522, %521 : vector<16x128xf32>
    %c2_381 = arith.constant 2 : index
    %c0_382 = arith.constant 0 : index
    %c0_383 = arith.constant 0 : index
    %524 = vector.load %arg14[%c2_381, %c0_382, %c0_383] : memref<21x1x128xf32, #tpu.memory_space<vmem>>, vector<1x1x128xf32>
    %525 = vector.shape_cast %524 : vector<1x1x128xf32> to vector<1x128xf32>
    %c8_384 = arith.constant 8 : index
    %c0_385 = arith.constant 0 : index
    %526 = vector.load %arg20[%c8_384, %c0_385] : memref<42x128xf32, #tpu.memory_space<vmem>>, vector<16x128xf32>
    %527 = vector.broadcast %525 : vector<1x128xf32> to vector<16x128xf32>
    %528 = arith.mulf %527, %526 : vector<16x128xf32>
    %c3_386 = arith.constant 3 : index
    %c0_387 = arith.constant 0 : index
    %c0_388 = arith.constant 0 : index
    %529 = vector.load %arg14[%c3_386, %c0_387, %c0_388] : memref<21x1x128xf32, #tpu.memory_space<vmem>>, vector<1x1x128xf32>
    %530 = vector.shape_cast %529 : vector<1x1x128xf32> to vector<1x128xf32>
    %c9_389 = arith.constant 9 : index
    %c0_390 = arith.constant 0 : index
    %531 = vector.load %arg20[%c9_389, %c0_390] : memref<42x128xf32, #tpu.memory_space<vmem>>, vector<16x128xf32>
    %532 = vector.broadcast %530 : vector<1x128xf32> to vector<16x128xf32>
    %533 = arith.mulf %532, %531 : vector<16x128xf32>
    %c4_391 = arith.constant 4 : index
    %c0_392 = arith.constant 0 : index
    %c0_393 = arith.constant 0 : index
    %534 = vector.load %arg14[%c4_391, %c0_392, %c0_393] : memref<21x1x128xf32, #tpu.memory_space<vmem>>, vector<1x1x128xf32>
    %535 = vector.shape_cast %534 : vector<1x1x128xf32> to vector<1x128xf32>
    %c10_394 = arith.constant 10 : index
    %c0_395 = arith.constant 0 : index
    %536 = vector.load %arg20[%c10_394, %c0_395] : memref<42x128xf32, #tpu.memory_space<vmem>>, vector<16x128xf32>
    %537 = vector.broadcast %535 : vector<1x128xf32> to vector<16x128xf32>
    %538 = arith.mulf %537, %536 : vector<16x128xf32>
    %539 = arith.addf %518, %538 : vector<16x128xf32>
    %c5_396 = arith.constant 5 : index
    %c0_397 = arith.constant 0 : index
    %c0_398 = arith.constant 0 : index
    %540 = vector.load %arg14[%c5_396, %c0_397, %c0_398] : memref<21x1x128xf32, #tpu.memory_space<vmem>>, vector<1x1x128xf32>
    %541 = vector.shape_cast %540 : vector<1x1x128xf32> to vector<1x128xf32>
    %c11_399 = arith.constant 11 : index
    %c0_400 = arith.constant 0 : index
    %542 = vector.load %arg20[%c11_399, %c0_400] : memref<42x128xf32, #tpu.memory_space<vmem>>, vector<16x128xf32>
    %543 = vector.broadcast %541 : vector<1x128xf32> to vector<16x128xf32>
    %544 = arith.mulf %543, %542 : vector<16x128xf32>
    %545 = arith.addf %523, %544 : vector<16x128xf32>
    %c6_401 = arith.constant 6 : index
    %c0_402 = arith.constant 0 : index
    %c0_403 = arith.constant 0 : index
    %546 = vector.load %arg14[%c6_401, %c0_402, %c0_403] : memref<21x1x128xf32, #tpu.memory_space<vmem>>, vector<1x1x128xf32>
    %547 = vector.shape_cast %546 : vector<1x1x128xf32> to vector<1x128xf32>
    %c12_404 = arith.constant 12 : index
    %c0_405 = arith.constant 0 : index
    %548 = vector.load %arg20[%c12_404, %c0_405] : memref<42x128xf32, #tpu.memory_space<vmem>>, vector<16x128xf32>
    %549 = vector.broadcast %547 : vector<1x128xf32> to vector<16x128xf32>
    %550 = arith.mulf %549, %548 : vector<16x128xf32>
    %551 = arith.addf %528, %550 : vector<16x128xf32>
    %c7_406 = arith.constant 7 : index
    %c0_407 = arith.constant 0 : index
    %c0_408 = arith.constant 0 : index
    %552 = vector.load %arg14[%c7_406, %c0_407, %c0_408] : memref<21x1x128xf32, #tpu.memory_space<vmem>>, vector<1x1x128xf32>
    %553 = vector.shape_cast %552 : vector<1x1x128xf32> to vector<1x128xf32>
    %c13_409 = arith.constant 13 : index
    %c0_410 = arith.constant 0 : index
    %554 = vector.load %arg20[%c13_409, %c0_410] : memref<42x128xf32, #tpu.memory_space<vmem>>, vector<16x128xf32>
    %555 = vector.broadcast %553 : vector<1x128xf32> to vector<16x128xf32>
    %556 = arith.mulf %555, %554 : vector<16x128xf32>
    %557 = arith.addf %533, %556 : vector<16x128xf32>
    %c8_411 = arith.constant 8 : index
    %c0_412 = arith.constant 0 : index
    %c0_413 = arith.constant 0 : index
    %558 = vector.load %arg14[%c8_411, %c0_412, %c0_413] : memref<21x1x128xf32, #tpu.memory_space<vmem>>, vector<1x1x128xf32>
    %559 = vector.shape_cast %558 : vector<1x1x128xf32> to vector<1x128xf32>
    %c14_414 = arith.constant 14 : index
    %c0_415 = arith.constant 0 : index
    %560 = vector.load %arg20[%c14_414, %c0_415] : memref<42x128xf32, #tpu.memory_space<vmem>>, vector<16x128xf32>
    %561 = vector.broadcast %559 : vector<1x128xf32> to vector<16x128xf32>
    %562 = arith.mulf %561, %560 : vector<16x128xf32>
    %563 = arith.addf %539, %562 : vector<16x128xf32>
    %c9_416 = arith.constant 9 : index
    %c0_417 = arith.constant 0 : index
    %c0_418 = arith.constant 0 : index
    %564 = vector.load %arg14[%c9_416, %c0_417, %c0_418] : memref<21x1x128xf32, #tpu.memory_space<vmem>>, vector<1x1x128xf32>
    %565 = vector.shape_cast %564 : vector<1x1x128xf32> to vector<1x128xf32>
    %c15_419 = arith.constant 15 : index
    %c0_420 = arith.constant 0 : index
    %566 = vector.load %arg20[%c15_419, %c0_420] : memref<42x128xf32, #tpu.memory_space<vmem>>, vector<16x128xf32>
    %567 = vector.broadcast %565 : vector<1x128xf32> to vector<16x128xf32>
    %568 = arith.mulf %567, %566 : vector<16x128xf32>
    %569 = arith.addf %545, %568 : vector<16x128xf32>
    %c10_421 = arith.constant 10 : index
    %c0_422 = arith.constant 0 : index
    %c0_423 = arith.constant 0 : index
    %570 = vector.load %arg14[%c10_421, %c0_422, %c0_423] : memref<21x1x128xf32, #tpu.memory_space<vmem>>, vector<1x1x128xf32>
    %571 = vector.shape_cast %570 : vector<1x1x128xf32> to vector<1x128xf32>
    %c16_424 = arith.constant 16 : index
    %c0_425 = arith.constant 0 : index
    %572 = vector.load %arg20[%c16_424, %c0_425] : memref<42x128xf32, #tpu.memory_space<vmem>>, vector<16x128xf32>
    %573 = vector.broadcast %571 : vector<1x128xf32> to vector<16x128xf32>
    %574 = arith.mulf %573, %572 : vector<16x128xf32>
    %575 = arith.addf %551, %574 : vector<16x128xf32>
    %c11_426 = arith.constant 11 : index
    %c0_427 = arith.constant 0 : index
    %c0_428 = arith.constant 0 : index
    %576 = vector.load %arg14[%c11_426, %c0_427, %c0_428] : memref<21x1x128xf32, #tpu.memory_space<vmem>>, vector<1x1x128xf32>
    %577 = vector.shape_cast %576 : vector<1x1x128xf32> to vector<1x128xf32>
    %c17_429 = arith.constant 17 : index
    %c0_430 = arith.constant 0 : index
    %578 = vector.load %arg20[%c17_429, %c0_430] : memref<42x128xf32, #tpu.memory_space<vmem>>, vector<16x128xf32>
    %579 = vector.broadcast %577 : vector<1x128xf32> to vector<16x128xf32>
    %580 = arith.mulf %579, %578 : vector<16x128xf32>
    %581 = arith.addf %557, %580 : vector<16x128xf32>
    %c12_431 = arith.constant 12 : index
    %c0_432 = arith.constant 0 : index
    %c0_433 = arith.constant 0 : index
    %582 = vector.load %arg14[%c12_431, %c0_432, %c0_433] : memref<21x1x128xf32, #tpu.memory_space<vmem>>, vector<1x1x128xf32>
    %583 = vector.shape_cast %582 : vector<1x1x128xf32> to vector<1x128xf32>
    %c18_434 = arith.constant 18 : index
    %c0_435 = arith.constant 0 : index
    %584 = vector.load %arg20[%c18_434, %c0_435] : memref<42x128xf32, #tpu.memory_space<vmem>>, vector<16x128xf32>
    %585 = vector.broadcast %583 : vector<1x128xf32> to vector<16x128xf32>
    %586 = arith.mulf %585, %584 : vector<16x128xf32>
    %587 = arith.addf %563, %586 : vector<16x128xf32>
    %c13_436 = arith.constant 13 : index
    %c0_437 = arith.constant 0 : index
    %c0_438 = arith.constant 0 : index
    %588 = vector.load %arg14[%c13_436, %c0_437, %c0_438] : memref<21x1x128xf32, #tpu.memory_space<vmem>>, vector<1x1x128xf32>
    %589 = vector.shape_cast %588 : vector<1x1x128xf32> to vector<1x128xf32>
    %c19_439 = arith.constant 19 : index
    %c0_440 = arith.constant 0 : index
    %590 = vector.load %arg20[%c19_439, %c0_440] : memref<42x128xf32, #tpu.memory_space<vmem>>, vector<16x128xf32>
    %591 = vector.broadcast %589 : vector<1x128xf32> to vector<16x128xf32>
    %592 = arith.mulf %591, %590 : vector<16x128xf32>
    %593 = arith.addf %569, %592 : vector<16x128xf32>
    %c14_441 = arith.constant 14 : index
    %c0_442 = arith.constant 0 : index
    %c0_443 = arith.constant 0 : index
    %594 = vector.load %arg14[%c14_441, %c0_442, %c0_443] : memref<21x1x128xf32, #tpu.memory_space<vmem>>, vector<1x1x128xf32>
    %595 = vector.shape_cast %594 : vector<1x1x128xf32> to vector<1x128xf32>
    %c20_444 = arith.constant 20 : index
    %c0_445 = arith.constant 0 : index
    %596 = vector.load %arg20[%c20_444, %c0_445] : memref<42x128xf32, #tpu.memory_space<vmem>>, vector<16x128xf32>
    %597 = vector.broadcast %595 : vector<1x128xf32> to vector<16x128xf32>
    %598 = arith.mulf %597, %596 : vector<16x128xf32>
    %599 = arith.addf %575, %598 : vector<16x128xf32>
    %c15_446 = arith.constant 15 : index
    %c0_447 = arith.constant 0 : index
    %c0_448 = arith.constant 0 : index
    %600 = vector.load %arg14[%c15_446, %c0_447, %c0_448] : memref<21x1x128xf32, #tpu.memory_space<vmem>>, vector<1x1x128xf32>
    %601 = vector.shape_cast %600 : vector<1x1x128xf32> to vector<1x128xf32>
    %c21_449 = arith.constant 21 : index
    %c0_450 = arith.constant 0 : index
    %602 = vector.load %arg20[%c21_449, %c0_450] : memref<42x128xf32, #tpu.memory_space<vmem>>, vector<16x128xf32>
    %603 = vector.broadcast %601 : vector<1x128xf32> to vector<16x128xf32>
    %604 = arith.mulf %603, %602 : vector<16x128xf32>
    %605 = arith.addf %581, %604 : vector<16x128xf32>
    %c16_451 = arith.constant 16 : index
    %c0_452 = arith.constant 0 : index
    %c0_453 = arith.constant 0 : index
    %606 = vector.load %arg14[%c16_451, %c0_452, %c0_453] : memref<21x1x128xf32, #tpu.memory_space<vmem>>, vector<1x1x128xf32>
    %607 = vector.shape_cast %606 : vector<1x1x128xf32> to vector<1x128xf32>
    %c22 = arith.constant 22 : index
    %c0_454 = arith.constant 0 : index
    %608 = vector.load %arg20[%c22, %c0_454] : memref<42x128xf32, #tpu.memory_space<vmem>>, vector<16x128xf32>
    %609 = vector.broadcast %607 : vector<1x128xf32> to vector<16x128xf32>
    %610 = arith.mulf %609, %608 : vector<16x128xf32>
    %611 = arith.addf %587, %610 : vector<16x128xf32>
    %c17_455 = arith.constant 17 : index
    %c0_456 = arith.constant 0 : index
    %c0_457 = arith.constant 0 : index
    %612 = vector.load %arg14[%c17_455, %c0_456, %c0_457] : memref<21x1x128xf32, #tpu.memory_space<vmem>>, vector<1x1x128xf32>
    %613 = vector.shape_cast %612 : vector<1x1x128xf32> to vector<1x128xf32>
    %c23 = arith.constant 23 : index
    %c0_458 = arith.constant 0 : index
    %614 = vector.load %arg20[%c23, %c0_458] : memref<42x128xf32, #tpu.memory_space<vmem>>, vector<16x128xf32>
    %615 = vector.broadcast %613 : vector<1x128xf32> to vector<16x128xf32>
    %616 = arith.mulf %615, %614 : vector<16x128xf32>
    %617 = arith.addf %593, %616 : vector<16x128xf32>
    %c18_459 = arith.constant 18 : index
    %c0_460 = arith.constant 0 : index
    %c0_461 = arith.constant 0 : index
    %618 = vector.load %arg14[%c18_459, %c0_460, %c0_461] : memref<21x1x128xf32, #tpu.memory_space<vmem>>, vector<1x1x128xf32>
    %619 = vector.shape_cast %618 : vector<1x1x128xf32> to vector<1x128xf32>
    %c24_462 = arith.constant 24 : index
    %c0_463 = arith.constant 0 : index
    %620 = vector.load %arg20[%c24_462, %c0_463] : memref<42x128xf32, #tpu.memory_space<vmem>>, vector<16x128xf32>
    %621 = vector.broadcast %619 : vector<1x128xf32> to vector<16x128xf32>
    %622 = arith.mulf %621, %620 : vector<16x128xf32>
    %623 = arith.addf %599, %622 : vector<16x128xf32>
    %c19_464 = arith.constant 19 : index
    %c0_465 = arith.constant 0 : index
    %c0_466 = arith.constant 0 : index
    %624 = vector.load %arg14[%c19_464, %c0_465, %c0_466] : memref<21x1x128xf32, #tpu.memory_space<vmem>>, vector<1x1x128xf32>
    %625 = vector.shape_cast %624 : vector<1x1x128xf32> to vector<1x128xf32>
    %c25 = arith.constant 25 : index
    %c0_467 = arith.constant 0 : index
    %626 = vector.load %arg20[%c25, %c0_467] : memref<42x128xf32, #tpu.memory_space<vmem>>, vector<16x128xf32>
    %627 = vector.broadcast %625 : vector<1x128xf32> to vector<16x128xf32>
    %628 = arith.mulf %627, %626 : vector<16x128xf32>
    %629 = arith.addf %605, %628 : vector<16x128xf32>
    %c20_468 = arith.constant 20 : index
    %c0_469 = arith.constant 0 : index
    %c0_470 = arith.constant 0 : index
    %630 = vector.load %arg14[%c20_468, %c0_469, %c0_470] : memref<21x1x128xf32, #tpu.memory_space<vmem>>, vector<1x1x128xf32>
    %631 = vector.shape_cast %630 : vector<1x1x128xf32> to vector<1x128xf32>
    %c26 = arith.constant 26 : index
    %c0_471 = arith.constant 0 : index
    %632 = vector.load %arg20[%c26, %c0_471] : memref<42x128xf32, #tpu.memory_space<vmem>>, vector<16x128xf32>
    %633 = vector.broadcast %631 : vector<1x128xf32> to vector<16x128xf32>
    %634 = arith.mulf %633, %632 : vector<16x128xf32>
    %635 = arith.addf %611, %634 : vector<16x128xf32>
    %636 = arith.addf %635, %617 : vector<16x128xf32>
    %637 = arith.addf %623, %629 : vector<16x128xf32>
    %638 = arith.addf %636, %637 : vector<16x128xf32>
    %c0_472 = arith.constant 0 : index
    %c0_473 = arith.constant 0 : index
    %639 = vector.load %arg15[%c0_472, %c0_473] : memref<1x128xf32, #tpu.memory_space<vmem>>, vector<1x128xf32>
    %640 = vector.broadcast %639 : vector<1x128xf32> to vector<16x128xf32>
    %641 = arith.addf %638, %640 : vector<16x128xf32>
    %642 = arith.addf %512, %641 : vector<16x128xf32>
    %cst_474 = arith.constant 0.000000e+00 : f32
    %643 = vector.shape_cast %14 : vector<1x128xi1> to vector<1x128xi1>
    %644 = vector.broadcast %643 : vector<1x128xi1> to vector<16x128xi1>
    %645 = vector.broadcast %cst_474 : f32 to vector<16x128xf32>
    %646 = arith.select %644, %642, %645 : vector<16x128xi1>, vector<16x128xf32>
    %c8_475 = arith.constant 8 : index
    %c128_476 = arith.constant 128 : index
    %647 = vector.load %arg19[%c8_475, %c128_476] : memref<26x384xf32, #tpu.memory_space<vmem>>, vector<16x128xf32>
    tpu.vector_store %arg19[%c8_475, %c128_476], %646 {strides = array<i32>} : memref<26x384xf32, #tpu.memory_space<vmem>>, vector<16x128xf32>,
    %c0_477 = arith.constant 0 : index
    %c0_478 = arith.constant 0 : index
    %c0_479 = arith.constant 0 : index
    %648 = vector.load %arg16[%c0_477, %c0_478, %c0_479] : memref<1x7x128xf32, #tpu.memory_space<vmem>>, vector<1x1x128xf32>
    %649 = vector.shape_cast %648 : vector<1x1x128xf32> to vector<1x128xf32>
    %c8_480 = arith.constant 8 : index
    %c125 = arith.constant 125 : index
    %650 = vector.load %arg19[%c8_480, %c125] : memref<26x384xf32, #tpu.memory_space<vmem>>, vector<16x128xf32>
    %651 = vector.broadcast %649 : vector<1x128xf32> to vector<16x128xf32>
    %652 = arith.mulf %651, %650 : vector<16x128xf32>
    %c0_481 = arith.constant 0 : index
    %c1_482 = arith.constant 1 : index
    %c0_483 = arith.constant 0 : index
    %653 = vector.load %arg16[%c0_481, %c1_482, %c0_483] : memref<1x7x128xf32, #tpu.memory_space<vmem>>, vector<1x1x128xf32>
    %654 = vector.shape_cast %653 : vector<1x1x128xf32> to vector<1x128xf32>
    %c8_484 = arith.constant 8 : index
    %c126 = arith.constant 126 : index
    %655 = vector.load %arg19[%c8_484, %c126] : memref<26x384xf32, #tpu.memory_space<vmem>>, vector<16x128xf32>
    %656 = vector.broadcast %654 : vector<1x128xf32> to vector<16x128xf32>
    %657 = arith.mulf %656, %655 : vector<16x128xf32>
    %c0_485 = arith.constant 0 : index
    %c2_486 = arith.constant 2 : index
    %c0_487 = arith.constant 0 : index
    %658 = vector.load %arg16[%c0_485, %c2_486, %c0_487] : memref<1x7x128xf32, #tpu.memory_space<vmem>>, vector<1x1x128xf32>
    %659 = vector.shape_cast %658 : vector<1x1x128xf32> to vector<1x128xf32>
    %c8_488 = arith.constant 8 : index
    %c127 = arith.constant 127 : index
    %660 = vector.load %arg19[%c8_488, %c127] : memref<26x384xf32, #tpu.memory_space<vmem>>, vector<16x128xf32>
    %661 = vector.broadcast %659 : vector<1x128xf32> to vector<16x128xf32>
    %662 = arith.mulf %661, %660 : vector<16x128xf32>
    %c0_489 = arith.constant 0 : index
    %c3_490 = arith.constant 3 : index
    %c0_491 = arith.constant 0 : index
    %663 = vector.load %arg16[%c0_489, %c3_490, %c0_491] : memref<1x7x128xf32, #tpu.memory_space<vmem>>, vector<1x1x128xf32>
    %664 = vector.shape_cast %663 : vector<1x1x128xf32> to vector<1x128xf32>
    %c8_492 = arith.constant 8 : index
    %c128_493 = arith.constant 128 : index
    %665 = vector.load %arg19[%c8_492, %c128_493] : memref<26x384xf32, #tpu.memory_space<vmem>>, vector<16x128xf32>
    %666 = vector.broadcast %664 : vector<1x128xf32> to vector<16x128xf32>
    %667 = arith.mulf %666, %665 : vector<16x128xf32>
    %c0_494 = arith.constant 0 : index
    %c4_495 = arith.constant 4 : index
    %c0_496 = arith.constant 0 : index
    %668 = vector.load %arg16[%c0_494, %c4_495, %c0_496] : memref<1x7x128xf32, #tpu.memory_space<vmem>>, vector<1x1x128xf32>
    %669 = vector.shape_cast %668 : vector<1x1x128xf32> to vector<1x128xf32>
    %c8_497 = arith.constant 8 : index
    %c129 = arith.constant 129 : index
    %670 = vector.load %arg19[%c8_497, %c129] : memref<26x384xf32, #tpu.memory_space<vmem>>, vector<16x128xf32>
    %671 = vector.broadcast %669 : vector<1x128xf32> to vector<16x128xf32>
    %672 = arith.mulf %671, %670 : vector<16x128xf32>
    %673 = arith.addf %652, %672 : vector<16x128xf32>
    %c0_498 = arith.constant 0 : index
    %c5_499 = arith.constant 5 : index
    %c0_500 = arith.constant 0 : index
    %674 = vector.load %arg16[%c0_498, %c5_499, %c0_500] : memref<1x7x128xf32, #tpu.memory_space<vmem>>, vector<1x1x128xf32>
    %675 = vector.shape_cast %674 : vector<1x1x128xf32> to vector<1x128xf32>
    %c8_501 = arith.constant 8 : index
    %c130 = arith.constant 130 : index
    %676 = vector.load %arg19[%c8_501, %c130] : memref<26x384xf32, #tpu.memory_space<vmem>>, vector<16x128xf32>
    %677 = vector.broadcast %675 : vector<1x128xf32> to vector<16x128xf32>
    %678 = arith.mulf %677, %676 : vector<16x128xf32>
    %679 = arith.addf %657, %678 : vector<16x128xf32>
    %c0_502 = arith.constant 0 : index
    %c6_503 = arith.constant 6 : index
    %c0_504 = arith.constant 0 : index
    %680 = vector.load %arg16[%c0_502, %c6_503, %c0_504] : memref<1x7x128xf32, #tpu.memory_space<vmem>>, vector<1x1x128xf32>
    %681 = vector.shape_cast %680 : vector<1x1x128xf32> to vector<1x128xf32>
    %c8_505 = arith.constant 8 : index
    %c131 = arith.constant 131 : index
    %682 = vector.load %arg19[%c8_505, %c131] : memref<26x384xf32, #tpu.memory_space<vmem>>, vector<16x128xf32>
    %683 = vector.broadcast %681 : vector<1x128xf32> to vector<16x128xf32>
    %684 = arith.mulf %683, %682 : vector<16x128xf32>
    %685 = arith.addf %662, %684 : vector<16x128xf32>
    %686 = arith.addf %673, %679 : vector<16x128xf32>
    %687 = arith.addf %685, %667 : vector<16x128xf32>
    %688 = arith.addf %686, %687 : vector<16x128xf32>
    %c0_506 = arith.constant 0 : index
    %c0_507 = arith.constant 0 : index
    %689 = vector.load %arg17[%c0_506, %c0_507] : memref<1x128xf32, #tpu.memory_space<vmem>>, vector<1x128xf32>
    %690 = vector.broadcast %689 : vector<1x128xf32> to vector<16x128xf32>
    %691 = arith.addf %688, %690 : vector<16x128xf32>
    %692 = arith.mulf %691, %16 : vector<16x128xf32>
    %c0_508 = arith.constant 0 : index
    %c0_509 = arith.constant 0 : index
    %c0_510 = arith.constant 0 : index
    %693 = vector.load %arg18[%c0_508, %c0_509, %c0_510] : memref<1x16x128xf32, #tpu.memory_space<vmem>>, vector<1x16x128xf32>
    %694 = vector.shape_cast %693 : vector<1x16x128xf32> to vector<16x128xf32>
    %695 = vector.shape_cast %692 : vector<16x128xf32> to vector<1x16x128xf32>
    tpu.vector_store %arg18[%c0_508, %c0_509, %c0_510], %695 {strides = array<i32>} : memref<1x16x128xf32, #tpu.memory_space<vmem>>, vector<1x16x128xf32>,
    return
  }
  func.func @transform_0(%arg0: i32) -> (i32, i32, i32) {
    %c0_i32 = arith.constant 0 : i32
    %c0_i32_0 = arith.constant 0 : i32
    %c0_i32_1 = arith.constant 0 : i32
    return %arg0, %c0_i32, %c0_i32_0 : i32, i32, i32
  }
  func.func @transform_1(%arg0: i32) -> (i32, i32, i32) {
    %c0_i32 = arith.constant 0 : i32
    %c0_i32_0 = arith.constant 0 : i32
    %c0_i32_1 = arith.constant 0 : i32
    %c0_i32_2 = arith.constant 0 : i32
    return %c0_i32, %c0_i32_0, %c0_i32_1 : i32, i32, i32
  }
  func.func @transform_2(%arg0: i32) -> (i32, i32) {
    %c0_i32 = arith.constant 0 : i32
    %c0_i32_0 = arith.constant 0 : i32
    %c0_i32_1 = arith.constant 0 : i32
    return %c0_i32, %c0_i32_0 : i32, i32
  }
  func.func @transform_3(%arg0: i32) -> (i32, i32, i32) {
    %c0_i32 = arith.constant 0 : i32
    %c0_i32_0 = arith.constant 0 : i32
    %c0_i32_1 = arith.constant 0 : i32
    %c0_i32_2 = arith.constant 0 : i32
    return %c0_i32, %c0_i32_0, %c0_i32_1 : i32, i32, i32
  }
  func.func @transform_4(%arg0: i32) -> (i32, i32) {
    %c0_i32 = arith.constant 0 : i32
    %c0_i32_0 = arith.constant 0 : i32
    %c0_i32_1 = arith.constant 0 : i32
    return %c0_i32, %c0_i32_0 : i32, i32
  }
  func.func @transform_5(%arg0: i32) -> (i32, i32, i32) {
    %c0_i32 = arith.constant 0 : i32
    %c0_i32_0 = arith.constant 0 : i32
    %c0_i32_1 = arith.constant 0 : i32
    %c0_i32_2 = arith.constant 0 : i32
    return %c0_i32, %c0_i32_0, %c0_i32_1 : i32, i32, i32
  }
  func.func @transform_6(%arg0: i32) -> (i32, i32) {
    %c0_i32 = arith.constant 0 : i32
    %c0_i32_0 = arith.constant 0 : i32
    %c0_i32_1 = arith.constant 0 : i32
    return %c0_i32, %c0_i32_0 : i32, i32
  }
  func.func @transform_7(%arg0: i32) -> (i32, i32, i32) {
    %c0_i32 = arith.constant 0 : i32
    %c0_i32_0 = arith.constant 0 : i32
    %c0_i32_1 = arith.constant 0 : i32
    %c0_i32_2 = arith.constant 0 : i32
    return %c0_i32, %c0_i32_0, %c0_i32_1 : i32, i32, i32
  }
  func.func @transform_8(%arg0: i32) -> (i32, i32) {
    %c0_i32 = arith.constant 0 : i32
    %c0_i32_0 = arith.constant 0 : i32
    %c0_i32_1 = arith.constant 0 : i32
    return %c0_i32, %c0_i32_0 : i32, i32
  }
  func.func @transform_9(%arg0: i32) -> (i32, i32, i32) {
    %c0_i32 = arith.constant 0 : i32
    %c0_i32_0 = arith.constant 0 : i32
    %c0_i32_1 = arith.constant 0 : i32
    %c0_i32_2 = arith.constant 0 : i32
    return %c0_i32, %c0_i32_0, %c0_i32_1 : i32, i32, i32
  }
  func.func @transform_10(%arg0: i32) -> (i32, i32) {
    %c0_i32 = arith.constant 0 : i32
    %c0_i32_0 = arith.constant 0 : i32
    %c0_i32_1 = arith.constant 0 : i32
    return %c0_i32, %c0_i32_0 : i32, i32
  }
  func.func @transform_11(%arg0: i32) -> (i32, i32, i32) {
    %c0_i32 = arith.constant 0 : i32
    %c0_i32_0 = arith.constant 0 : i32
    %c0_i32_1 = arith.constant 0 : i32
    %c0_i32_2 = arith.constant 0 : i32
    return %c0_i32, %c0_i32_0, %c0_i32_1 : i32, i32, i32
  }
  func.func @transform_12(%arg0: i32) -> (i32, i32) {
    %c0_i32 = arith.constant 0 : i32
    %c0_i32_0 = arith.constant 0 : i32
    %c0_i32_1 = arith.constant 0 : i32
    return %c0_i32, %c0_i32_0 : i32, i32
  }
  func.func @transform_13(%arg0: i32) -> (i32, i32, i32) {
    %c0_i32 = arith.constant 0 : i32
    %c0_i32_0 = arith.constant 0 : i32
    %c0_i32_1 = arith.constant 0 : i32
    %c0_i32_2 = arith.constant 0 : i32
    return %c0_i32, %c0_i32_0, %c0_i32_1 : i32, i32, i32
  }
  func.func @transform_14(%arg0: i32) -> (i32, i32) {
    %c0_i32 = arith.constant 0 : i32
    %c0_i32_0 = arith.constant 0 : i32
    %c0_i32_1 = arith.constant 0 : i32
    return %c0_i32, %c0_i32_0 : i32, i32
  }
  func.func @transform_15(%arg0: i32) -> (i32, i32, i32) {
    %c0_i32 = arith.constant 0 : i32
    %c0_i32_0 = arith.constant 0 : i32
    %c0_i32_1 = arith.constant 0 : i32
    %c0_i32_2 = arith.constant 0 : i32
    return %c0_i32, %c0_i32_0, %c0_i32_1 : i32, i32, i32
  }
  func.func @transform_16(%arg0: i32) -> (i32, i32) {
    %c0_i32 = arith.constant 0 : i32
    %c0_i32_0 = arith.constant 0 : i32
    %c0_i32_1 = arith.constant 0 : i32
    return %c0_i32, %c0_i32_0 : i32, i32
  }
  func.func @transform_17(%arg0: i32) -> (i32, i32, i32) {
    %c0_i32 = arith.constant 0 : i32
    %c0_i32_0 = arith.constant 0 : i32
    %c0_i32_1 = arith.constant 0 : i32
    return %arg0, %c0_i32, %c0_i32_0 : i32, i32, i32
  }
}

</mosaic_0001>

<llo_original>
// kernel: tpu_custom_call.1
$region0: #{tpu_custom_call.1}
  #allocation0 [shape = 'u32[]', space=smem, size = 0x4, offset = 0x4, fixed_abs, tag = 'smem constant byte address 0x4 - core index']
  #allocation1 [shape = 'u32[144,128]{1,0:T(1,128)}', space=vmem, size = 0x12000, scoped, tag = 'internal scratch']
  #allocation2 [shape = 'f32[26,384]{1,0:T(8,128)}', space=vmem, size = 0xc000, scoped, tag = 'scratch operand']
  #allocation3 [shape = 'f32[42,128]{1,0:T(8,128)}', space=vmem, size = 0x6000, scoped, tag = 'scratch operand']
  %s0 = inlined_call_operand.vmem [shape: f32[2,16,128], index: 0, kind: input, shape index: {}]
  %s1 = inlined_call_operand.vmem [shape: f32[5,5,128], index: 1, kind: input, shape index: {}]
  %s2 = inlined_call_operand.hbm [shape: f32[1,128], index: 2, kind: input, shape index: {}]
  %s3 = inlined_call_operand.vmem [shape: f32[1,7,128], index: 3, kind: input, shape index: {}]
  %s4 = inlined_call_operand.hbm [shape: f32[1,128], index: 4, kind: input, shape index: {}]
  %s5 = inlined_call_operand.hbm [shape: f32[7,1,128], index: 5, kind: input, shape index: {}]
  %s6 = inlined_call_operand.hbm [shape: f32[1,128], index: 6, kind: input, shape index: {}]
  %s7 = inlined_call_operand.vmem [shape: f32[1,11,128], index: 7, kind: input, shape index: {}]
  %s8 = inlined_call_operand.hbm [shape: f32[1,128], index: 8, kind: input, shape index: {}]
  %s9 = inlined_call_operand.vmem [shape: f32[11,1,128], index: 9, kind: input, shape index: {}]
  %s10 = inlined_call_operand.hbm [shape: f32[1,128], index: 10, kind: input, shape index: {}]
  %s11 = inlined_call_operand.vmem [shape: f32[1,21,128], index: 11, kind: input, shape index: {}]
  %s12 = inlined_call_operand.vmem [shape: f32[1,128], index: 12, kind: input, shape index: {}]
  %s13 = inlined_call_operand.vmem [shape: f32[21,1,128], index: 13, kind: input, shape index: {}]
  %s14 = inlined_call_operand.vmem [shape: f32[1,128], index: 14, kind: input, shape index: {}]
  %s15 = inlined_call_operand.vmem [shape: f32[1,7,128], index: 15, kind: input, shape index: {}]
  %s16 = inlined_call_operand.vmem [shape: f32[1,128], index: 16, kind: input, shape index: {}]
  %s17 = inlined_call_operand.hbm [shape: f32[2,16,128], index: 17, kind: output, shape index: {}]
  %s18 = sld [smem:[#allocation0]]
  $region125: #{tpu_custom_call.1} parent=0
    _
  %s20 = ssub.s32 1, %s18
  %s21 = scalar_select 0, %s20, %s18
  $region1: #{tpu_custom_call.1} parent=0
    #allocation4 [shape = 'u8[512]{0}', space=vmem, size = 0x400, scoped, tag = 'input window, operand 2, single buffered']
    #allocation5 [shape = 's32[2]{0}', space=sflag, size = 0x8, scoped, tag = 'scoped memory for tpu_custom_call.1']
    #allocation6 [shape = 's32[2]{0}', space=sflag, size = 0x8, scoped, tag = 'scoped memory for tpu_custom_call.1']
    #allocation7 [shape = 'u8[512]{0}', space=vmem, size = 0x400, scoped, tag = 'input window, operand 4, single buffered']
    #allocation8 [shape = 's32[1]{0}', space=sflag, size = 0x4, scoped, tag = 'scoped memory for tpu_custom_call.1']
    #allocation9 [shape = 'u8[3584]{0}', space=vmem, size = 0x1000, scoped, tag = 'input window, operand 5, single buffered']
    #allocation10 [shape = 'u8[512]{0}', space=vmem, size = 0x400, scoped, tag = 'input window, operand 6, single buffered']
    #allocation11 [shape = 's32[1]{0}', space=sflag, size = 0x4, scoped, tag = 'scoped memory for tpu_custom_call.1']
    #allocation12 [shape = 'u8[512]{0}', space=vmem, size = 0x400, scoped, tag = 'input window, operand 8, single buffered']
    #allocation13 [shape = 'u8[512]{0}', space=vmem, size = 0x400, scoped, tag = 'input window, operand 10, single buffered']
    #allocation14 [shape = 's32[1]{0}', space=sflag, size = 0x4, scoped, tag = 'scoped memory for tpu_custom_call.1']
    #allocation15 [shape = 'u8[16384]{0}', space=vmem, size = 0x4000, scoped, tag = 'output window, operand 0']
    %22 = vsyncpa [#allocation5], 0
    %23 = vsyncpa [#allocation8], 0
    %24 = vsyncpa [#allocation11], 0
    %25 = vsyncpa [#allocation14], 0
    %26 = vsyncpa [#allocation6], 0
    %s27 = scalar_lea.sflag [#allocation6], 1
    %28 = vsyncpa %s27, 0
    loop: start=0, step=1, limit=4
    $region2: #{tpu_custom_call.1} parent=1 // loop_pre_header
      _
    $region3: #{tpu_custom_call.1} parent=1 // loop_header
      %s30 = sphi 0, %s34
      %p31 = scmp.ge.s32.totalorder %s30, 4
      %s40 = sphi 0, %s42
      %s43 = sphi 0, %s40
      %s44 = sphi 0, %s43
      %s60 = sphi 0, %s44
      %s64 = sphi 0, %s64
      %s66 = sphi 0, %s64
      %s67 = sphi 0, %s66
      %s81 = sphi 0, %s67
      %s85 = sphi 0, %s85
      %s87 = sphi 0, %s85
      %s88 = sphi 0, %s87
      %s102 = sphi 0, %s88
      %s106 = sphi 0, %s106
      %s108 = sphi 0, %s106
      %s109 = sphi 0, %s108
      %s123 = sphi 0, %s109
      %s127 = sphi 0, %s127
      %s129 = sphi 0, %s127
      %s130 = sphi 0, %s129
      %s144 = sphi 0, %s130
      %s148 = sphi 0, %s148
      %s150 = sphi 0, %s148
      %s151 = sphi 0, %s150
      %s165 = sphi 0, %s151
      %s169 = sphi 0, %s169
      %s171 = sphi 0, %s169
      %s172 = sphi 0, %s171
      %s186 = sphi 0, %s172
      %s190 = sphi 0, %s190
      %s192 = sphi 0, %s190
      %s193 = sphi 0, %s192
      %s207 = sphi 0, %s193
      %s211 = sphi 0, %s211
      %s213 = sphi 0, %s211
      %s214 = sphi 0, %s213
      %s228 = sphi 0, %s214
      %s232 = sphi 0, %s232
      %s234 = sphi 0, %s232
      %s235 = sphi 0, %s234
      %s249 = sphi 0, %s235
      %s253 = sphi 0, %s253
      %s255 = sphi 0, %s253
      %s256 = sphi 0, %s255
      %s270 = sphi 0, %s256
      %s274 = sphi 0, %s274
      %s276 = sphi 0, %s274
      %s277 = sphi 0, %s276
      %s291 = sphi 0, %s277
      %s295 = sphi 0, %s295
      %s297 = sphi 0, %s295
      %s298 = sphi 0, %s297
      %s312 = sphi 0, %s298
      %s316 = sphi 0, %s316
      %s318 = sphi 0, %s316
      %s319 = sphi 0, %s318
      %s333 = sphi 0, %s319
      %s337 = sphi 0, %s337
      %s339 = sphi 0, %s337
      %s340 = sphi 0, %s339
      %s354 = sphi 0, %s340
      %s358 = sphi 0, %s358
      %s360 = sphi 0, %s358
      %s361 = sphi 0, %s360
      %s375 = sphi 0, %s361
      %s379 = sphi 0, %s379
      %s381 = sphi 0, %s379
      %s382 = sphi 0, %s381
      %s396 = sphi 0, %s382
      %s402 = sphi 0, %s404
      %s405 = sphi 0, %s402
      %s406 = sphi 0, %s405
      %s422 = sphi 0, %s406
    $region4: #{tpu_custom_call.1} parent=1 // loop_header_branch
      %33 = sbr.rel (%p31) target = $region8
    $region5: #{tpu_custom_call.1} parent=1 // loop_body
      %s35 = ssub.s32 %s30, 1
      %s36 = ssub.s32 %s30, 2
      %s37 = sadd.s32 %s30, 1
      %s38 = ssub.s32 %s30, %s37
      %p39 = scmp.eq.s32.totalorder %s38, 0
      %s41 = sadd.s32 %s40, 1
      %s42 = scalar_select %p39, %s40, %s41
      %p45 = pneg %p39
      %p46 = scmp.eq.s32.totalorder %s30, 1
      %p47 = por %p45, %p46
      %p48 = scmp.ne.s32.totalorder %s40, %s43
      %p49 = scmp.eq.s32.totalorder %s30, 0
      %p50 = por %p48, %p49
      %p51 = scmp.ne.s32.totalorder %s40, %s43
      %p52 = scmp.eq.s32.totalorder %s35, 1
      %p53 = por %p51, %p52
      %p54 = scmp.ne.s32.totalorder %s43, %s44
      %p55 = scmp.eq.s32.totalorder %s35, 0
      %p56 = por %p54, %p55
      %p57 = scmp.ne.s32.totalorder %s43, %s44
      %p58 = scmp.eq.s32.totalorder %s36, 1
      %p59 = por %p57, %p58
      %p61 = scmp.ne.s32.totalorder %s44, %s60
      %p62 = scmp.eq.s32.totalorder %s36, 0
      %p63 = por %p61, %p62
      %s65 = sadd.s32 %s64, 1
      %p68 = scmp.eq.s32.totalorder %s30, 1
      %p69 = scmp.ne.s32.totalorder %s64, %s66
      %p70 = scmp.eq.s32.totalorder %s30, 0
      %p71 = por %p69, %p70
      %p72 = scmp.ne.s32.totalorder %s64, %s66
      %p73 = scmp.eq.s32.totalorder %s35, 1
      %p74 = por %p72, %p73
      %p75 = scmp.ne.s32.totalorder %s66, %s67
      %p76 = scmp.eq.s32.totalorder %s35, 0
      %p77 = por %p75, %p76
      %p78 = scmp.ne.s32.totalorder %s66, %s67
      %p79 = scmp.eq.s32.totalorder %s36, 1
      %p80 = por %p78, %p79
      %p82 = scmp.ne.s32.totalorder %s67, %s81
      %p83 = scmp.eq.s32.totalorder %s36, 0
      %p84 = por %p82, %p83
      %s86 = sadd.s32 %s85, 1
      %p89 = scmp.eq.s32.totalorder %s30, 1
      %p90 = scmp.ne.s32.totalorder %s85, %s87
      %p91 = scmp.eq.s32.totalorder %s30, 0
      %p92 = por %p90, %p91
      %p93 = scmp.ne.s32.totalorder %s85, %s87
      %p94 = scmp.eq.s32.totalorder %s35, 1
      %p95 = por %p93, %p94
      %p96 = scmp.ne.s32.totalorder %s87, %s88
      %p97 = scmp.eq.s32.totalorder %s35, 0
      %p98 = por %p96, %p97
      %p99 = scmp.ne.s32.totalorder %s87, %s88
      %p100 = scmp.eq.s32.totalorder %s36, 1
      %p101 = por %p99, %p100
      %p103 = scmp.ne.s32.totalorder %s88, %s102
      %p104 = scmp.eq.s32.totalorder %s36, 0
      %p105 = por %p103, %p104
      %s107 = sadd.s32 %s106, 1
      %p110 = scmp.eq.s32.totalorder %s30, 1
      %p111 = scmp.ne.s32.totalorder %s106, %s108
      %p112 = scmp.eq.s32.totalorder %s30, 0
      %p113 = por %p111, %p112
      %p114 = scmp.ne.s32.totalorder %s106, %s108
      %p115 = scmp.eq.s32.totalorder %s35, 1
      %p116 = por %p114, %p115
      %p117 = scmp.ne.s32.totalorder %s108, %s109
      %p118 = scmp.eq.s32.totalorder %s35, 0
      %p119 = por %p117, %p118
      %p120 = scmp.ne.s32.totalorder %s108, %s109
      %p121 = scmp.eq.s32.totalorder %s36, 1
      %p122 = por %p120, %p121
      %p124 = scmp.ne.s32.totalorder %s109, %s123
      %p125 = scmp.eq.s32.totalorder %s36, 0
      %p126 = por %p124, %p125
      %s128 = sadd.s32 %s127, 1
      %p131 = scmp.eq.s32.totalorder %s30, 1
      %p132 = scmp.ne.s32.totalorder %s127, %s129
      %p133 = scmp.eq.s32.totalorder %s30, 0
      %p134 = por %p132, %p133
      %p135 = scmp.ne.s32.totalorder %s127, %s129
      %p136 = scmp.eq.s32.totalorder %s35, 1
      %p137 = por %p135, %p136
      %p138 = scmp.ne.s32.totalorder %s129, %s130
      %p139 = scmp.eq.s32.totalorder %s35, 0
      %p140 = por %p138, %p139
      %p141 = scmp.ne.s32.totalorder %s129, %s130
      %p142 = scmp.eq.s32.totalorder %s36, 1
      %p143 = por %p141, %p142
      %p145 = scmp.ne.s32.totalorder %s130, %s144
      %p146 = scmp.eq.s32.totalorder %s36, 0
      %p147 = por %p145, %p146
      %s149 = sadd.s32 %s148, 1
      %p152 = scmp.eq.s32.totalorder %s30, 1
      %p153 = scmp.ne.s32.totalorder %s148, %s150
      %p154 = scmp.eq.s32.totalorder %s30, 0
      %p155 = por %p153, %p154
      %p156 = scmp.ne.s32.totalorder %s148, %s150
      %p157 = scmp.eq.s32.totalorder %s35, 1
      %p158 = por %p156, %p157
      %p159 = scmp.ne.s32.totalorder %s150, %s151
      %p160 = scmp.eq.s32.totalorder %s35, 0
      %p161 = por %p159, %p160
      %p162 = scmp.ne.s32.totalorder %s150, %s151
      %p163 = scmp.eq.s32.totalorder %s36, 1
      %p164 = por %p162, %p163
      %p166 = scmp.ne.s32.totalorder %s151, %s165
      %p167 = scmp.eq.s32.totalorder %s36, 0
      %p168 = por %p166, %p167
      %s170 = sadd.s32 %s169, 1
      %p173 = scmp.eq.s32.totalorder %s30, 1
      %p174 = scmp.ne.s32.totalorder %s169, %s171
      %p175 = scmp.eq.s32.totalorder %s30, 0
      %p176 = por %p174, %p175
      %p177 = scmp.ne.s32.totalorder %s169, %s171
      %p178 = scmp.eq.s32.totalorder %s35, 1
      %p179 = por %p177, %p178
      %p180 = scmp.ne.s32.totalorder %s171, %s172
      %p181 = scmp.eq.s32.totalorder %s35, 0
      %p182 = por %p180, %p181
      %p183 = scmp.ne.s32.totalorder %s171, %s172
      %p184 = scmp.eq.s32.totalorder %s36, 1
      %p185 = por %p183, %p184
      %p187 = scmp.ne.s32.totalorder %s172, %s186
      %p188 = scmp.eq.s32.totalorder %s36, 0
      %p189 = por %p187, %p188
      %s191 = sadd.s32 %s190, 1
      %p194 = scmp.eq.s32.totalorder %s30, 1
      %p195 = scmp.ne.s32.totalorder %s190, %s192
      %p196 = scmp.eq.s32.totalorder %s30, 0
      %p197 = por %p195, %p196
      %p198 = scmp.ne.s32.totalorder %s190, %s192
      %p199 = scmp.eq.s32.totalorder %s35, 1
      %p200 = por %p198, %p199
      %p201 = scmp.ne.s32.totalorder %s192, %s193
      %p202 = scmp.eq.s32.totalorder %s35, 0
      %p203 = por %p201, %p202
      %p204 = scmp.ne.s32.totalorder %s192, %s193
      %p205 = scmp.eq.s32.totalorder %s36, 1
      %p206 = por %p204, %p205
      %p208 = scmp.ne.s32.totalorder %s193, %s207
      %p209 = scmp.eq.s32.totalorder %s36, 0
      %p210 = por %p208, %p209
      %s212 = sadd.s32 %s211, 1
      %p215 = scmp.eq.s32.totalorder %s30, 1
      %p216 = scmp.ne.s32.totalorder %s211, %s213
      %p217 = scmp.eq.s32.totalorder %s30, 0
      %p218 = por %p216, %p217
      %p219 = scmp.ne.s32.totalorder %s211, %s213
      %p220 = scmp.eq.s32.totalorder %s35, 1
      %p221 = por %p219, %p220
      %p222 = scmp.ne.s32.totalorder %s213, %s214
      %p223 = scmp.eq.s32.totalorder %s35, 0
      %p224 = por %p222, %p223
      %p225 = scmp.ne.s32.totalorder %s213, %s214
      %p226 = scmp.eq.s32.totalorder %s36, 1
      %p227 = por %p225, %p226
      %p229 = scmp.ne.s32.totalorder %s214, %s228
      %p230 = scmp.eq.s32.totalorder %s36, 0
      %p231 = por %p229, %p230
      %s233 = sadd.s32 %s232, 1
      %p236 = scmp.eq.s32.totalorder %s30, 1
      %p237 = scmp.ne.s32.totalorder %s232, %s234
      %p238 = scmp.eq.s32.totalorder %s30, 0
      %p239 = por %p237, %p238
      %p240 = scmp.ne.s32.totalorder %s232, %s234
      %p241 = scmp.eq.s32.totalorder %s35, 1
      %p242 = por %p240, %p241
      %p243 = scmp.ne.s32.totalorder %s234, %s235
      %p244 = scmp.eq.s32.totalorder %s35, 0
      %p245 = por %p243, %p244
      %p246 = scmp.ne.s32.totalorder %s234, %s235
      %p247 = scmp.eq.s32.totalorder %s36, 1
      %p248 = por %p246, %p247
      %p250 = scmp.ne.s32.totalorder %s235, %s249
      %p251 = scmp.eq.s32.totalorder %s36, 0
      %p252 = por %p250, %p251
      %s254 = sadd.s32 %s253, 1
      %p257 = scmp.eq.s32.totalorder %s30, 1
      %p258 = scmp.ne.s32.totalorder %s253, %s255
      %p259 = scmp.eq.s32.totalorder %s30, 0
      %p260 = por %p258, %p259
      %p261 = scmp.ne.s32.totalorder %s253, %s255
      %p262 = scmp.eq.s32.totalorder %s35, 1
      %p263 = por %p261, %p262
      %p264 = scmp.ne.s32.totalorder %s255, %s256
      %p265 = scmp.eq.s32.totalorder %s35, 0
      %p266 = por %p264, %p265
      %p267 = scmp.ne.s32.totalorder %s255, %s256
      %p268 = scmp.eq.s32.totalorder %s36, 1
      %p269 = por %p267, %p268
      %p271 = scmp.ne.s32.totalorder %s256, %s270
      %p272 = scmp.eq.s32.totalorder %s36, 0
      %p273 = por %p271, %p272
      %s275 = sadd.s32 %s274, 1
      %p278 = scmp.eq.s32.totalorder %s30, 1
      %p279 = scmp.ne.s32.totalorder %s274, %s276
      %p280 = scmp.eq.s32.totalorder %s30, 0
      %p281 = por %p279, %p280
      %p282 = scmp.ne.s32.totalorder %s274, %s276
      %p283 = scmp.eq.s32.totalorder %s35, 1
      %p284 = por %p282, %p283
      %p285 = scmp.ne.s32.totalorder %s276, %s277
      %p286 = scmp.eq.s32.totalorder %s35, 0
      %p287 = por %p285, %p286
      %p288 = scmp.ne.s32.totalorder %s276, %s277
      %p289 = scmp.eq.s32.totalorder %s36, 1
      %p290 = por %p288, %p289
      %p292 = scmp.ne.s32.totalorder %s277, %s291
      %p293 = scmp.eq.s32.totalorder %s36, 0
      %p294 = por %p292, %p293
      %s296 = sadd.s32 %s295, 1
      %p299 = scmp.eq.s32.totalorder %s30, 1
      %p300 = scmp.ne.s32.totalorder %s295, %s297
      %p301 = scmp.eq.s32.totalorder %s30, 0
      %p302 = por %p300, %p301
      %p303 = scmp.ne.s32.totalorder %s295, %s297
      %p304 = scmp.eq.s32.totalorder %s35, 1
      %p305 = por %p303, %p304
      %p306 = scmp.ne.s32.totalorder %s297, %s298
      %p307 = scmp.eq.s32.totalorder %s35, 0
      %p308 = por %p306, %p307
      %p309 = scmp.ne.s32.totalorder %s297, %s298
      %p310 = scmp.eq.s32.totalorder %s36, 1
      %p311 = por %p309, %p310
      %p313 = scmp.ne.s32.totalorder %s298, %s312
      %p314 = scmp.eq.s32.totalorder %s36, 0
      %p315 = por %p313, %p314
      %s317 = sadd.s32 %s316, 1
      %p320 = scmp.eq.s32.totalorder %s30, 1
      %p321 = scmp.ne.s32.totalorder %s316, %s318
      %p322 = scmp.eq.s32.totalorder %s30, 0
      %p323 = por %p321, %p322
      %p324 = scmp.ne.s32.totalorder %s316, %s318
      %p325 = scmp.eq.s32.totalorder %s35, 1
      %p326 = por %p324, %p325
      %p327 = scmp.ne.s32.totalorder %s318, %s319
      %p328 = scmp.eq.s32.totalorder %s35, 0
      %p329 = por %p327, %p328
      %p330 = scmp.ne.s32.totalorder %s318, %s319
      %p331 = scmp.eq.s32.totalorder %s36, 1
      %p332 = por %p330, %p331
      %p334 = scmp.ne.s32.totalorder %s319, %s333
      %p335 = scmp.eq.s32.totalorder %s36, 0
      %p336 = por %p334, %p335
      %s338 = sadd.s32 %s337, 1
      %p341 = scmp.eq.s32.totalorder %s30, 1
      %p342 = scmp.ne.s32.totalorder %s337, %s339
      %p343 = scmp.eq.s32.totalorder %s30, 0
      %p344 = por %p342, %p343
      %p345 = scmp.ne.s32.totalorder %s337, %s339
      %p346 = scmp.eq.s32.totalorder %s35, 1
      %p347 = por %p345, %p346
      %p348 = scmp.ne.s32.totalorder %s339, %s340
      %p349 = scmp.eq.s32.totalorder %s35, 0
      %p350 = por %p348, %p349
      %p351 = scmp.ne.s32.totalorder %s339, %s340
      %p352 = scmp.eq.s32.totalorder %s36, 1
      %p353 = por %p351, %p352
      %p355 = scmp.ne.s32.totalorder %s340, %s354
      %p356 = scmp.eq.s32.totalorder %s36, 0
      %p357 = por %p355, %p356
      %s359 = sadd.s32 %s358, 1
      %p362 = scmp.eq.s32.totalorder %s30, 1
      %p363 = scmp.ne.s32.totalorder %s358, %s360
      %p364 = scmp.eq.s32.totalorder %s30, 0
      %p365 = por %p363, %p364
      %p366 = scmp.ne.s32.totalorder %s358, %s360
      %p367 = scmp.eq.s32.totalorder %s35, 1
      %p368 = por %p366, %p367
      %p369 = scmp.ne.s32.totalorder %s360, %s361
      %p370 = scmp.eq.s32.totalorder %s35, 0
      %p371 = por %p369, %p370
      %p372 = scmp.ne.s32.totalorder %s360, %s361
      %p373 = scmp.eq.s32.totalorder %s36, 1
      %p374 = por %p372, %p373
      %p376 = scmp.ne.s32.totalorder %s361, %s375
      %p377 = scmp.eq.s32.totalorder %s36, 0
      %p378 = por %p376, %p377
      %s380 = sadd.s32 %s379, 1
      %p383 = scmp.eq.s32.totalorder %s30, 1
      %p384 = scmp.ne.s32.totalorder %s379, %s381
      %p385 = scmp.eq.s32.totalorder %s30, 0
      %p386 = por %p384, %p385
      %p387 = scmp.ne.s32.totalorder %s379, %s381
      %p388 = scmp.eq.s32.totalorder %s35, 1
      %p389 = por %p387, %p388
      %p390 = scmp.ne.s32.totalorder %s381, %s382
      %p391 = scmp.eq.s32.totalorder %s35, 0
      %p392 = por %p390, %p391
      %p393 = scmp.ne.s32.totalorder %s381, %s382
      %p394 = scmp.eq.s32.totalorder %s36, 1
      %p395 = por %p393, %p394
      %p397 = scmp.ne.s32.totalorder %s382, %s396
      %p398 = scmp.eq.s32.totalorder %s36, 0
      %p399 = por %p397, %p398
      %s400 = ssub.s32 %s30, %s37
      %p401 = scmp.eq.s32.totalorder %s400, 0
      %s403 = sadd.s32 %s402, 1
      %s404 = scalar_select %p401, %s402, %s403
      %p407 = pneg %p401
      %p408 = scmp.eq.s32.totalorder %s30, 1
      %p409 = por %p407, %p408
      %p410 = scmp.ne.s32.totalorder %s402, %s405
      %p411 = scmp.eq.s32.totalorder %s30, 0
      %p412 = por %p410, %p411
      %p413 = scmp.ne.s32.totalorder %s402, %s405
      %p414 = scmp.eq.s32.totalorder %s35, 1
      %p415 = por %p413, %p414
      %p416 = scmp.ne.s32.totalorder %s405, %s406
      %p417 = scmp.eq.s32.totalorder %s35, 0
      %p418 = por %p416, %p417
      %p419 = scmp.ne.s32.totalorder %s405, %s406
      %p420 = scmp.eq.s32.totalorder %s36, 1
      %p421 = por %p419, %p420
      %p423 = scmp.ne.s32.totalorder %s406, %s422
      %p424 = scmp.eq.s32.totalorder %s36, 0
      %p425 = por %p423, %p424
      %p426 = scmp.le.s32.totalorder 1, %s30
      %p427 = scmp.lt.s32.totalorder %s30, 3
      %p428 = pnand %p426, %p427
      %p429 = pneg %p428
      // Predicated region
      $region9: #{tpu_custom_call.1} parent=5 // pred_check
        _
      $region10: #{tpu_custom_call.1} parent=5 // pred_check_branch
        %431 = sbr.rel (%p428) target = $region12
      $region11: #{tpu_custom_call.1} parent=5 // pred_region
        %s432 = ssub.s32 %s30, 1
        // Predicated region
        $region13: #{tpu_custom_call.1} parent=11 // pred_check
          %p433 = pneg %p77
        $region14: #{tpu_custom_call.1} parent=11 // pred_check_branch
          %435 = sbr.rel (%p433) target = $region16
        $region15: #{tpu_custom_call.1} parent=11 // pred_region
          _
        $region16: #{tpu_custom_call.1} parent=11 // pred_fallthru
          _
        // Predicated region
        $region17: #{tpu_custom_call.1} parent=11 // pred_check
          %p436 = pneg %p98
        $region18: #{tpu_custom_call.1} parent=11 // pred_check_branch
          %438 = sbr.rel (%p436) target = $region20
        $region19: #{tpu_custom_call.1} parent=11 // pred_region
          %s440 = ssub.s32 16, 16
          %441 = vsyncadd [#allocation5], %s440
          %s443 = sshll.u32 [#allocation4], 4
          %s444 = int_to_ptr.vmem [resolvable:$true] %s443
          %446 = dma.hbm_to_vmem [thread:$0]  %s2, 16, %s444, [#allocation5]
        $region20: #{tpu_custom_call.1} parent=11 // pred_fallthru
          _
        // Predicated region
        $region21: #{tpu_custom_call.1} parent=11 // pred_check
          %p447 = pneg %p119
        $region22: #{tpu_custom_call.1} parent=11 // pred_check_branch
          %449 = sbr.rel (%p447) target = $region24
        $region23: #{tpu_custom_call.1} parent=11 // pred_region
          _
        $region24: #{tpu_custom_call.1} parent=11 // pred_fallthru
          _
        // Predicated region
        $region25: #{tpu_custom_call.1} parent=11 // pred_check
          %p450 = pneg %p140
        $region26: #{tpu_custom_call.1} parent=11 // pred_check_branch
          %452 = sbr.rel (%p450) target = $region28
        $region27: #{tpu_custom_call.1} parent=11 // pred_region
          %s454 = ssub.s32 16, 16
          %455 = vsyncadd [#allocation8], %s454
          %s457 = sshll.u32 [#allocation7], 4
          %s458 = int_to_ptr.vmem [resolvable:$true] %s457
          %460 = dma.hbm_to_vmem [thread:$0]  %s4, 16, %s458, [#allocation8]
        $region28: #{tpu_custom_call.1} parent=11 // pred_fallthru
          _
        // Predicated region
        $region29: #{tpu_custom_call.1} parent=11 // pred_check
          %p461 = pneg %p161
        $region30: #{tpu_custom_call.1} parent=11 // pred_check_branch
          %463 = sbr.rel (%p461) target = $region32
        $region31: #{tpu_custom_call.1} parent=11 // pred_region
          %s465 = ssub.s32 112, 112
          %466 = vsyncadd [#allocation8], %s465
          %s467 = sshll.u32 [#allocation9], 4
          %s468 = int_to_ptr.vmem [resolvable:$true] %s467
          %473 = dma.hbm_to_vmem [thread:$0]  %s5, 112, %s468, [#allocation8], 16, 16, 1
        $region32: #{tpu_custom_call.1} parent=11 // pred_fallthru
          _
        // Predicated region
        $region33: #{tpu_custom_call.1} parent=11 // pred_check
          %p474 = pneg %p182
        $region34: #{tpu_custom_call.1} parent=11 // pred_check_branch
          %476 = sbr.rel (%p474) target = $region36
        $region35: #{tpu_custom_call.1} parent=11 // pred_region
          %s478 = ssub.s32 16, 16
          %479 = vsyncadd [#allocation11], %s478
          %s481 = sshll.u32 [#allocation10], 4
          %s482 = int_to_ptr.vmem [resolvable:$true] %s481
          %484 = dma.hbm_to_vmem [thread:$0]  %s6, 16, %s482, [#allocation11]
        $region36: #{tpu_custom_call.1} parent=11 // pred_fallthru
          _
        // Predicated region
        $region37: #{tpu_custom_call.1} parent=11 // pred_check
          %p485 = pneg %p203
        $region38: #{tpu_custom_call.1} parent=11 // pred_check_branch
          %487 = sbr.rel (%p485) target = $region40
        $region39: #{tpu_custom_call.1} parent=11 // pred_region
          _
        $region40: #{tpu_custom_call.1} parent=11 // pred_fallthru
          _
        // Predicated region
        $region41: #{tpu_custom_call.1} parent=11 // pred_check
          %p488 = pneg %p224
        $region42: #{tpu_custom_call.1} parent=11 // pred_check_branch
          %490 = sbr.rel (%p488) target = $region44
        $region43: #{tpu_custom_call.1} parent=11 // pred_region
          %s492 = ssub.s32 16, 16
          %493 = vsyncadd [#allocation11], %s492
          %s495 = sshll.u32 [#allocation12], 4
          %s496 = int_to_ptr.vmem [resolvable:$true] %s495
          %498 = dma.hbm_to_vmem [thread:$0]  %s8, 16, %s496, [#allocation11]
        $region44: #{tpu_custom_call.1} parent=11 // pred_fallthru
          _
        // Predicated region
        $region45: #{tpu_custom_call.1} parent=11 // pred_check
          %p499 = pneg %p245
        $region46: #{tpu_custom_call.1} parent=11 // pred_check_branch
          %501 = sbr.rel (%p499) target = $region48
        $region47: #{tpu_custom_call.1} parent=11 // pred_region
          _
        $region48: #{tpu_custom_call.1} parent=11 // pred_fallthru
          _
        // Predicated region
        $region49: #{tpu_custom_call.1} parent=11 // pred_check
          %p502 = pneg %p266
        $region50: #{tpu_custom_call.1} parent=11 // pred_check_branch
          %504 = sbr.rel (%p502) target = $region52
        $region51: #{tpu_custom_call.1} parent=11 // pred_region
          %s506 = ssub.s32 16, 16
          %507 = vsyncadd [#allocation14], %s506
          %s509 = sshll.u32 [#allocation13], 4
          %s510 = int_to_ptr.vmem [resolvable:$true] %s509
          %512 = dma.hbm_to_vmem [thread:$0]  %s10, 16, %s510, [#allocation14]
        $region52: #{tpu_custom_call.1} parent=11 // pred_fallthru
          _
        // Predicated region
        $region53: #{tpu_custom_call.1} parent=11 // pred_check
          %p513 = pneg %p287
        $region54: #{tpu_custom_call.1} parent=11 // pred_check_branch
          %515 = sbr.rel (%p513) target = $region56
        $region55: #{tpu_custom_call.1} parent=11 // pred_region
          _
        $region56: #{tpu_custom_call.1} parent=11 // pred_fallthru
          _
        // Predicated region
        $region57: #{tpu_custom_call.1} parent=11 // pred_check
          %p516 = pneg %p308
        $region58: #{tpu_custom_call.1} parent=11 // pred_check_branch
          %518 = sbr.rel (%p516) target = $region60
        $region59: #{tpu_custom_call.1} parent=11 // pred_region
          _
        $region60: #{tpu_custom_call.1} parent=11 // pred_fallthru
          _
        // Predicated region
        $region61: #{tpu_custom_call.1} parent=11 // pred_check
          %p519 = pneg %p329
        $region62: #{tpu_custom_call.1} parent=11 // pred_check_branch
          %521 = sbr.rel (%p519) target = $region64
        $region63: #{tpu_custom_call.1} parent=11 // pred_region
          _
        $region64: #{tpu_custom_call.1} parent=11 // pred_fallthru
          _
        // Predicated region
        $region65: #{tpu_custom_call.1} parent=11 // pred_check
          %p522 = pneg %p350
        $region66: #{tpu_custom_call.1} parent=11 // pred_check_branch
          %524 = sbr.rel (%p522) target = $region68
        $region67: #{tpu_custom_call.1} parent=11 // pred_region
          _
        $region68: #{tpu_custom_call.1} parent=11 // pred_fallthru
          _
        // Predicated region
        $region69: #{tpu_custom_call.1} parent=11 // pred_check
          %p525 = pneg %p371
        $region70: #{tpu_custom_call.1} parent=11 // pred_check_branch
          %527 = sbr.rel (%p525) target = $region72
        $region71: #{tpu_custom_call.1} parent=11 // pred_region
          _
        $region72: #{tpu_custom_call.1} parent=11 // pred_fallthru
          _
        // Predicated region
        $region73: #{tpu_custom_call.1} parent=11 // pred_check
          %p528 = pneg %p392
        $region74: #{tpu_custom_call.1} parent=11 // pred_check_branch
          %530 = sbr.rel (%p528) target = $region76
        $region75: #{tpu_custom_call.1} parent=11 // pred_region
          _
        $region76: #{tpu_custom_call.1} parent=11 // pred_fallthru
          _
      $region12: #{tpu_custom_call.1} parent=5 // pred_fallthru
        _
      %p531 = scmp.lt.s32.totalorder %s30, 2
      // Predicated region
      $region77: #{tpu_custom_call.1} parent=5 // pred_check
        %p532 = pneg %p531
      $region78: #{tpu_custom_call.1} parent=5 // pred_check_branch
        %534 = sbr.rel (%p532) target = $region80
      $region79: #{tpu_custom_call.1} parent=5 // pred_region
        // Predicated region
        $region81: #{tpu_custom_call.1} parent=79 // pred_check
          %p535 = pneg %p50
        $region82: #{tpu_custom_call.1} parent=79 // pred_check_branch
          %537 = sbr.rel (%p535) target = $region84
        $region83: #{tpu_custom_call.1} parent=79 // pred_region
          %p538 = scmp.lt.s32.totalorder %s30, 1
          %s539 = scalar_select %p538, %s30, 1
          %s540 = smul.addr %s539, 2
          %s541 = smul.addr %s540, 8
          %s542 = scalar_lea.vmem %s0, %s541
        $region84: #{tpu_custom_call.1} parent=79 // pred_fallthru
          _
      $region80: #{tpu_custom_call.1} parent=5 // pred_fallthru
        _
      %p543 = scmp.le.s32.totalorder 1, %s30
      %p544 = scmp.lt.s32.totalorder %s30, 3
      %p545 = pnand %p543, %p544
      %p546 = pneg %p545
      // Predicated region
      $region85: #{tpu_custom_call.1} parent=5 // pred_check
        _
      $region86: #{tpu_custom_call.1} parent=5 // pred_check_branch
        %548 = sbr.rel (%p545) target = $region88
      $region87: #{tpu_custom_call.1} parent=5 // pred_region
        %s549 = ssub.s32 %s30, 1
        // Predicated region
        $region89: #{tpu_custom_call.1} parent=87 // pred_check
          %p550 = pneg %p98
        $region90: #{tpu_custom_call.1} parent=87 // pred_check_branch
          %552 = sbr.rel (%p550) target = $region92
        $region91: #{tpu_custom_call.1} parent=87 // pred_region
          %553 = dma.done [#allocation5], 16
        $region92: #{tpu_custom_call.1} parent=87 // pred_fallthru
          _
        // Predicated region
        $region93: #{tpu_custom_call.1} parent=87 // pred_check
          %p554 = pneg %p140
        $region94: #{tpu_custom_call.1} parent=87 // pred_check_branch
          %556 = sbr.rel (%p554) target = $region96
        $region95: #{tpu_custom_call.1} parent=87 // pred_region
          %557 = dma.done [#allocation8], 16
        $region96: #{tpu_custom_call.1} parent=87 // pred_fallthru
          _
        // Predicated region
        $region97: #{tpu_custom_call.1} parent=87 // pred_check
          %p558 = pneg %p161
        $region98: #{tpu_custom_call.1} parent=87 // pred_check_branch
          %560 = sbr.rel (%p558) target = $region100
        $region99: #{tpu_custom_call.1} parent=87 // pred_region
          %561 = dma.done [#allocation8], 112
        $region100: #{tpu_custom_call.1} parent=87 // pred_fallthru
          _
        // Predicated region
        $region101: #{tpu_custom_call.1} parent=87 // pred_check
          %p562 = pneg %p182
        $region102: #{tpu_custom_call.1} parent=87 // pred_check_branch
          %564 = sbr.rel (%p562) target = $region104
        $region103: #{tpu_custom_call.1} parent=87 // pred_region
          %565 = dma.done [#allocation11], 16
        $region104: #{tpu_custom_call.1} parent=87 // pred_fallthru
          _
        // Predicated region
        $region105: #{tpu_custom_call.1} parent=87 // pred_check
          %p566 = pneg %p224
        $region106: #{tpu_custom_call.1} parent=87 // pred_check_branch
          %568 = sbr.rel (%p566) target = $region108
        $region107: #{tpu_custom_call.1} parent=87 // pred_region
          %569 = dma.done [#allocation11], 16
        $region108: #{tpu_custom_call.1} parent=87 // pred_fallthru
          _
        // Predicated region
        $region109: #{tpu_custom_call.1} parent=87 // pred_check
          %p570 = pneg %p266
        $region110: #{tpu_custom_call.1} parent=87 // pred_check_branch
          %572 = sbr.rel (%p570) target = $region112
        $region111: #{tpu_custom_call.1} parent=87 // pred_region
          %573 = dma.done [#allocation14], 16
        $region112: #{tpu_custom_call.1} parent=87 // pred_fallthru
          _
        %p574 = scmp.lt.s32.totalorder %s35, 1
        %s575 = scalar_select %p574, %s35, 1
        %s576 = smul.addr %s575, 2
        %s577 = smul.addr %s576, 8
        %s578 = scalar_lea.vmem %s0, %s577
        %p579 = pneg %p56
        %p580 = pneg %p53
        %p581 = pneg %p77
        %p582 = pneg %p74
        %p583 = pneg %p98
        %p584 = pneg %p95
        %p585 = pneg %p119
        %p586 = pneg %p116
        %p587 = pneg %p140
        %p588 = pneg %p137
        %p589 = pneg %p161
        %p590 = pneg %p158
        %p591 = pneg %p182
        %p592 = pneg %p179
        %p593 = pneg %p203
        %p594 = pneg %p200
        %p595 = pneg %p224
        %p596 = pneg %p221
        %p597 = pneg %p245
        %p598 = pneg %p242
        %p599 = pneg %p266
        %p600 = pneg %p263
        %p601 = pneg %p287
        %p602 = pneg %p284
        %p603 = pneg %p308
        %p604 = pneg %p305
        %p605 = pneg %p329
        %p606 = pneg %p326
        %p607 = pneg %p350
        %p608 = pneg %p347
        %p609 = pneg %p371
        %p610 = pneg %p368
        %p611 = pneg %p392
        %p612 = pneg %p389
        %p613 = pneg %p418
        %p614 = pneg %p415
        %s615 = sand.u32 %s405, 1
        %s616 = scalar_lea.sflag [#allocation6], %s615
        %s617 = sand.u32 %s405, 1
        %s618 = smul.addr %s617, 16
        %s619 = scalar_lea.vmem [#allocation15], %s618
        %p620 = scmp.lt.s32.totalorder %s35, 1
        %s621 = scalar_select %p620, %s35, 1
        %s622 = smul.addr %s621, 2
        %s623 = smul.addr %s622, 8
        %s624 = scalar_lea.vmem %s0, %s623
        %625 = vst [vmem:[#allocation2] sm:$0xff] 0.0
        %626 = vst [vmem:[#allocation2 + $0x18] sm:$0xff] 0.0
        %627 = vst [vmem:[#allocation2 + $0x30] sm:$0xff] 0.0
        %628 = vst [vmem:[#allocation2 + $0x48] sm:$0x3] 0.0
        %629 = vst [vmem:[#allocation2 + $0x10] sm:$0xff] 0.0
        %630 = vst [vmem:[#allocation2 + $0x28] sm:$0xff] 0.0
        %631 = vst [vmem:[#allocation2 + $0x40] sm:$0xff] 0.0
        %632 = vst [vmem:[#allocation2 + $0x58] sm:$0x3] 0.0
        %633 = vst [vmem:[#allocation2 + $0x8] sm:$0xff] 0.0
        %634 = vst [vmem:[#allocation2 + $0x50] sm:$0x3] 0.0
        %635 = vst [vmem:[#allocation3] sm:$0xff] 0.0
        %636 = vst [vmem:[#allocation3 + $0x8] sm:$0xff] 0.0
        %637 = vst [vmem:[#allocation3 + $0x20] sm:$0xff] 0.0
        %638 = vst [vmem:[#allocation3 + $0x28] sm:$0x3] 0.0
        %v639 = vlaneseq
        %v640 = vand.u32 %v639, 127
        %vm641 = vcmp.lt.s32.totalorder %v640, 64
        %v642 = vld [vmem:[%s624] sm:$0xff]
        %v643 = vld [vmem:[%s624 + $0x8] sm:$0xff]
        %644 = vst [vmem:[#allocation2 + $0x20] sm:$0xff] %v642
        %645 = vst [vmem:[#allocation2 + $0x38] sm:$0xff] %v643
        %v646 = vld [vmem:[%s1] sm:$0x1]
        %v647 = vld [vmem:[#allocation2] sm:$0xc0]
        %v648 = vld [vmem:[#allocation2 + $0x8] sm:$0xc0]
        %v649 = vld [vmem:[#allocation2 + $0x18] sm:$0xff]
        %v650 = vld [vmem:[#allocation2 + $0x20] sm:$0xff]
        %v651 = vld [vmem:[#allocation2 + $0x30] sm:$0x3f]
        %v652 = vld [vmem:[#allocation2 + $0x38] sm:$0x3f]
        %v653 = vlaneseq
        %v654 = vshrl.u32 %v653, 7
        %v655 = vsub.s32 0, %v654
        %v656 = vrot.slane %v646, %v655
        %vm663 = vcmask 1041408
        %v664 = vrot.slane %v647, 6
        %v665 = vrot.slane %v649, 6
        %v666 = vsel %vm663, %v664, %v665
        %v667 = vrot.slane %v648, 6
        %v668 = vrot.slane %v650, 6
        %v669 = vsel %vm663, %v667, %v668
        %v670 = vrot.slane %v651, 6
        %v671 = vsel %vm663, %v665, %v670
        %v672 = vrot.slane %v652, 6
        %v673 = vsel %vm663, %v668, %v672
        %674 = vrot.lane.b32.xlu0 %v666, 8
        %v675 = vpop.permute.xlu0 %674
        %676 = vrot.lane.b32.xlu0 %v669, 8
        %v677 = vpop.permute.xlu0 %676
        %678 = vrot.lane.b32.xlu0 %v671, 8
        %v679 = vpop.permute.xlu0 %678
        %680 = vrot.lane.b32.xlu0 %v673, 8
        %v681 = vpop.permute.xlu0 %680
        %vm682 = vcmask 64512
        %v683 = vsel %vm682, %v675, %v677
        %v684 = vsel %vm682, %v679, %v681
        %v687 = vmul.f32 %v656, %v683
        %v688 = vmul.f32 %v656, %v684
        %v689 = vld [vmem:[%s1 + $0x1] sm:$0x1]
        %v690 = vlaneseq
        %v691 = vshrl.u32 %v690, 7
        %v692 = vsub.s32 0, %v691
        %v693 = vrot.slane %v689, %v692
        %694 = vrot.lane.b32.xlu0 %v666, 4
        %v695 = vpop.permute.xlu0 %694
        %696 = vrot.lane.b32.xlu0 %v669, 4
        %v697 = vpop.permute.xlu0 %696
        %698 = vrot.lane.b32.xlu0 %v671, 4
        %v699 = vpop.permute.xlu0 %698
        %700 = vrot.lane.b32.xlu0 %v673, 4
        %v701 = vpop.permute.xlu0 %700
        %vm702 = vcmask 31744
        %v703 = vsel %vm702, %v695, %v697
        %v704 = vsel %vm702, %v699, %v701
        %v707 = vmul.f32 %v693, %v703
        %v708 = vmul.f32 %v693, %v704
        %v709 = vld [vmem:[%s1 + $0x2] sm:$0x1]
        %v710 = vlaneseq
        %v711 = vshrl.u32 %v710, 7
        %v712 = vsub.s32 0, %v711
        %v713 = vrot.slane %v709, %v712
        %v714 = vmul.f32 %v713, %v648
        %v715 = vmul.f32 %v713, %v650
        %v716 = vmul.f32 %v713, %v652
        %v717 = vld [vmem:[%s1 + $0x3] sm:$0x1]
        %v718 = vld [vmem:[#allocation2 + $0x10] sm:$0xc0]
        %v719 = vld [vmem:[#allocation2 + $0x28] sm:$0xff]
        %v720 = vld [vmem:[#allocation2 + $0x40] sm:$0x3f]
        %v721 = vlaneseq
        %v722 = vshrl.u32 %v721, 7
        %v723 = vsub.s32 0, %v722
        %v724 = vrot.slane %v717, %v723
        %v728 = vrot.slane %v718, 6
        %v729 = vrot.slane %v719, 6
        %v730 = vsel %vm663, %v728, %v729
        %v731 = vrot.slane %v720, 6
        %v732 = vsel %vm663, %v729, %v731
        %733 = vrot.lane.b32.xlu0 %v669, 124
        %v734 = vpop.permute.xlu0 %733
        %735 = vrot.lane.b32.xlu0 %v730, 124
        %v736 = vpop.permute.xlu0 %735
        %737 = vrot.lane.b32.xlu0 %v673, 124
        %v738 = vpop.permute.xlu0 %737
        %739 = vrot.lane.b32.xlu0 %v732, 124
        %v740 = vpop.permute.xlu0 %739
        %vm741 = vcmask 1014784
        %v742 = vsel %vm741, %v734, %v736
        %v743 = vsel %vm741, %v738, %v740
        %v746 = vmul.f32 %v724, %v742
        %v747 = vmul.f32 %v724, %v743
        %v748 = vld [vmem:[%s1 + $0x4] sm:$0x1]
        %v749 = vlaneseq
        %v750 = vshrl.u32 %v749, 7
        %v751 = vsub.s32 0, %v750
        %v752 = vrot.slane %v748, %v751
        %753 = vrot.lane.b32.xlu0 %v669, 120
        %v754 = vpop.permute.xlu0 %753
        %755 = vrot.lane.b32.xlu0 %v730, 120
        %v756 = vpop.permute.xlu0 %755
        %757 = vrot.lane.b32.xlu0 %v673, 120
        %v758 = vpop.permute.xlu0 %757
        %759 = vrot.lane.b32.xlu0 %v732, 120
        %v760 = vpop.permute.xlu0 %759
        %vm761 = vcmask 982016
        %v762 = vsel %vm761, %v754, %v756
        %v763 = vsel %vm761, %v758, %v760
        %v766 = vmul.f32 %v752, %v762
        %v767 = vmul.f32 %v752, %v763
        %v768 = vadd.f32 %v687, %v766
        %v769 = vadd.f32 %v688, %v767
        %s770 = scalar_lea.vmem %s1, 8
        %v771 = vld [vmem:[%s770] sm:$0x1]
        %v772 = vld [vmem:[#allocation2] sm:$0x80]
        %v773 = vld [vmem:[#allocation2 + $0x8] sm:$0x80]
        %v774 = vld [vmem:[#allocation2 + $0x30] sm:$0x7f]
        %v775 = vld [vmem:[#allocation2 + $0x38] sm:$0x7f]
        %v776 = vlaneseq
        %v777 = vshrl.u32 %v776, 7
        %v778 = vsub.s32 0, %v777
        %v779 = vrot.slane %v771, %v778
        %vm784 = vcmask 1040384
        %v785 = vrot.slane %v772, 7
        %v786 = vrot.slane %v649, 7
        %v787 = vsel %vm784, %v785, %v786
        %v788 = vrot.slane %v773, 7
        %v789 = vrot.slane %v650, 7
        %v790 = vsel %vm784, %v788, %v789
        %v791 = vrot.slane %v774, 7
        %v792 = vsel %vm784, %v786, %v791
        %v793 = vrot.slane %v775, 7
        %v794 = vsel %vm784, %v789, %v793
        %795 = vrot.lane.b32.xlu0 %v787, 8
        %v796 = vpop.permute.xlu0 %795
        %797 = vrot.lane.b32.xlu0 %v790, 8
        %v798 = vpop.permute.xlu0 %797
        %799 = vrot.lane.b32.xlu0 %v792, 8
        %v800 = vpop.permute.xlu0 %799
        %801 = vrot.lane.b32.xlu0 %v794, 8
        %v802 = vpop.permute.xlu0 %801
        %v803 = vsel %vm682, %v796, %v798
        %v804 = vsel %vm682, %v800, %v802
        %v807 = vmul.f32 %v779, %v803
        %v808 = vmul.f32 %v779, %v804
        %v809 = vadd.f32 %v707, %v807
        %v810 = vadd.f32 %v708, %v808
        %v811 = vld [vmem:[%s770 + $0x1] sm:$0x1]
        %v812 = vlaneseq
        %v813 = vshrl.u32 %v812, 7
        %v814 = vsub.s32 0, %v813
        %v815 = vrot.slane %v811, %v814
        %816 = vrot.lane.b32.xlu0 %v787, 4
        %v817 = vpop.permute.xlu0 %816
        %818 = vrot.lane.b32.xlu0 %v790, 4
        %v819 = vpop.permute.xlu0 %818
        %820 = vrot.lane.b32.xlu0 %v792, 4
        %v821 = vpop.permute.xlu0 %820
        %822 = vrot.lane.b32.xlu0 %v794, 4
        %v823 = vpop.permute.xlu0 %822
        %v824 = vsel %vm702, %v817, %v819
        %v825 = vsel %vm702, %v821, %v823
        %v828 = vmul.f32 %v815, %v824
        %v829 = vmul.f32 %v815, %v825
        %vm832 = vcmask 1045504
        %v833 = vrot.slane %v828, 2
        %v834 = vrot.slane %v829, 2
        %v835 = vsel %vm832, %v833, %v834
        %v839 = vadd.f32 %v714, %v833
        %v840 = vadd.f32 %v715, %v835
        %v841 = vadd.f32 %v716, %v834
        %v842 = vld [vmem:[%s770 + $0x2] sm:$0x1]
        %v843 = vlaneseq
        %v844 = vshrl.u32 %v843, 7
        %v845 = vsub.s32 0, %v844
        %v846 = vrot.slane %v842, %v845
        %v847 = vmul.f32 %v846, %v773
        %v848 = vmul.f32 %v846, %v650
        %v849 = vmul.f32 %v846, %v775
        %v853 = vrot.slane %v847, 7
        %v854 = vrot.slane %v848, 7
        %v855 = vsel %vm784, %v853, %v854
        %v856 = vrot.slane %v849, 7
        %v857 = vsel %vm784, %v854, %v856
        %v860 = vadd.f32 %v746, %v855
        %v861 = vadd.f32 %v747, %v857
        %v862 = vld [vmem:[%s770 + $0x3] sm:$0x1]
        %v863 = vld [vmem:[#allocation2 + $0x10] sm:$0x80]
        %v864 = vld [vmem:[#allocation2 + $0x40] sm:$0x7f]
        %v865 = vlaneseq
        %v866 = vshrl.u32 %v865, 7
        %v867 = vsub.s32 0, %v866
        %v868 = vrot.slane %v862, %v867
        %v871 = vrot.slane %v863, 7
        %v872 = vrot.slane %v719, 7
        %v873 = vsel %vm784, %v871, %v872
        %v874 = vrot.slane %v864, 7
        %v875 = vsel %vm784, %v872, %v874
        %876 = vrot.lane.b32.xlu0 %v790, 124
        %v877 = vpop.permute.xlu0 %876
        %878 = vrot.lane.b32.xlu0 %v873, 124
        %v879 = vpop.permute.xlu0 %878
        %880 = vrot.lane.b32.xlu0 %v794, 124
        %v881 = vpop.permute.xlu0 %880
        %882 = vrot.lane.b32.xlu0 %v875, 124
        %v883 = vpop.permute.xlu0 %882
        %v884 = vsel %vm741, %v877, %v879
        %v885 = vsel %vm741, %v881, %v883
        %v888 = vmul.f32 %v868, %v884
        %v889 = vmul.f32 %v868, %v885
        %v890 = vadd.f32 %v768, %v888
        %v891 = vadd.f32 %v769, %v889
        %v892 = vld [vmem:[%s770 + $0x4] sm:$0x1]
        %v893 = vlaneseq
        %v894 = vshrl.u32 %v893, 7
        %v895 = vsub.s32 0, %v894
        %v896 = vrot.slane %v892, %v895
        %897 = vrot.lane.b32.xlu0 %v790, 120
        %v898 = vpop.permute.xlu0 %897
        %899 = vrot.lane.b32.xlu0 %v873, 120
        %v900 = vpop.permute.xlu0 %899
        %901 = vrot.lane.b32.xlu0 %v794, 120
        %v902 = vpop.permute.xlu0 %901
        %903 = vrot.lane.b32.xlu0 %v875, 120
        %v904 = vpop.permute.xlu0 %903
        %v905 = vsel %vm761, %v898, %v900
        %v906 = vsel %vm761, %v902, %v904
        %v909 = vmul.f32 %v896, %v905
        %v910 = vmul.f32 %v896, %v906
        %v911 = vadd.f32 %v809, %v909
        %v912 = vadd.f32 %v810, %v910
        %s913 = scalar_lea.vmem %s1, 16
        %v914 = vld [vmem:[%s913] sm:$0x1]
        %v915 = vld [vmem:[#allocation2 + $0x30] sm:$0xff]
        %v916 = vld [vmem:[#allocation2 + $0x38] sm:$0xff]
        %v917 = vlaneseq
        %v918 = vshrl.u32 %v917, 7
        %v919 = vsub.s32 0, %v918
        %v920 = vrot.slane %v914, %v919
        %923 = vrot.lane.b32.xlu0 %v649, 8
        %v924 = vpop.permute.xlu0 %923
        %925 = vrot.lane.b32.xlu0 %v650, 8
        %v926 = vpop.permute.xlu0 %925
        %927 = vrot.lane.b32.xlu0 %v915, 8
        %v928 = vpop.permute.xlu0 %927
        %929 = vrot.lane.b32.xlu0 %v916, 8
        %v930 = vpop.permute.xlu0 %929
        %v931 = vsel %vm682, %v924, %v926
        %v932 = vsel %vm682, %v928, %v930
        %v935 = vmul.f32 %v920, %v931
        %v936 = vmul.f32 %v920, %v932
        %v939 = vrot.slane %v935, 2
        %v940 = vrot.slane %v936, 2
        %v941 = vsel %vm832, %v939, %v940
        %v945 = vadd.f32 %v839, %v939
        %v946 = vadd.f32 %v840, %v941
        %v947 = vadd.f32 %v841, %v940
        %v948 = vld [vmem:[%s913 + $0x1] sm:$0x1]
        %v949 = vlaneseq
        %v950 = vshrl.u32 %v949, 7
        %v951 = vsub.s32 0, %v950
        %v952 = vrot.slane %v948, %v951
        %953 = vrot.lane.b32.xlu0 %v649, 4
        %v954 = vpop.permute.xlu0 %953
        %955 = vrot.lane.b32.xlu0 %v650, 4
        %v956 = vpop.permute.xlu0 %955
        %957 = vrot.lane.b32.xlu0 %v915, 4
        %v958 = vpop.permute.xlu0 %957
        %959 = vrot.lane.b32.xlu0 %v916, 4
        %v960 = vpop.permute.xlu0 %959
        %v961 = vsel %vm702, %v954, %v956
        %v962 = vsel %vm702, %v958, %v960
        %v965 = vmul.f32 %v952, %v961
        %v966 = vmul.f32 %v952, %v962
        %v967 = vadd.f32 %v860, %v965
        %v968 = vadd.f32 %v861, %v966
        %v969 = vld [vmem:[%s913 + $0x2] sm:$0x1]
        %v970 = vlaneseq
        %v971 = vshrl.u32 %v970, 7
        %v972 = vsub.s32 0, %v971
        %v973 = vrot.slane %v969, %v972
        %v974 = vmul.f32 %v973, %v650
        %v975 = vmul.f32 %v973, %v916
        %v976 = vadd.f32 %v890, %v974
        %v977 = vadd.f32 %v891, %v975
        %v978 = vld [vmem:[%s913 + $0x3] sm:$0x1]
        %v979 = vld [vmem:[#allocation2 + $0x40] sm:$0xff]
        %v980 = vlaneseq
        %v981 = vshrl.u32 %v980, 7
        %v982 = vsub.s32 0, %v981
        %v983 = vrot.slane %v978, %v982
        %985 = vrot.lane.b32.xlu0 %v650, 124
        %v986 = vpop.permute.xlu0 %985
        %987 = vrot.lane.b32.xlu0 %v719, 124
        %v988 = vpop.permute.xlu0 %987
        %989 = vrot.lane.b32.xlu0 %v916, 124
        %v990 = vpop.permute.xlu0 %989
        %991 = vrot.lane.b32.xlu0 %v979, 124
        %v992 = vpop.permute.xlu0 %991
        %v993 = vsel %vm741, %v986, %v988
        %v994 = vsel %vm741, %v990, %v992
        %v997 = vmul.f32 %v983, %v993
        %v998 = vmul.f32 %v983, %v994
        %v999 = vadd.f32 %v911, %v997
        %v1000 = vadd.f32 %v912, %v998
        %v1001 = vld [vmem:[%s913 + $0x4] sm:$0x1]
        %v1002 = vlaneseq
        %v1003 = vshrl.u32 %v1002, 7
        %v1004 = vsub.s32 0, %v1003
        %v1005 = vrot.slane %v1001, %v1004
        %1006 = vrot.lane.b32.xlu0 %v650, 120
        %v1007 = vpop.permute.xlu0 %1006
        %1008 = vrot.lane.b32.xlu0 %v719, 120
        %v1009 = vpop.permute.xlu0 %1008
        %1010 = vrot.lane.b32.xlu0 %v916, 120
        %v1011 = vpop.permute.xlu0 %1010
        %1012 = vrot.lane.b32.xlu0 %v979, 120
        %v1013 = vpop.permute.xlu0 %1012
        %v1014 = vsel %vm761, %v1007, %v1009
        %v1015 = vsel %vm761, %v1011, %v1013
        %v1018 = vmul.f32 %v1005, %v1014
        %v1019 = vmul.f32 %v1005, %v1015
        %v1022 = vrot.slane %v1018, 2
        %v1023 = vrot.slane %v1019, 2
        %v1024 = vsel %vm832, %v1022, %v1023
        %v1028 = vadd.f32 %v945, %v1022
        %v1029 = vadd.f32 %v946, %v1024
        %v1030 = vadd.f32 %v947, %v1023
        %s1031 = scalar_lea.vmem %s1, 24
        %v1032 = vld [vmem:[%s1031] sm:$0x1]
        %v1033 = vld [vmem:[#allocation2 + $0x18] sm:$0xfe]
        %v1034 = vld [vmem:[#allocation2 + $0x20] sm:$0xfe]
        %v1035 = vld [vmem:[#allocation2 + $0x48] sm:$0x1]
        %v1036 = vld [vmem:[#allocation2 + $0x50] sm:$0x1]
        %v1037 = vlaneseq
        %v1038 = vshrl.u32 %v1037, 7
        %v1039 = vsub.s32 0, %v1038
        %v1040 = vrot.slane %v1032, %v1039
        %vm1045 = vcmask 1046528
        %v1046 = vrot.slane %v1033, 1
        %v1047 = vrot.slane %v915, 1
        %v1048 = vsel %vm1045, %v1046, %v1047
        %v1049 = vrot.slane %v1034, 1
        %v1050 = vrot.slane %v916, 1
        %v1051 = vsel %vm1045, %v1049, %v1050
        %v1052 = vrot.slane %v1035, 1
        %v1053 = vsel %vm1045, %v1047, %v1052
        %v1054 = vrot.slane %v1036, 1
        %v1055 = vsel %vm1045, %v1050, %v1054
        %1056 = vrot.lane.b32.xlu0 %v1048, 8
        %v1057 = vpop.permute.xlu0 %1056
        %1058 = vrot.lane.b32.xlu0 %v1051, 8
        %v1059 = vpop.permute.xlu0 %1058
        %1060 = vrot.lane.b32.xlu0 %v1053, 8
        %v1061 = vpop.permute.xlu0 %1060
        %1062 = vrot.lane.b32.xlu0 %v1055, 8
        %v1063 = vpop.permute.xlu0 %1062
        %v1064 = vsel %vm682, %v1057, %v1059
        %v1065 = vsel %vm682, %v1061, %v1063
        %v1068 = vmul.f32 %v1040, %v1064
        %v1069 = vmul.f32 %v1040, %v1065
        %v1070 = vadd.f32 %v967, %v1068
        %v1071 = vadd.f32 %v968, %v1069
        %v1072 = vld [vmem:[%s1031 + $0x1] sm:$0x1]
        %v1073 = vlaneseq
        %v1074 = vshrl.u32 %v1073, 7
        %v1075 = vsub.s32 0, %v1074
        %v1076 = vrot.slane %v1072, %v1075
        %1077 = vrot.lane.b32.xlu0 %v1048, 4
        %v1078 = vpop.permute.xlu0 %1077
        %1079 = vrot.lane.b32.xlu0 %v1051, 4
        %v1080 = vpop.permute.xlu0 %1079
        %1081 = vrot.lane.b32.xlu0 %v1053, 4
        %v1082 = vpop.permute.xlu0 %1081
        %1083 = vrot.lane.b32.xlu0 %v1055, 4
        %v1084 = vpop.permute.xlu0 %1083
        %v1085 = vsel %vm702, %v1078, %v1080
        %v1086 = vsel %vm702, %v1082, %v1084
        %v1089 = vmul.f32 %v1076, %v1085
        %v1090 = vmul.f32 %v1076, %v1086
        %v1091 = vadd.f32 %v976, %v1089
        %v1092 = vadd.f32 %v977, %v1090
        %v1093 = vld [vmem:[%s1031 + $0x2] sm:$0x1]
        %v1094 = vlaneseq
        %v1095 = vshrl.u32 %v1094, 7
        %v1096 = vsub.s32 0, %v1095
        %v1097 = vrot.slane %v1093, %v1096
        %v1098 = vmul.f32 %v1097, %v1034
        %v1099 = vmul.f32 %v1097, %v916
        %v1100 = vmul.f32 %v1097, %v1036
        %v1104 = vrot.slane %v1098, 1
        %v1105 = vrot.slane %v1099, 1
        %v1106 = vsel %vm1045, %v1104, %v1105
        %v1107 = vrot.slane %v1100, 1
        %v1108 = vsel %vm1045, %v1105, %v1107
        %v1111 = vadd.f32 %v999, %v1106
        %v1112 = vadd.f32 %v1000, %v1108
        %v1113 = vld [vmem:[%s1031 + $0x3] sm:$0x1]
        %v1114 = vld [vmem:[#allocation2 + $0x28] sm:$0xfe]
        %v1115 = vld [vmem:[#allocation2 + $0x58] sm:$0x1]
        %v1116 = vlaneseq
        %v1117 = vshrl.u32 %v1116, 7
        %v1118 = vsub.s32 0, %v1117
        %v1119 = vrot.slane %v1113, %v1118
        %v1122 = vrot.slane %v1114, 1
        %v1123 = vrot.slane %v979, 1
        %v1124 = vsel %vm1045, %v1122, %v1123
        %v1125 = vrot.slane %v1115, 1
        %v1126 = vsel %vm1045, %v1123, %v1125
        %1127 = vrot.lane.b32.xlu0 %v1051, 124
        %v1128 = vpop.permute.xlu0 %1127
        %1129 = vrot.lane.b32.xlu0 %v1124, 124
        %v1130 = vpop.permute.xlu0 %1129
        %1131 = vrot.lane.b32.xlu0 %v1055, 124
        %v1132 = vpop.permute.xlu0 %1131
        %1133 = vrot.lane.b32.xlu0 %v1126, 124
        %v1134 = vpop.permute.xlu0 %1133
        %v1135 = vsel %vm741, %v1128, %v1130
        %v1136 = vsel %vm741, %v1132, %v1134
        %v1139 = vmul.f32 %v1119, %v1135
        %v1140 = vmul.f32 %v1119, %v1136
        %v1143 = vrot.slane %v1139, 2
        %v1144 = vrot.slane %v1140, 2
        %v1145 = vsel %vm832, %v1143, %v1144
        %v1149 = vadd.f32 %v1028, %v1143
        %v1150 = vadd.f32 %v1029, %v1145
        %v1151 = vadd.f32 %v1030, %v1144
        %v1152 = vld [vmem:[%s1031 + $0x4] sm:$0x1]
        %v1153 = vlaneseq
        %v1154 = vshrl.u32 %v1153, 7
        %v1155 = vsub.s32 0, %v1154
        %v1156 = vrot.slane %v1152, %v1155
        %1157 = vrot.lane.b32.xlu0 %v1051, 120
        %v1158 = vpop.permute.xlu0 %1157
        %1159 = vrot.lane.b32.xlu0 %v1124, 120
        %v1160 = vpop.permute.xlu0 %1159
        %1161 = vrot.lane.b32.xlu0 %v1055, 120
        %v1162 = vpop.permute.xlu0 %1161
        %1163 = vrot.lane.b32.xlu0 %v1126, 120
        %v1164 = vpop.permute.xlu0 %1163
        %v1165 = vsel %vm761, %v1158, %v1160
        %v1166 = vsel %vm761, %v1162, %v1164
        %v1169 = vmul.f32 %v1156, %v1165
        %v1170 = vmul.f32 %v1156, %v1166
        %v1171 = vadd.f32 %v1070, %v1169
        %v1172 = vadd.f32 %v1071, %v1170
        %s1173 = scalar_lea.vmem %s1, 32
        %v1174 = vld [vmem:[%s1173] sm:$0x1]
        %v1175 = vld [vmem:[#allocation2 + $0x18] sm:$0xfc]
        %v1176 = vld [vmem:[#allocation2 + $0x20] sm:$0xfc]
        %v1177 = vld [vmem:[#allocation2 + $0x48] sm:$0x3]
        %v1178 = vld [vmem:[#allocation2 + $0x50] sm:$0x3]
        %v1179 = vlaneseq
        %v1180 = vshrl.u32 %v1179, 7
        %v1181 = vsub.s32 0, %v1180
        %v1182 = vrot.slane %v1174, %v1181
        %v1187 = vrot.slane %v1175, 2
        %v1188 = vrot.slane %v915, 2
        %v1189 = vsel %vm832, %v1187, %v1188
        %v1190 = vrot.slane %v1176, 2
        %v1191 = vrot.slane %v916, 2
        %v1192 = vsel %vm832, %v1190, %v1191
        %v1193 = vrot.slane %v1177, 2
        %v1194 = vsel %vm832, %v1188, %v1193
        %v1195 = vrot.slane %v1178, 2
        %v1196 = vsel %vm832, %v1191, %v1195
        %1197 = vrot.lane.b32.xlu0 %v1189, 8
        %v1198 = vpop.permute.xlu0 %1197
        %1199 = vrot.lane.b32.xlu0 %v1192, 8
        %v1200 = vpop.permute.xlu0 %1199
        %1201 = vrot.lane.b32.xlu0 %v1194, 8
        %v1202 = vpop.permute.xlu0 %1201
        %1203 = vrot.lane.b32.xlu0 %v1196, 8
        %v1204 = vpop.permute.xlu0 %1203
        %v1205 = vsel %vm682, %v1198, %v1200
        %v1206 = vsel %vm682, %v1202, %v1204
        %v1209 = vmul.f32 %v1182, %v1205
        %v1210 = vmul.f32 %v1182, %v1206
        %v1211 = vadd.f32 %v1091, %v1209
        %v1212 = vadd.f32 %v1092, %v1210
        %v1213 = vld [vmem:[%s1173 + $0x1] sm:$0x1]
        %v1214 = vlaneseq
        %v1215 = vshrl.u32 %v1214, 7
        %v1216 = vsub.s32 0, %v1215
        %v1217 = vrot.slane %v1213, %v1216
        %1218 = vrot.lane.b32.xlu0 %v1189, 4
        %v1219 = vpop.permute.xlu0 %1218
        %1220 = vrot.lane.b32.xlu0 %v1192, 4
        %v1221 = vpop.permute.xlu0 %1220
        %1222 = vrot.lane.b32.xlu0 %v1194, 4
        %v1223 = vpop.permute.xlu0 %1222
        %1224 = vrot.lane.b32.xlu0 %v1196, 4
        %v1225 = vpop.permute.xlu0 %1224
        %v1226 = vsel %vm702, %v1219, %v1221
        %v1227 = vsel %vm702, %v1223, %v1225
        %v1230 = vmul.f32 %v1217, %v1226
        %v1231 = vmul.f32 %v1217, %v1227
        %v1232 = vadd.f32 %v1111, %v1230
        %v1233 = vadd.f32 %v1112, %v1231
        %v1234 = vld [vmem:[%s1173 + $0x2] sm:$0x1]
        %v1235 = vlaneseq
        %v1236 = vshrl.u32 %v1235, 7
        %v1237 = vsub.s32 0, %v1236
        %v1238 = vrot.slane %v1234, %v1237
        %v1239 = vmul.f32 %v1238, %v1176
        %v1240 = vmul.f32 %v1238, %v916
        %v1241 = vmul.f32 %v1238, %v1178
        %vm1245 = vcmask 1043456
        %v1246 = vrot.slane %v1239, 4
        %v1247 = vrot.slane %v1240, 4
        %v1248 = vsel %vm1245, %v1246, %v1247
        %v1249 = vrot.slane %v1241, 4
        %v1250 = vsel %vm1245, %v1247, %v1249
        %v1254 = vadd.f32 %v1149, %v1246
        %v1255 = vadd.f32 %v1150, %v1248
        %v1256 = vadd.f32 %v1151, %v1250
        %v1257 = vld [vmem:[%s1173 + $0x3] sm:$0x1]
        %v1258 = vld [vmem:[#allocation2 + $0x28] sm:$0xfc]
        %v1259 = vld [vmem:[#allocation2 + $0x58] sm:$0x3]
        %v1260 = vlaneseq
        %v1261 = vshrl.u32 %v1260, 7
        %v1262 = vsub.s32 0, %v1261
        %v1263 = vrot.slane %v1257, %v1262
        %v1266 = vrot.slane %v1258, 2
        %v1267 = vrot.slane %v979, 2
        %v1268 = vsel %vm832, %v1266, %v1267
        %v1269 = vrot.slane %v1259, 2
        %v1270 = vsel %vm832, %v1267, %v1269
        %1271 = vrot.lane.b32.xlu0 %v1192, 124
        %v1272 = vpop.permute.xlu0 %1271
        %1273 = vrot.lane.b32.xlu0 %v1268, 124
        %v1274 = vpop.permute.xlu0 %1273
        %1275 = vrot.lane.b32.xlu0 %v1196, 124
        %v1276 = vpop.permute.xlu0 %1275
        %1277 = vrot.lane.b32.xlu0 %v1270, 124
        %v1278 = vpop.permute.xlu0 %1277
        %v1279 = vsel %vm741, %v1272, %v1274
        %v1280 = vsel %vm741, %v1276, %v1278
        %v1283 = vmul.f32 %v1263, %v1279
        %v1284 = vmul.f32 %v1263, %v1280
        %v1285 = vadd.f32 %v1171, %v1283
        %v1286 = vadd.f32 %v1172, %v1284
        %v1287 = vld [vmem:[%s1173 + $0x4] sm:$0x1]
        %v1288 = vlaneseq
        %v1289 = vshrl.u32 %v1288, 7
        %v1290 = vsub.s32 0, %v1289
        %v1291 = vrot.slane %v1287, %v1290
        %1292 = vrot.lane.b32.xlu0 %v1192, 120
        %v1293 = vpop.permute.xlu0 %1292
        %1294 = vrot.lane.b32.xlu0 %v1268, 120
        %v1295 = vpop.permute.xlu0 %1294
        %1296 = vrot.lane.b32.xlu0 %v1196, 120
        %v1297 = vpop.permute.xlu0 %1296
        %1298 = vrot.lane.b32.xlu0 %v1270, 120
        %v1299 = vpop.permute.xlu0 %1298
        %v1300 = vsel %vm761, %v1293, %v1295
        %v1301 = vsel %vm761, %v1297, %v1299
        %v1304 = vmul.f32 %v1291, %v1300
        %v1305 = vmul.f32 %v1291, %v1301
        %v1306 = vadd.f32 %v1211, %v1304
        %v1307 = vadd.f32 %v1212, %v1305
        %v1308 = vadd.f32 %v1306, %v1232
        %v1309 = vadd.f32 %v1307, %v1233
        %v1312 = vrot.slane %v1285, 2
        %v1313 = vrot.slane %v1286, 2
        %v1314 = vsel %vm832, %v1312, %v1313
        %v1318 = vadd.f32 %v1254, %v1312
        %v1319 = vadd.f32 %v1255, %v1314
        %v1320 = vadd.f32 %v1256, %v1313
        %v1324 = vrot.slane %v1318, 6
        %v1325 = vrot.slane %v1319, 6
        %v1326 = vsel %vm663, %v1324, %v1325
        %v1327 = vrot.slane %v1320, 6
        %v1328 = vsel %vm663, %v1325, %v1327
        %v1331 = vadd.f32 %v1308, %v1326
        %v1332 = vadd.f32 %v1309, %v1328
        %v1333 = vld [vmem:[#allocation4] sm:$0x1]
        %v1335 = vlaneseq
        %v1336 = vshrl.u32 %v1335, 7
        %v1337 = vsub.s32 0, %v1336
        %v1338 = vrot.slane %v1333, %v1337
        %v1340 = vadd.f32 %v1331, %v1338
        %v1341 = vadd.f32 %v1332, %v1338
        %v1342 = vsel %vm641, 1, 0
        %vm1343 = vcmp.eq.s32.totalorder %v1342, 1
        %v1344 = vsel %vm1343, %v1340, 0.0
        %v1345 = vsel %vm1343, %v1341, 0.0
        %1346 = vst [vmem:[#allocation2 + $0x20] sm:$0xff] %v1344
        %1347 = vst [vmem:[#allocation2 + $0x38] sm:$0xff] %v1345
        %v1348 = vld [vmem:[#allocation2 + $0x18] sm:$0xff]
        %v1349 = vld [vmem:[#allocation2 + $0x20] sm:$0xff]
        %v1350 = vld [vmem:[#allocation2 + $0x30] sm:$0xff]
        %v1351 = vld [vmem:[#allocation2 + $0x38] sm:$0xff]
        %v1352 = vld [vmem:[%s11] sm:$0x1]
        %v1353 = vlaneseq
        %v1354 = vshrl.u32 %v1353, 7
        %v1355 = vsub.s32 0, %v1354
        %v1356 = vrot.slane %v1352, %v1355
        %1361 = vrot.lane.b32.xlu0 %v1348, 40
        %v1362 = vpop.permute.xlu0 %1361
        %1363 = vrot.lane.b32.xlu0 %v1349, 40
        %v1364 = vpop.permute.xlu0 %1363
        %1365 = vrot.lane.b32.xlu0 %v1350, 40
        %v1366 = vpop.permute.xlu0 %1365
        %1367 = vrot.lane.b32.xlu0 %v1351, 40
        %v1368 = vpop.permute.xlu0 %1367
        %vm1369 = vcmask 326656
        %v1370 = vsel %vm1369, %v1362, %v1364
        %v1371 = vsel %vm1369, %v1366, %v1368
        %v1374 = vmul.f32 %v1356, %v1370
        %v1375 = vmul.f32 %v1356, %v1371
        %v1376 = vld [vmem:[%s11 + $0x1] sm:$0x1]
        %v1377 = vlaneseq
        %v1378 = vshrl.u32 %v1377, 7
        %v1379 = vsub.s32 0, %v1378
        %v1380 = vrot.slane %v1376, %v1379
        %1381 = vrot.lane.b32.xlu0 %v1348, 36
        %v1382 = vpop.permute.xlu0 %1381
        %1383 = vrot.lane.b32.xlu0 %v1349, 36
        %v1384 = vpop.permute.xlu0 %1383
        %1385 = vrot.lane.b32.xlu0 %v1350, 36
        %v1386 = vpop.permute.xlu0 %1385
        %1387 = vrot.lane.b32.xlu0 %v1351, 36
        %v1388 = vpop.permute.xlu0 %1387
        %vm1389 = vcmask 293888
        %v1390 = vsel %vm1389, %v1382, %v1384
        %v1391 = vsel %vm1389, %v1386, %v1388
        %v1394 = vmul.f32 %v1380, %v1390
        %v1395 = vmul.f32 %v1380, %v1391
        %v1396 = vld [vmem:[%s11 + $0x2] sm:$0x1]
        %v1397 = vlaneseq
        %v1398 = vshrl.u32 %v1397, 7
        %v1399 = vsub.s32 0, %v1398
        %v1400 = vrot.slane %v1396, %v1399
        %1401 = vrot.lane.b32.xlu0 %v1348, 32
        %v1402 = vpop.permute.xlu0 %1401
        %1403 = vrot.lane.b32.xlu0 %v1349, 32
        %v1404 = vpop.permute.xlu0 %1403
        %1405 = vrot.lane.b32.xlu0 %v1350, 32
        %v1406 = vpop.permute.xlu0 %1405
        %1407 = vrot.lane.b32.xlu0 %v1351, 32
        %v1408 = vpop.permute.xlu0 %1407
        %vm1409 = vcmask 261120
        %v1410 = vsel %vm1409, %v1402, %v1404
        %v1411 = vsel %vm1409, %v1406, %v1408
        %v1414 = vmul.f32 %v1400, %v1410
        %v1415 = vmul.f32 %v1400, %v1411
        %v1416 = vadd.f32 %v1374, %v1414
        %v1417 = vadd.f32 %v1375, %v1415
        %v1418 = vld [vmem:[%s11 + $0x3] sm:$0x1]
        %v1419 = vlaneseq
        %v1420 = vshrl.u32 %v1419, 7
        %v1421 = vsub.s32 0, %v1420
        %v1422 = vrot.slane %v1418, %v1421
        %1423 = vrot.lane.b32.xlu0 %v1348, 28
        %v1424 = vpop.permute.xlu0 %1423
        %1425 = vrot.lane.b32.xlu0 %v1349, 28
        %v1426 = vpop.permute.xlu0 %1425
        %1427 = vrot.lane.b32.xlu0 %v1350, 28
        %v1428 = vpop.permute.xlu0 %1427
        %1429 = vrot.lane.b32.xlu0 %v1351, 28
        %v1430 = vpop.permute.xlu0 %1429
        %vm1431 = vcmask 228352
        %v1432 = vsel %vm1431, %v1424, %v1426
        %v1433 = vsel %vm1431, %v1428, %v1430
        %v1436 = vmul.f32 %v1422, %v1432
        %v1437 = vmul.f32 %v1422, %v1433
        %v1438 = vadd.f32 %v1394, %v1436
        %v1439 = vadd.f32 %v1395, %v1437
        %v1440 = vld [vmem:[%s11 + $0x4] sm:$0x1]
        %v1441 = vlaneseq
        %v1442 = vshrl.u32 %v1441, 7
        %v1443 = vsub.s32 0, %v1442
        %v1444 = vrot.slane %v1440, %v1443
        %1445 = vrot.lane.b32.xlu0 %v1348, 24
        %v1446 = vpop.permute.xlu0 %1445
        %1447 = vrot.lane.b32.xlu0 %v1349, 24
        %v1448 = vpop.permute.xlu0 %1447
        %1449 = vrot.lane.b32.xlu0 %v1350, 24
        %v1450 = vpop.permute.xlu0 %1449
        %1451 = vrot.lane.b32.xlu0 %v1351, 24
        %v1452 = vpop.permute.xlu0 %1451
        %vm1453 = vcmask 195584
        %v1454 = vsel %vm1453, %v1446, %v1448
        %v1455 = vsel %vm1453, %v1450, %v1452
        %v1458 = vmul.f32 %v1444, %v1454
        %v1459 = vmul.f32 %v1444, %v1455
        %v1460 = vadd.f32 %v1416, %v1458
        %v1461 = vadd.f32 %v1417, %v1459
        %v1462 = vld [vmem:[%s7] sm:$0x1]
        %v1463 = vlaneseq
        %v1464 = vshrl.u32 %v1463, 7
        %v1465 = vsub.s32 0, %v1464
        %v1466 = vrot.slane %v1462, %v1465
        %1467 = vrot.lane.b32.xlu0 %v1348, 20
        %v1468 = vpop.permute.xlu0 %1467
        %1469 = vrot.lane.b32.xlu0 %v1349, 20
        %v1470 = vpop.permute.xlu0 %1469
        %1471 = vrot.lane.b32.xlu0 %v1350, 20
        %v1472 = vpop.permute.xlu0 %1471
        %1473 = vrot.lane.b32.xlu0 %v1351, 20
        %v1474 = vpop.permute.xlu0 %1473
        %vm1475 = vcmask 162816
        %v1476 = vsel %vm1475, %v1468, %v1470
        %v1477 = vsel %vm1475, %v1472, %v1474
        %v1480 = vmul.f32 %v1466, %v1476
        %v1481 = vmul.f32 %v1466, %v1477
        %v1482 = vld [vmem:[%s11 + $0x5] sm:$0x1]
        %v1483 = vlaneseq
        %v1484 = vshrl.u32 %v1483, 7
        %v1485 = vsub.s32 0, %v1484
        %v1486 = vrot.slane %v1482, %v1485
        %v1487 = vmul.f32 %v1486, %v1476
        %v1488 = vmul.f32 %v1486, %v1477
        %v1489 = vadd.f32 %v1438, %v1487
        %v1490 = vadd.f32 %v1439, %v1488
        %v1491 = vld [vmem:[%s7 + $0x1] sm:$0x1]
        %v1492 = vlaneseq
        %v1493 = vshrl.u32 %v1492, 7
        %v1494 = vsub.s32 0, %v1493
        %v1495 = vrot.slane %v1491, %v1494
        %1496 = vrot.lane.b32.xlu0 %v1348, 16
        %v1497 = vpop.permute.xlu0 %1496
        %1498 = vrot.lane.b32.xlu0 %v1349, 16
        %v1499 = vpop.permute.xlu0 %1498
        %1500 = vrot.lane.b32.xlu0 %v1350, 16
        %v1501 = vpop.permute.xlu0 %1500
        %1502 = vrot.lane.b32.xlu0 %v1351, 16
        %v1503 = vpop.permute.xlu0 %1502
        %vm1504 = vcmask 130048
        %v1505 = vsel %vm1504, %v1497, %v1499
        %v1506 = vsel %vm1504, %v1501, %v1503
        %v1509 = vmul.f32 %v1495, %v1505
        %v1510 = vmul.f32 %v1495, %v1506
        %v1511 = vld [vmem:[%s11 + $0x6] sm:$0x1]
        %v1512 = vlaneseq
        %v1513 = vshrl.u32 %v1512, 7
        %v1514 = vsub.s32 0, %v1513
        %v1515 = vrot.slane %v1511, %v1514
        %v1516 = vmul.f32 %v1515, %v1505
        %v1517 = vmul.f32 %v1515, %v1506
        %v1518 = vadd.f32 %v1460, %v1516
        %v1519 = vadd.f32 %v1461, %v1517
        %v1520 = vld [vmem:[%s3] sm:$0x1]
        %v1521 = vlaneseq
        %v1522 = vshrl.u32 %v1521, 7
        %v1523 = vsub.s32 0, %v1522
        %v1524 = vrot.slane %v1520, %v1523
        %1525 = vrot.lane.b32.xlu0 %v1348, 12
        %v1526 = vpop.permute.xlu0 %1525
        %1527 = vrot.lane.b32.xlu0 %v1349, 12
        %v1528 = vpop.permute.xlu0 %1527
        %1529 = vrot.lane.b32.xlu0 %v1350, 12
        %v1530 = vpop.permute.xlu0 %1529
        %1531 = vrot.lane.b32.xlu0 %v1351, 12
        %v1532 = vpop.permute.xlu0 %1531
        %vm1533 = vcmask 97280
        %v1534 = vsel %vm1533, %v1526, %v1528
        %v1535 = vsel %vm1533, %v1530, %v1532
        %v1538 = vmul.f32 %v1524, %v1534
        %v1539 = vmul.f32 %v1524, %v1535
        %v1540 = vld [vmem:[%s7 + $0x2] sm:$0x1]
        %v1541 = vlaneseq
        %v1542 = vshrl.u32 %v1541, 7
        %v1543 = vsub.s32 0, %v1542
        %v1544 = vrot.slane %v1540, %v1543
        %v1545 = vmul.f32 %v1544, %v1534
        %v1546 = vmul.f32 %v1544, %v1535
        %v1547 = vadd.f32 %v1480, %v1545
        %v1548 = vadd.f32 %v1481, %v1546
        %v1549 = vld [vmem:[%s11 + $0x7] sm:$0x1]
        %v1550 = vlaneseq
        %v1551 = vshrl.u32 %v1550, 7
        %v1552 = vsub.s32 0, %v1551
        %v1553 = vrot.slane %v1549, %v1552
        %v1554 = vmul.f32 %v1553, %v1534
        %v1555 = vmul.f32 %v1553, %v1535
        %v1556 = vadd.f32 %v1489, %v1554
        %v1557 = vadd.f32 %v1490, %v1555
        %v1558 = vld [vmem:[%s3 + $0x1] sm:$0x1]
        %v1559 = vlaneseq
        %v1560 = vshrl.u32 %v1559, 7
        %v1561 = vsub.s32 0, %v1560
        %v1562 = vrot.slane %v1558, %v1561
        %1563 = vrot.lane.b32.xlu0 %v1348, 8
        %v1564 = vpop.permute.xlu0 %1563
        %1565 = vrot.lane.b32.xlu0 %v1349, 8
        %v1566 = vpop.permute.xlu0 %1565
        %1567 = vrot.lane.b32.xlu0 %v1350, 8
        %v1568 = vpop.permute.xlu0 %1567
        %1569 = vrot.lane.b32.xlu0 %v1351, 8
        %v1570 = vpop.permute.xlu0 %1569
        %v1571 = vsel %vm682, %v1564, %v1566
        %v1572 = vsel %vm682, %v1568, %v1570
        %v1575 = vmul.f32 %v1562, %v1571
        %v1576 = vmul.f32 %v1562, %v1572
        %v1577 = vld [vmem:[%s7 + $0x3] sm:$0x1]
        %v1578 = vlaneseq
        %v1579 = vshrl.u32 %v1578, 7
        %v1580 = vsub.s32 0, %v1579
        %v1581 = vrot.slane %v1577, %v1580
        %v1582 = vmul.f32 %v1581, %v1571
        %v1583 = vmul.f32 %v1581, %v1572
        %v1584 = vadd.f32 %v1509, %v1582
        %v1585 = vadd.f32 %v1510, %v1583
        %v1586 = vld [vmem:[%s11 + $0x8] sm:$0x1]
        %v1587 = vlaneseq
        %v1588 = vshrl.u32 %v1587, 7
        %v1589 = vsub.s32 0, %v1588
        %v1590 = vrot.slane %v1586, %v1589
        %v1591 = vmul.f32 %v1590, %v1571
        %v1592 = vmul.f32 %v1590, %v1572
        %v1593 = vadd.f32 %v1518, %v1591
        %v1594 = vadd.f32 %v1519, %v1592
        %v1595 = vld [vmem:[%s3 + $0x2] sm:$0x1]
        %v1596 = vlaneseq
        %v1597 = vshrl.u32 %v1596, 7
        %v1598 = vsub.s32 0, %v1597
        %v1599 = vrot.slane %v1595, %v1598
        %1600 = vrot.lane.b32.xlu0 %v1348, 4
        %v1601 = vpop.permute.xlu0 %1600
        %1602 = vrot.lane.b32.xlu0 %v1349, 4
        %v1603 = vpop.permute.xlu0 %1602
        %1604 = vrot.lane.b32.xlu0 %v1350, 4
        %v1605 = vpop.permute.xlu0 %1604
        %1606 = vrot.lane.b32.xlu0 %v1351, 4
        %v1607 = vpop.permute.xlu0 %1606
        %v1608 = vsel %vm702, %v1601, %v1603
        %v1609 = vsel %vm702, %v1605, %v1607
        %v1612 = vmul.f32 %v1599, %v1608
        %v1613 = vmul.f32 %v1599, %v1609
        %v1614 = vadd.f32 %v1538, %v1612
        %v1615 = vadd.f32 %v1539, %v1613
        %v1616 = vld [vmem:[%s7 + $0x4] sm:$0x1]
        %v1617 = vlaneseq
        %v1618 = vshrl.u32 %v1617, 7
        %v1619 = vsub.s32 0, %v1618
        %v1620 = vrot.slane %v1616, %v1619
        %v1621 = vmul.f32 %v1620, %v1608
        %v1622 = vmul.f32 %v1620, %v1609
        %v1623 = vadd.f32 %v1547, %v1621
        %v1624 = vadd.f32 %v1548, %v1622
        %v1625 = vld [vmem:[%s11 + $0x9] sm:$0x1]
        %v1626 = vlaneseq
        %v1627 = vshrl.u32 %v1626, 7
        %v1628 = vsub.s32 0, %v1627
        %v1629 = vrot.slane %v1625, %v1628
        %v1630 = vmul.f32 %v1629, %v1608
        %v1631 = vmul.f32 %v1629, %v1609
        %v1632 = vadd.f32 %v1556, %v1630
        %v1633 = vadd.f32 %v1557, %v1631
        %v1634 = vld [vmem:[%s3 + $0x3] sm:$0x1]
        %v1635 = vlaneseq
        %v1636 = vshrl.u32 %v1635, 7
        %v1637 = vsub.s32 0, %v1636
        %v1638 = vrot.slane %v1634, %v1637
        %v1639 = vmul.f32 %v1638, %v1349
        %v1640 = vmul.f32 %v1638, %v1351
        %v1641 = vadd.f32 %v1575, %v1639
        %v1642 = vadd.f32 %v1576, %v1640
        %v1643 = vld [vmem:[%s7 + $0x5] sm:$0x1]
        %v1644 = vlaneseq
        %v1645 = vshrl.u32 %v1644, 7
        %v1646 = vsub.s32 0, %v1645
        %v1647 = vrot.slane %v1643, %v1646
        %v1648 = vmul.f32 %v1647, %v1349
        %v1649 = vmul.f32 %v1647, %v1351
        %v1650 = vadd.f32 %v1584, %v1648
        %v1651 = vadd.f32 %v1585, %v1649
        %v1652 = vld [vmem:[%s11 + $0xa] sm:$0x1]
        %v1653 = vlaneseq
        %v1654 = vshrl.u32 %v1653, 7
        %v1655 = vsub.s32 0, %v1654
        %v1656 = vrot.slane %v1652, %v1655
        %v1657 = vmul.f32 %v1656, %v1349
        %v1658 = vmul.f32 %v1656, %v1351
        %v1659 = vadd.f32 %v1593, %v1657
        %v1660 = vadd.f32 %v1594, %v1658
        %v1661 = vld [vmem:[#allocation2 + $0x28] sm:$0xff]
        %v1662 = vld [vmem:[#allocation2 + $0x40] sm:$0xff]
        %v1663 = vld [vmem:[%s3 + $0x4] sm:$0x1]
        %v1664 = vlaneseq
        %v1665 = vshrl.u32 %v1664, 7
        %v1666 = vsub.s32 0, %v1665
        %v1667 = vrot.slane %v1663, %v1666
        %1670 = vrot.lane.b32.xlu0 %v1349, 124
        %v1671 = vpop.permute.xlu0 %1670
        %1672 = vrot.lane.b32.xlu0 %v1661, 124
        %v1673 = vpop.permute.xlu0 %1672
        %1674 = vrot.lane.b32.xlu0 %v1351, 124
        %v1675 = vpop.permute.xlu0 %1674
        %1676 = vrot.lane.b32.xlu0 %v1662, 124
        %v1677 = vpop.permute.xlu0 %1676
        %v1678 = vsel %vm741, %v1671, %v1673
        %v1679 = vsel %vm741, %v1675, %v1677
        %v1682 = vmul.f32 %v1667, %v1678
        %v1683 = vmul.f32 %v1667, %v1679
        %v1684 = vadd.f32 %v1614, %v1682
        %v1685 = vadd.f32 %v1615, %v1683
        %v1686 = vld [vmem:[%s7 + $0x6] sm:$0x1]
        %v1687 = vlaneseq
        %v1688 = vshrl.u32 %v1687, 7
        %v1689 = vsub.s32 0, %v1688
        %v1690 = vrot.slane %v1686, %v1689
        %v1691 = vmul.f32 %v1690, %v1678
        %v1692 = vmul.f32 %v1690, %v1679
        %v1693 = vadd.f32 %v1623, %v1691
        %v1694 = vadd.f32 %v1624, %v1692
        %v1695 = vld [vmem:[%s11 + $0xb] sm:$0x1]
        %v1696 = vlaneseq
        %v1697 = vshrl.u32 %v1696, 7
        %v1698 = vsub.s32 0, %v1697
        %v1699 = vrot.slane %v1695, %v1698
        %v1700 = vmul.f32 %v1699, %v1678
        %v1701 = vmul.f32 %v1699, %v1679
        %v1702 = vadd.f32 %v1632, %v1700
        %v1703 = vadd.f32 %v1633, %v1701
        %v1704 = vld [vmem:[%s3 + $0x5] sm:$0x1]
        %v1705 = vlaneseq
        %v1706 = vshrl.u32 %v1705, 7
        %v1707 = vsub.s32 0, %v1706
        %v1708 = vrot.slane %v1704, %v1707
        %1709 = vrot.lane.b32.xlu0 %v1349, 120
        %v1710 = vpop.permute.xlu0 %1709
        %1711 = vrot.lane.b32.xlu0 %v1661, 120
        %v1712 = vpop.permute.xlu0 %1711
        %1713 = vrot.lane.b32.xlu0 %v1351, 120
        %v1714 = vpop.permute.xlu0 %1713
        %1715 = vrot.lane.b32.xlu0 %v1662, 120
        %v1716 = vpop.permute.xlu0 %1715
        %v1717 = vsel %vm761, %v1710, %v1712
        %v1718 = vsel %vm761, %v1714, %v1716
        %v1721 = vmul.f32 %v1708, %v1717
        %v1722 = vmul.f32 %v1708, %v1718
        %v1723 = vadd.f32 %v1641, %v1721
        %v1724 = vadd.f32 %v1642, %v1722
        %v1725 = vld [vmem:[%s7 + $0x7] sm:$0x1]
        %v1726 = vlaneseq
        %v1727 = vshrl.u32 %v1726, 7
        %v1728 = vsub.s32 0, %v1727
        %v1729 = vrot.slane %v1725, %v1728
        %v1730 = vmul.f32 %v1729, %v1717
        %v1731 = vmul.f32 %v1729, %v1718
        %v1732 = vadd.f32 %v1650, %v1730
        %v1733 = vadd.f32 %v1651, %v1731
        %v1734 = vld [vmem:[%s11 + $0xc] sm:$0x1]
        %v1735 = vlaneseq
        %v1736 = vshrl.u32 %v1735, 7
        %v1737 = vsub.s32 0, %v1736
        %v1738 = vrot.slane %v1734, %v1737
        %v1739 = vmul.f32 %v1738, %v1717
        %v1740 = vmul.f32 %v1738, %v1718
        %v1741 = vadd.f32 %v1659, %v1739
        %v1742 = vadd.f32 %v1660, %v1740
        %v1743 = vld [vmem:[%s3 + $0x6] sm:$0x1]
        %v1744 = vlaneseq
        %v1745 = vshrl.u32 %v1744, 7
        %v1746 = vsub.s32 0, %v1745
        %v1747 = vrot.slane %v1743, %v1746
        %1748 = vrot.lane.b32.xlu0 %v1349, 116
        %v1749 = vpop.permute.xlu0 %1748
        %1750 = vrot.lane.b32.xlu0 %v1661, 116
        %v1751 = vpop.permute.xlu0 %1750
        %1752 = vrot.lane.b32.xlu0 %v1351, 116
        %v1753 = vpop.permute.xlu0 %1752
        %1754 = vrot.lane.b32.xlu0 %v1662, 116
        %v1755 = vpop.permute.xlu0 %1754
        %vm1756 = vcmask 949248
        %v1757 = vsel %vm1756, %v1749, %v1751
        %v1758 = vsel %vm1756, %v1753, %v1755
        %v1761 = vmul.f32 %v1747, %v1757
        %v1762 = vmul.f32 %v1747, %v1758
        %v1763 = vadd.f32 %v1684, %v1761
        %v1764 = vadd.f32 %v1685, %v1762
        %v1765 = vld [vmem:[%s7 + $0x8] sm:$0x1]
        %v1766 = vlaneseq
        %v1767 = vshrl.u32 %v1766, 7
        %v1768 = vsub.s32 0, %v1767
        %v1769 = vrot.slane %v1765, %v1768
        %v1770 = vmul.f32 %v1769, %v1757
        %v1771 = vmul.f32 %v1769, %v1758
        %v1772 = vadd.f32 %v1693, %v1770
        %v1773 = vadd.f32 %v1694, %v1771
        %v1774 = vld [vmem:[%s11 + $0xd] sm:$0x1]
        %v1775 = vlaneseq
        %v1776 = vshrl.u32 %v1775, 7
        %v1777 = vsub.s32 0, %v1776
        %v1778 = vrot.slane %v1774, %v1777
        %v1779 = vmul.f32 %v1778, %v1757
        %v1780 = vmul.f32 %v1778, %v1758
        %v1781 = vadd.f32 %v1702, %v1779
        %v1782 = vadd.f32 %v1703, %v1780
        %v1783 = vld [vmem:[%s7 + $0x9] sm:$0x1]
        %v1784 = vlaneseq
        %v1785 = vshrl.u32 %v1784, 7
        %v1786 = vsub.s32 0, %v1785
        %v1787 = vrot.slane %v1783, %v1786
        %1788 = vrot.lane.b32.xlu0 %v1349, 112
        %v1789 = vpop.permute.xlu0 %1788
        %1790 = vrot.lane.b32.xlu0 %v1661, 112
        %v1791 = vpop.permute.xlu0 %1790
        %1792 = vrot.lane.b32.xlu0 %v1351, 112
        %v1793 = vpop.permute.xlu0 %1792
        %1794 = vrot.lane.b32.xlu0 %v1662, 112
        %v1795 = vpop.permute.xlu0 %1794
        %vm1796 = vcmask 916480
        %v1797 = vsel %vm1796, %v1789, %v1791
        %v1798 = vsel %vm1796, %v1793, %v1795
        %v1801 = vmul.f32 %v1787, %v1797
        %v1802 = vmul.f32 %v1787, %v1798
        %v1803 = vadd.f32 %v1732, %v1801
        %v1804 = vadd.f32 %v1733, %v1802
        %v1805 = vld [vmem:[%s11 + $0xe] sm:$0x1]
        %v1806 = vlaneseq
        %v1807 = vshrl.u32 %v1806, 7
        %v1808 = vsub.s32 0, %v1807
        %v1809 = vrot.slane %v1805, %v1808
        %v1810 = vmul.f32 %v1809, %v1797
        %v1811 = vmul.f32 %v1809, %v1798
        %v1812 = vadd.f32 %v1741, %v1810
        %v1813 = vadd.f32 %v1742, %v1811
        %v1814 = vld [vmem:[%s7 + $0xa] sm:$0x1]
        %v1815 = vlaneseq
        %v1816 = vshrl.u32 %v1815, 7
        %v1817 = vsub.s32 0, %v1816
        %v1818 = vrot.slane %v1814, %v1817
        %1819 = vrot.lane.b32.xlu0 %v1349, 108
        %v1820 = vpop.permute.xlu0 %1819
        %1821 = vrot.lane.b32.xlu0 %v1661, 108
        %v1822 = vpop.permute.xlu0 %1821
        %1823 = vrot.lane.b32.xlu0 %v1351, 108
        %v1824 = vpop.permute.xlu0 %1823
        %1825 = vrot.lane.b32.xlu0 %v1662, 108
        %v1826 = vpop.permute.xlu0 %1825
        %vm1827 = vcmask 883712
        %v1828 = vsel %vm1827, %v1820, %v1822
        %v1829 = vsel %vm1827, %v1824, %v1826
        %v1832 = vmul.f32 %v1818, %v1828
        %v1833 = vmul.f32 %v1818, %v1829
        %v1834 = vadd.f32 %v1772, %v1832
        %v1835 = vadd.f32 %v1773, %v1833
        %v1836 = vld [vmem:[%s11 + $0xf] sm:$0x1]
        %v1837 = vlaneseq
        %v1838 = vshrl.u32 %v1837, 7
        %v1839 = vsub.s32 0, %v1838
        %v1840 = vrot.slane %v1836, %v1839
        %v1841 = vmul.f32 %v1840, %v1828
        %v1842 = vmul.f32 %v1840, %v1829
        %v1843 = vadd.f32 %v1781, %v1841
        %v1844 = vadd.f32 %v1782, %v1842
        %v1845 = vld [vmem:[%s11 + $0x10] sm:$0x1]
        %v1846 = vlaneseq
        %v1847 = vshrl.u32 %v1846, 7
        %v1848 = vsub.s32 0, %v1847
        %v1849 = vrot.slane %v1845, %v1848
        %1850 = vrot.lane.b32.xlu0 %v1349, 104
        %v1851 = vpop.permute.xlu0 %1850
        %1852 = vrot.lane.b32.xlu0 %v1661, 104
        %v1853 = vpop.permute.xlu0 %1852
        %1854 = vrot.lane.b32.xlu0 %v1351, 104
        %v1855 = vpop.permute.xlu0 %1854
        %1856 = vrot.lane.b32.xlu0 %v1662, 104
        %v1857 = vpop.permute.xlu0 %1856
        %vm1858 = vcmask 850944
        %v1859 = vsel %vm1858, %v1851, %v1853
        %v1860 = vsel %vm1858, %v1855, %v1857
        %v1863 = vmul.f32 %v1849, %v1859
        %v1864 = vmul.f32 %v1849, %v1860
        %v1865 = vadd.f32 %v1812, %v1863
        %v1866 = vadd.f32 %v1813, %v1864
        %v1867 = vld [vmem:[%s11 + $0x11] sm:$0x1]
        %v1868 = vlaneseq
        %v1869 = vshrl.u32 %v1868, 7
        %v1870 = vsub.s32 0, %v1869
        %v1871 = vrot.slane %v1867, %v1870
        %1872 = vrot.lane.b32.xlu0 %v1349, 100
        %v1873 = vpop.permute.xlu0 %1872
        %1874 = vrot.lane.b32.xlu0 %v1661, 100
        %v1875 = vpop.permute.xlu0 %1874
        %1876 = vrot.lane.b32.xlu0 %v1351, 100
        %v1877 = vpop.permute.xlu0 %1876
        %1878 = vrot.lane.b32.xlu0 %v1662, 100
        %v1879 = vpop.permute.xlu0 %1878
        %vm1880 = vcmask 818176
        %v1881 = vsel %vm1880, %v1873, %v1875
        %v1882 = vsel %vm1880, %v1877, %v1879
        %v1885 = vmul.f32 %v1871, %v1881
        %v1886 = vmul.f32 %v1871, %v1882
        %v1887 = vadd.f32 %v1843, %v1885
        %v1888 = vadd.f32 %v1844, %v1886
        %v1889 = vld [vmem:[%s11 + $0x12] sm:$0x1]
        %v1890 = vlaneseq
        %v1891 = vshrl.u32 %v1890, 7
        %v1892 = vsub.s32 0, %v1891
        %v1893 = vrot.slane %v1889, %v1892
        %1894 = vrot.lane.b32.xlu0 %v1349, 96
        %v1895 = vpop.permute.xlu0 %1894
        %1896 = vrot.lane.b32.xlu0 %v1661, 96
        %v1897 = vpop.permute.xlu0 %1896
        %1898 = vrot.lane.b32.xlu0 %v1351, 96
        %v1899 = vpop.permute.xlu0 %1898
        %1900 = vrot.lane.b32.xlu0 %v1662, 96
        %v1901 = vpop.permute.xlu0 %1900
        %vm1902 = vcmask 785408
        %v1903 = vsel %vm1902, %v1895, %v1897
        %v1904 = vsel %vm1902, %v1899, %v1901
        %v1907 = vmul.f32 %v1893, %v1903
        %v1908 = vmul.f32 %v1893, %v1904
        %v1909 = vadd.f32 %v1865, %v1907
        %v1910 = vadd.f32 %v1866, %v1908
        %v1911 = vld [vmem:[%s11 + $0x13] sm:$0x1]
        %v1912 = vlaneseq
        %v1913 = vshrl.u32 %v1912, 7
        %v1914 = vsub.s32 0, %v1913
        %v1915 = vrot.slane %v1911, %v1914
        %1916 = vrot.lane.b32.xlu0 %v1349, 92
        %v1917 = vpop.permute.xlu0 %1916
        %1918 = vrot.lane.b32.xlu0 %v1661, 92
        %v1919 = vpop.permute.xlu0 %1918
        %1920 = vrot.lane.b32.xlu0 %v1351, 92
        %v1921 = vpop.permute.xlu0 %1920
        %1922 = vrot.lane.b32.xlu0 %v1662, 92
        %v1923 = vpop.permute.xlu0 %1922
        %vm1924 = vcmask 752640
        %v1925 = vsel %vm1924, %v1917, %v1919
        %v1926 = vsel %vm1924, %v1921, %v1923
        %v1929 = vmul.f32 %v1915, %v1925
        %v1930 = vmul.f32 %v1915, %v1926
        %v1931 = vadd.f32 %v1887, %v1929
        %v1932 = vadd.f32 %v1888, %v1930
        %v1933 = vld [vmem:[%s11 + $0x14] sm:$0x1]
        %v1934 = vlaneseq
        %v1935 = vshrl.u32 %v1934, 7
        %v1936 = vsub.s32 0, %v1935
        %v1937 = vrot.slane %v1933, %v1936
        %1938 = vrot.lane.b32.xlu0 %v1349, 88
        %v1939 = vpop.permute.xlu0 %1938
        %1940 = vrot.lane.b32.xlu0 %v1661, 88
        %v1941 = vpop.permute.xlu0 %1940
        %1942 = vrot.lane.b32.xlu0 %v1351, 88
        %v1943 = vpop.permute.xlu0 %1942
        %1944 = vrot.lane.b32.xlu0 %v1662, 88
        %v1945 = vpop.permute.xlu0 %1944
        %vm1946 = vcmask 719872
        %v1947 = vsel %vm1946, %v1939, %v1941
        %v1948 = vsel %vm1946, %v1943, %v1945
        %v1951 = vmul.f32 %v1937, %v1947
        %v1952 = vmul.f32 %v1937, %v1948
        %v1953 = vadd.f32 %v1909, %v1951
        %v1954 = vadd.f32 %v1910, %v1952
        %v1955 = vadd.f32 %v1723, %v1763
        %v1956 = vadd.f32 %v1724, %v1764
        %v1957 = vld [vmem:[#allocation7] sm:$0x1]
        %v1959 = vlaneseq
        %v1960 = vshrl.u32 %v1959, 7
        %v1961 = vsub.s32 0, %v1960
        %v1962 = vrot.slane %v1957, %v1961
        %v1964 = vadd.f32 %v1955, %v1962
        %v1965 = vadd.f32 %v1956, %v1962
        %v1966 = vadd.f32 %v1803, %v1834
        %v1967 = vadd.f32 %v1804, %v1835
        %v1968 = vld [vmem:[#allocation12] sm:$0x1]
        %v1970 = vlaneseq
        %v1971 = vshrl.u32 %v1970, 7
        %v1972 = vsub.s32 0, %v1971
        %v1973 = vrot.slane %v1968, %v1972
        %v1975 = vadd.f32 %v1966, %v1973
        %v1976 = vadd.f32 %v1967, %v1973
        %v1977 = vadd.f32 %v1953, %v1931
        %v1978 = vadd.f32 %v1954, %v1932
        %v1979 = vld [vmem:[%s12] sm:$0x1]
        %v1981 = vlaneseq
        %v1982 = vshrl.u32 %v1981, 7
        %v1983 = vsub.s32 0, %v1982
        %v1984 = vrot.slane %v1979, %v1983
        %v1986 = vadd.f32 %v1977, %v1984
        %v1987 = vadd.f32 %v1978, %v1984
        %1988 = vst [vmem:[#allocation3 + $0x10] sm:$0xff] %v1964
        %1989 = vst [vmem:[#allocation3 + $0x18] sm:$0xff] %v1965
        %v1990 = vld [vmem:[#allocation9] sm:$0x1]
        %v1991 = vld [vmem:[#allocation3 + $0xd] sm:$0xff]
        %v1992 = vld [vmem:[#allocation3 + $0x15] sm:$0xff]
        %v1994 = vlaneseq
        %v1995 = vshrl.u32 %v1994, 7
        %v1996 = vsub.s32 0, %v1995
        %v1997 = vrot.slane %v1990, %v1996
        %v1999 = vmul.f32 %v1997, %v1991
        %v2000 = vmul.f32 %v1997, %v1992
        %s2001 = scalar_lea.vmem [#allocation9], 1
        %v2002 = vld [vmem:[%s2001] sm:$0x1]
        %v2003 = vld [vmem:[#allocation3 + $0xe] sm:$0xff]
        %v2004 = vld [vmem:[#allocation3 + $0x16] sm:$0xff]
        %v2006 = vlaneseq
        %v2007 = vshrl.u32 %v2006, 7
        %v2008 = vsub.s32 0, %v2007
        %v2009 = vrot.slane %v2002, %v2008
        %v2011 = vmul.f32 %v2009, %v2003
        %v2012 = vmul.f32 %v2009, %v2004
        %s2013 = scalar_lea.vmem [#allocation9], 2
        %v2014 = vld [vmem:[%s2013] sm:$0x1]
        %v2015 = vld [vmem:[#allocation3 + $0xf] sm:$0xff]
        %v2016 = vld [vmem:[#allocation3 + $0x17] sm:$0xff]
        %v2018 = vlaneseq
        %v2019 = vshrl.u32 %v2018, 7
        %v2020 = vsub.s32 0, %v2019
        %v2021 = vrot.slane %v2014, %v2020
        %v2023 = vmul.f32 %v2021, %v2015
        %v2024 = vmul.f32 %v2021, %v2016
        %s2025 = scalar_lea.vmem [#allocation9], 3
        %v2026 = vld [vmem:[%s2025] sm:$0x1]
        %v2027 = vld [vmem:[#allocation3 + $0x10] sm:$0xff]
        %v2028 = vld [vmem:[#allocation3 + $0x18] sm:$0xff]
        %v2030 = vlaneseq
        %v2031 = vshrl.u32 %v2030, 7
        %v2032 = vsub.s32 0, %v2031
        %v2033 = vrot.slane %v2026, %v2032
        %v2035 = vmul.f32 %v2033, %v2027
        %v2036 = vmul.f32 %v2033, %v2028
        %s2037 = scalar_lea.vmem [#allocation9], 4
        %v2038 = vld [vmem:[%s2037] sm:$0x1]
        %v2039 = vld [vmem:[#allocation3 + $0x11] sm:$0xff]
        %v2040 = vld [vmem:[#allocation3 + $0x19] sm:$0xff]
        %v2042 = vlaneseq
        %v2043 = vshrl.u32 %v2042, 7
        %v2044 = vsub.s32 0, %v2043
        %v2045 = vrot.slane %v2038, %v2044
        %v2047 = vmul.f32 %v2045, %v2039
        %v2048 = vmul.f32 %v2045, %v2040
        %v2049 = vadd.f32 %v1999, %v2047
        %v2050 = vadd.f32 %v2000, %v2048
        %s2051 = scalar_lea.vmem [#allocation9], 5
        %v2052 = vld [vmem:[%s2051] sm:$0x1]
        %v2053 = vld [vmem:[#allocation3 + $0x12] sm:$0xff]
        %v2054 = vld [vmem:[#allocation3 + $0x1a] sm:$0xff]
        %v2056 = vlaneseq
        %v2057 = vshrl.u32 %v2056, 7
        %v2058 = vsub.s32 0, %v2057
        %v2059 = vrot.slane %v2052, %v2058
        %v2061 = vmul.f32 %v2059, %v2053
        %v2062 = vmul.f32 %v2059, %v2054
        %v2063 = vadd.f32 %v2011, %v2061
        %v2064 = vadd.f32 %v2012, %v2062
        %s2065 = scalar_lea.vmem [#allocation9], 6
        %v2066 = vld [vmem:[%s2065] sm:$0x1]
        %v2067 = vld [vmem:[#allocation3 + $0x13] sm:$0xff]
        %v2068 = vld [vmem:[#allocation3 + $0x1b] sm:$0xff]
        %v2070 = vlaneseq
        %v2071 = vshrl.u32 %v2070, 7
        %v2072 = vsub.s32 0, %v2071
        %v2073 = vrot.slane %v2066, %v2072
        %v2075 = vmul.f32 %v2073, %v2067
        %v2076 = vmul.f32 %v2073, %v2068
        %v2077 = vadd.f32 %v2023, %v2075
        %v2078 = vadd.f32 %v2024, %v2076
        %v2079 = vadd.f32 %v2049, %v2063
        %v2080 = vadd.f32 %v2050, %v2064
        %v2081 = vadd.f32 %v2077, %v2035
        %v2082 = vadd.f32 %v2078, %v2036
        %v2083 = vadd.f32 %v2079, %v2081
        %v2084 = vadd.f32 %v2080, %v2082
        %v2085 = vld [vmem:[#allocation10] sm:$0x1]
        %v2087 = vlaneseq
        %v2088 = vshrl.u32 %v2087, 7
        %v2089 = vsub.s32 0, %v2088
        %v2090 = vrot.slane %v2085, %v2089
        %v2092 = vadd.f32 %v2083, %v2090
        %v2093 = vadd.f32 %v2084, %v2090
        %v2094 = vadd.f32 %v1344, %v2092
        %v2095 = vadd.f32 %v1345, %v2093
        %2096 = vst [vmem:[#allocation3 + $0x10] sm:$0xff] %v1975
        %2097 = vst [vmem:[#allocation3 + $0x18] sm:$0xff] %v1976
        %v2098 = vld [vmem:[%s9] sm:$0x1]
        %v2099 = vld [vmem:[#allocation3 + $0xb] sm:$0xff]
        %v2100 = vld [vmem:[#allocation3 + $0x13] sm:$0xff]
        %v2102 = vlaneseq
        %v2103 = vshrl.u32 %v2102, 7
        %v2104 = vsub.s32 0, %v2103
        %v2105 = vrot.slane %v2098, %v2104
        %v2107 = vmul.f32 %v2105, %v2099
        %v2108 = vmul.f32 %v2105, %v2100
        %s2109 = scalar_lea.vmem %s9, 1
        %v2110 = vld [vmem:[%s2109] sm:$0x1]
        %v2111 = vld [vmem:[#allocation3 + $0xc] sm:$0xff]
        %v2112 = vld [vmem:[#allocation3 + $0x14] sm:$0xff]
        %v2114 = vlaneseq
        %v2115 = vshrl.u32 %v2114, 7
        %v2116 = vsub.s32 0, %v2115
        %v2117 = vrot.slane %v2110, %v2116
        %v2119 = vmul.f32 %v2117, %v2111
        %v2120 = vmul.f32 %v2117, %v2112
        %s2121 = scalar_lea.vmem %s9, 2
        %v2122 = vld [vmem:[%s2121] sm:$0x1]
        %v2123 = vld [vmem:[#allocation3 + $0xd] sm:$0xff]
        %v2124 = vld [vmem:[#allocation3 + $0x15] sm:$0xff]
        %v2126 = vlaneseq
        %v2127 = vshrl.u32 %v2126, 7
        %v2128 = vsub.s32 0, %v2127
        %v2129 = vrot.slane %v2122, %v2128
        %v2131 = vmul.f32 %v2129, %v2123
        %v2132 = vmul.f32 %v2129, %v2124
        %s2133 = scalar_lea.vmem %s9, 3
        %v2134 = vld [vmem:[%s2133] sm:$0x1]
        %v2135 = vld [vmem:[#allocation3 + $0xe] sm:$0xff]
        %v2136 = vld [vmem:[#allocation3 + $0x16] sm:$0xff]
        %v2138 = vlaneseq
        %v2139 = vshrl.u32 %v2138, 7
        %v2140 = vsub.s32 0, %v2139
        %v2141 = vrot.slane %v2134, %v2140
        %v2143 = vmul.f32 %v2141, %v2135
        %v2144 = vmul.f32 %v2141, %v2136
        %s2145 = scalar_lea.vmem %s9, 4
        %v2146 = vld [vmem:[%s2145] sm:$0x1]
        %v2147 = vld [vmem:[#allocation3 + $0xf] sm:$0xff]
        %v2148 = vld [vmem:[#allocation3 + $0x17] sm:$0xff]
        %v2150 = vlaneseq
        %v2151 = vshrl.u32 %v2150, 7
        %v2152 = vsub.s32 0, %v2151
        %v2153 = vrot.slane %v2146, %v2152
        %v2155 = vmul.f32 %v2153, %v2147
        %v2156 = vmul.f32 %v2153, %v2148
        %v2157 = vadd.f32 %v2107, %v2155
        %v2158 = vadd.f32 %v2108, %v2156
        %s2159 = scalar_lea.vmem %s9, 5
        %v2160 = vld [vmem:[%s2159] sm:$0x1]
        %v2161 = vld [vmem:[#allocation3 + $0x10] sm:$0xff]
        %v2162 = vld [vmem:[#allocation3 + $0x18] sm:$0xff]
        %v2164 = vlaneseq
        %v2165 = vshrl.u32 %v2164, 7
        %v2166 = vsub.s32 0, %v2165
        %v2167 = vrot.slane %v2160, %v2166
        %v2169 = vmul.f32 %v2167, %v2161
        %v2170 = vmul.f32 %v2167, %v2162
        %v2171 = vadd.f32 %v2119, %v2169
        %v2172 = vadd.f32 %v2120, %v2170
        %s2173 = scalar_lea.vmem %s9, 6
        %v2174 = vld [vmem:[%s2173] sm:$0x1]
        %v2175 = vld [vmem:[#allocation3 + $0x11] sm:$0xff]
        %v2176 = vld [vmem:[#allocation3 + $0x19] sm:$0xff]
        %v2178 = vlaneseq
        %v2179 = vshrl.u32 %v2178, 7
        %v2180 = vsub.s32 0, %v2179
        %v2181 = vrot.slane %v2174, %v2180
        %v2183 = vmul.f32 %v2181, %v2175
        %v2184 = vmul.f32 %v2181, %v2176
        %v2185 = vadd.f32 %v2131, %v2183
        %v2186 = vadd.f32 %v2132, %v2184
        %s2187 = scalar_lea.vmem %s9, 7
        %v2188 = vld [vmem:[%s2187] sm:$0x1]
        %v2189 = vld [vmem:[#allocation3 + $0x12] sm:$0xff]
        %v2190 = vld [vmem:[#allocation3 + $0x1a] sm:$0xff]
        %v2192 = vlaneseq
        %v2193 = vshrl.u32 %v2192, 7
        %v2194 = vsub.s32 0, %v2193
        %v2195 = vrot.slane %v2188, %v2194
        %v2197 = vmul.f32 %v2195, %v2189
        %v2198 = vmul.f32 %v2195, %v2190
        %v2199 = vadd.f32 %v2143, %v2197
        %v2200 = vadd.f32 %v2144, %v2198
        %s2201 = scalar_lea.vmem %s9, 8
        %v2202 = vld [vmem:[%s2201] sm:$0x1]
        %v2203 = vld [vmem:[#allocation3 + $0x1b] sm:$0xff]
        %v2205 = vlaneseq
        %v2206 = vshrl.u32 %v2205, 7
        %v2207 = vsub.s32 0, %v2206
        %v2208 = vrot.slane %v2202, %v2207
        %v2210 = vmul.f32 %v2208, %v2100
        %v2211 = vmul.f32 %v2208, %v2203
        %v2212 = vadd.f32 %v2157, %v2210
        %v2213 = vadd.f32 %v2158, %v2211
        %s2214 = scalar_lea.vmem %s9, 9
        %v2215 = vld [vmem:[%s2214] sm:$0x1]
        %v2216 = vld [vmem:[#allocation3 + $0x1c] sm:$0xff]
        %v2218 = vlaneseq
        %v2219 = vshrl.u32 %v2218, 7
        %v2220 = vsub.s32 0, %v2219
        %v2221 = vrot.slane %v2215, %v2220
        %v2223 = vmul.f32 %v2221, %v2112
        %v2224 = vmul.f32 %v2221, %v2216
        %v2225 = vadd.f32 %v2171, %v2223
        %v2226 = vadd.f32 %v2172, %v2224
        %s2227 = scalar_lea.vmem %s9, 10
        %v2228 = vld [vmem:[%s2227] sm:$0x1]
        %v2229 = vld [vmem:[#allocation3 + $0x1d] sm:$0xff]
        %v2231 = vlaneseq
        %v2232 = vshrl.u32 %v2231, 7
        %v2233 = vsub.s32 0, %v2232
        %v2234 = vrot.slane %v2228, %v2233
        %v2236 = vmul.f32 %v2234, %v2124
        %v2237 = vmul.f32 %v2234, %v2229
        %v2238 = vadd.f32 %v2185, %v2236
        %v2239 = vadd.f32 %v2186, %v2237
        %v2240 = vadd.f32 %v2212, %v2225
        %v2241 = vadd.f32 %v2213, %v2226
        %v2242 = vadd.f32 %v2238, %v2199
        %v2243 = vadd.f32 %v2239, %v2200
        %v2244 = vadd.f32 %v2240, %v2242
        %v2245 = vadd.f32 %v2241, %v2243
        %v2246 = vld [vmem:[#allocation13] sm:$0x1]
        %v2248 = vlaneseq
        %v2249 = vshrl.u32 %v2248, 7
        %v2250 = vsub.s32 0, %v2249
        %v2251 = vrot.slane %v2246, %v2250
        %v2253 = vadd.f32 %v2244, %v2251
        %v2254 = vadd.f32 %v2245, %v2251
        %v2255 = vadd.f32 %v2094, %v2253
        %v2256 = vadd.f32 %v2095, %v2254
        %2257 = vst [vmem:[#allocation3 + $0x10] sm:$0xff] %v1986
        %2258 = vst [vmem:[#allocation3 + $0x18] sm:$0xff] %v1987
        %v2259 = vld [vmem:[%s13] sm:$0x1]
        %v2260 = vld [vmem:[#allocation3 + $0x6] sm:$0xff]
        %v2261 = vld [vmem:[#allocation3 + $0xe] sm:$0xff]
        %v2263 = vlaneseq
        %v2264 = vshrl.u32 %v2263, 7
        %v2265 = vsub.s32 0, %v2264
        %v2266 = vrot.slane %v2259, %v2265
        %v2268 = vmul.f32 %v2266, %v2260
        %v2269 = vmul.f32 %v2266, %v2261
        %s2270 = scalar_lea.vmem %s13, 1
        %v2271 = vld [vmem:[%s2270] sm:$0x1]
        %v2272 = vld [vmem:[#allocation3 + $0x7] sm:$0xff]
        %v2273 = vld [vmem:[#allocation3 + $0xf] sm:$0xff]
        %v2275 = vlaneseq
        %v2276 = vshrl.u32 %v2275, 7
        %v2277 = vsub.s32 0, %v2276
        %v2278 = vrot.slane %v2271, %v2277
        %v2280 = vmul.f32 %v2278, %v2272
        %v2281 = vmul.f32 %v2278, %v2273
        %s2282 = scalar_lea.vmem %s13, 2
        %v2283 = vld [vmem:[%s2282] sm:$0x1]
        %v2284 = vld [vmem:[#allocation3 + $0x8] sm:$0xff]
        %v2285 = vld [vmem:[#allocation3 + $0x10] sm:$0xff]
        %v2287 = vlaneseq
        %v2288 = vshrl.u32 %v2287, 7
        %v2289 = vsub.s32 0, %v2288
        %v2290 = vrot.slane %v2283, %v2289
        %v2292 = vmul.f32 %v2290, %v2284
        %v2293 = vmul.f32 %v2290, %v2285
        %s2294 = scalar_lea.vmem %s13, 3
        %v2295 = vld [vmem:[%s2294] sm:$0x1]
        %v2296 = vld [vmem:[#allocation3 + $0x9] sm:$0xff]
        %v2297 = vld [vmem:[#allocation3 + $0x11] sm:$0xff]
        %v2299 = vlaneseq
        %v2300 = vshrl.u32 %v2299, 7
        %v2301 = vsub.s32 0, %v2300
        %v2302 = vrot.slane %v2295, %v2301
        %v2304 = vmul.f32 %v2302, %v2296
        %v2305 = vmul.f32 %v2302, %v2297
        %s2306 = scalar_lea.vmem %s13, 4
        %v2307 = vld [vmem:[%s2306] sm:$0x1]
        %v2308 = vld [vmem:[#allocation3 + $0xa] sm:$0xff]
        %v2309 = vld [vmem:[#allocation3 + $0x12] sm:$0xff]
        %v2311 = vlaneseq
        %v2312 = vshrl.u32 %v2311, 7
        %v2313 = vsub.s32 0, %v2312
        %v2314 = vrot.slane %v2307, %v2313
        %v2316 = vmul.f32 %v2314, %v2308
        %v2317 = vmul.f32 %v2314, %v2309
        %v2318 = vadd.f32 %v2268, %v2316
        %v2319 = vadd.f32 %v2269, %v2317
        %s2320 = scalar_lea.vmem %s13, 5
        %v2321 = vld [vmem:[%s2320] sm:$0x1]
        %v2322 = vld [vmem:[#allocation3 + $0xb] sm:$0xff]
        %v2323 = vld [vmem:[#allocation3 + $0x13] sm:$0xff]
        %v2325 = vlaneseq
        %v2326 = vshrl.u32 %v2325, 7
        %v2327 = vsub.s32 0, %v2326
        %v2328 = vrot.slane %v2321, %v2327
        %v2330 = vmul.f32 %v2328, %v2322
        %v2331 = vmul.f32 %v2328, %v2323
        %v2332 = vadd.f32 %v2280, %v2330
        %v2333 = vadd.f32 %v2281, %v2331
        %s2334 = scalar_lea.vmem %s13, 6
        %v2335 = vld [vmem:[%s2334] sm:$0x1]
        %v2336 = vld [vmem:[#allocation3 + $0xc] sm:$0xff]
        %v2337 = vld [vmem:[#allocation3 + $0x14] sm:$0xff]
        %v2339 = vlaneseq
        %v2340 = vshrl.u32 %v2339, 7
        %v2341 = vsub.s32 0, %v2340
        %v2342 = vrot.slane %v2335, %v2341
        %v2344 = vmul.f32 %v2342, %v2336
        %v2345 = vmul.f32 %v2342, %v2337
        %v2346 = vadd.f32 %v2292, %v2344
        %v2347 = vadd.f32 %v2293, %v2345
        %s2348 = scalar_lea.vmem %s13, 7
        %v2349 = vld [vmem:[%s2348] sm:$0x1]
        %v2350 = vld [vmem:[#allocation3 + $0xd] sm:$0xff]
        %v2351 = vld [vmem:[#allocation3 + $0x15] sm:$0xff]
        %v2353 = vlaneseq
        %v2354 = vshrl.u32 %v2353, 7
        %v2355 = vsub.s32 0, %v2354
        %v2356 = vrot.slane %v2349, %v2355
        %v2358 = vmul.f32 %v2356, %v2350
        %v2359 = vmul.f32 %v2356, %v2351
        %v2360 = vadd.f32 %v2304, %v2358
        %v2361 = vadd.f32 %v2305, %v2359
        %s2362 = scalar_lea.vmem %s13, 8
        %v2363 = vld [vmem:[%s2362] sm:$0x1]
        %v2364 = vld [vmem:[#allocation3 + $0x16] sm:$0xff]
        %v2366 = vlaneseq
        %v2367 = vshrl.u32 %v2366, 7
        %v2368 = vsub.s32 0, %v2367
        %v2369 = vrot.slane %v2363, %v2368
        %v2371 = vmul.f32 %v2369, %v2261
        %v2372 = vmul.f32 %v2369, %v2364
        %v2373 = vadd.f32 %v2318, %v2371
        %v2374 = vadd.f32 %v2319, %v2372
        %s2375 = scalar_lea.vmem %s13, 9
        %v2376 = vld [vmem:[%s2375] sm:$0x1]
        %v2377 = vld [vmem:[#allocation3 + $0x17] sm:$0xff]
        %v2379 = vlaneseq
        %v2380 = vshrl.u32 %v2379, 7
        %v2381 = vsub.s32 0, %v2380
        %v2382 = vrot.slane %v2376, %v2381
        %v2384 = vmul.f32 %v2382, %v2273
        %v2385 = vmul.f32 %v2382, %v2377
        %v2386 = vadd.f32 %v2332, %v2384
        %v2387 = vadd.f32 %v2333, %v2385
        %s2388 = scalar_lea.vmem %s13, 10
        %v2389 = vld [vmem:[%s2388] sm:$0x1]
        %v2390 = vld [vmem:[#allocation3 + $0x18] sm:$0xff]
        %v2392 = vlaneseq
        %v2393 = vshrl.u32 %v2392, 7
        %v2394 = vsub.s32 0, %v2393
        %v2395 = vrot.slane %v2389, %v2394
        %v2397 = vmul.f32 %v2395, %v2285
        %v2398 = vmul.f32 %v2395, %v2390
        %v2399 = vadd.f32 %v2346, %v2397
        %v2400 = vadd.f32 %v2347, %v2398
        %s2401 = scalar_lea.vmem %s13, 11
        %v2402 = vld [vmem:[%s2401] sm:$0x1]
        %v2403 = vld [vmem:[#allocation3 + $0x19] sm:$0xff]
        %v2405 = vlaneseq
        %v2406 = vshrl.u32 %v2405, 7
        %v2407 = vsub.s32 0, %v2406
        %v2408 = vrot.slane %v2402, %v2407
        %v2410 = vmul.f32 %v2408, %v2297
        %v2411 = vmul.f32 %v2408, %v2403
        %v2412 = vadd.f32 %v2360, %v2410
        %v2413 = vadd.f32 %v2361, %v2411
        %s2414 = scalar_lea.vmem %s13, 12
        %v2415 = vld [vmem:[%s2414] sm:$0x1]
        %v2416 = vld [vmem:[#allocation3 + $0x1a] sm:$0xff]
        %v2418 = vlaneseq
        %v2419 = vshrl.u32 %v2418, 7
        %v2420 = vsub.s32 0, %v2419
        %v2421 = vrot.slane %v2415, %v2420
        %v2423 = vmul.f32 %v2421, %v2309
        %v2424 = vmul.f32 %v2421, %v2416
        %v2425 = vadd.f32 %v2373, %v2423
        %v2426 = vadd.f32 %v2374, %v2424
        %s2427 = scalar_lea.vmem %s13, 13
        %v2428 = vld [vmem:[%s2427] sm:$0x1]
        %v2429 = vld [vmem:[#allocation3 + $0x1b] sm:$0xff]
        %v2431 = vlaneseq
        %v2432 = vshrl.u32 %v2431, 7
        %v2433 = vsub.s32 0, %v2432
        %v2434 = vrot.slane %v2428, %v2433
        %v2436 = vmul.f32 %v2434, %v2323
        %v2437 = vmul.f32 %v2434, %v2429
        %v2438 = vadd.f32 %v2386, %v2436
        %v2439 = vadd.f32 %v2387, %v2437
        %s2440 = scalar_lea.vmem %s13, 14
        %v2441 = vld [vmem:[%s2440] sm:$0x1]
        %v2442 = vld [vmem:[#allocation3 + $0x1c] sm:$0xff]
        %v2444 = vlaneseq
        %v2445 = vshrl.u32 %v2444, 7
        %v2446 = vsub.s32 0, %v2445
        %v2447 = vrot.slane %v2441, %v2446
        %v2449 = vmul.f32 %v2447, %v2337
        %v2450 = vmul.f32 %v2447, %v2442
        %v2451 = vadd.f32 %v2399, %v2449
        %v2452 = vadd.f32 %v2400, %v2450
        %s2453 = scalar_lea.vmem %s13, 15
        %v2454 = vld [vmem:[%s2453] sm:$0x1]
        %v2455 = vld [vmem:[#allocation3 + $0x1d] sm:$0xff]
        %v2457 = vlaneseq
        %v2458 = vshrl.u32 %v2457, 7
        %v2459 = vsub.s32 0, %v2458
        %v2460 = vrot.slane %v2454, %v2459
        %v2462 = vmul.f32 %v2460, %v2351
        %v2463 = vmul.f32 %v2460, %v2455
        %v2464 = vadd.f32 %v2412, %v2462
        %v2465 = vadd.f32 %v2413, %v2463
        %s2466 = scalar_lea.vmem %s13, 16
        %v2467 = vld [vmem:[%s2466] sm:$0x1]
        %v2468 = vld [vmem:[#allocation3 + $0x1e] sm:$0xff]
        %v2470 = vlaneseq
        %v2471 = vshrl.u32 %v2470, 7
        %v2472 = vsub.s32 0, %v2471
        %v2473 = vrot.slane %v2467, %v2472
        %v2475 = vmul.f32 %v2473, %v2364
        %v2476 = vmul.f32 %v2473, %v2468
        %v2477 = vadd.f32 %v2425, %v2475
        %v2478 = vadd.f32 %v2426, %v2476
        %s2479 = scalar_lea.vmem %s13, 17
        %v2480 = vld [vmem:[%s2479] sm:$0x1]
        %v2481 = vld [vmem:[#allocation3 + $0x1f] sm:$0xff]
        %v2483 = vlaneseq
        %v2484 = vshrl.u32 %v2483, 7
        %v2485 = vsub.s32 0, %v2484
        %v2486 = vrot.slane %v2480, %v2485
        %v2488 = vmul.f32 %v2486, %v2377
        %v2489 = vmul.f32 %v2486, %v2481
        %v2490 = vadd.f32 %v2438, %v2488
        %v2491 = vadd.f32 %v2439, %v2489
        %s2492 = scalar_lea.vmem %s13, 18
        %v2493 = vld [vmem:[%s2492] sm:$0x1]
        %v2494 = vld [vmem:[#allocation3 + $0x20] sm:$0xff]
        %v2496 = vlaneseq
        %v2497 = vshrl.u32 %v2496, 7
        %v2498 = vsub.s32 0, %v2497
        %v2499 = vrot.slane %v2493, %v2498
        %v2501 = vmul.f32 %v2499, %v2390
        %v2502 = vmul.f32 %v2499, %v2494
        %v2503 = vadd.f32 %v2451, %v2501
        %v2504 = vadd.f32 %v2452, %v2502
        %s2505 = scalar_lea.vmem %s13, 19
        %v2506 = vld [vmem:[%s2505] sm:$0x1]
        %v2507 = vld [vmem:[#allocation3 + $0x21] sm:$0xff]
        %v2509 = vlaneseq
        %v2510 = vshrl.u32 %v2509, 7
        %v2511 = vsub.s32 0, %v2510
        %v2512 = vrot.slane %v2506, %v2511
        %v2514 = vmul.f32 %v2512, %v2403
        %v2515 = vmul.f32 %v2512, %v2507
        %v2516 = vadd.f32 %v2464, %v2514
        %v2517 = vadd.f32 %v2465, %v2515
        %s2518 = scalar_lea.vmem %s13, 20
        %v2519 = vld [vmem:[%s2518] sm:$0x1]
        %v2520 = vld [vmem:[#allocation3 + $0x1a] sm:$0xff]
        %v2521 = vld [vmem:[#allocation3 + $0x22] sm:$0xff]
        %v2523 = vlaneseq
        %v2524 = vshrl.u32 %v2523, 7
        %v2525 = vsub.s32 0, %v2524
        %v2526 = vrot.slane %v2519, %v2525
        %v2528 = vmul.f32 %v2526, %v2520
        %v2529 = vmul.f32 %v2526, %v2521
        %v2530 = vadd.f32 %v2477, %v2528
        %v2531 = vadd.f32 %v2478, %v2529
        %v2532 = vadd.f32 %v2530, %v2490
        %v2533 = vadd.f32 %v2531, %v2491
        %v2534 = vadd.f32 %v2503, %v2516
        %v2535 = vadd.f32 %v2504, %v2517
        %v2536 = vadd.f32 %v2532, %v2534
        %v2537 = vadd.f32 %v2533, %v2535
        %v2538 = vld [vmem:[%s14] sm:$0x1]
        %v2540 = vlaneseq
        %v2541 = vshrl.u32 %v2540, 7
        %v2542 = vsub.s32 0, %v2541
        %v2543 = vrot.slane %v2538, %v2542
        %v2545 = vadd.f32 %v2536, %v2543
        %v2546 = vadd.f32 %v2537, %v2543
        %v2547 = vadd.f32 %v2255, %v2545
        %v2548 = vadd.f32 %v2256, %v2546
        %v2549 = vsel %vm1343, %v2547, 0.0
        %v2550 = vsel %vm1343, %v2548, 0.0
        %2551 = vst [vmem:[#allocation2 + $0x20] sm:$0xff] %v2549
        %2552 = vst [vmem:[#allocation2 + $0x38] sm:$0xff] %v2550
        %v2553 = vld [vmem:[%s15] sm:$0x1]
        %v2554 = vld [vmem:[#allocation2 + $0x18] sm:$0xff]
        %v2555 = vld [vmem:[#allocation2 + $0x20] sm:$0xff]
        %v2556 = vld [vmem:[#allocation2 + $0x30] sm:$0xff]
        %v2557 = vld [vmem:[#allocation2 + $0x38] sm:$0xff]
        %v2558 = vlaneseq
        %v2559 = vshrl.u32 %v2558, 7
        %v2560 = vsub.s32 0, %v2559
        %v2561 = vrot.slane %v2553, %v2560
        %2566 = vrot.lane.b32.xlu0 %v2554, 3
        %v2567 = vpop.permute.xlu0 %2566
        %2568 = vrot.lane.b32.xlu0 %v2555, 3
        %v2569 = vpop.permute.xlu0 %2568
        %2570 = vrot.lane.b32.xlu0 %v2556, 3
        %v2571 = vpop.permute.xlu0 %2570
        %2572 = vrot.lane.b32.xlu0 %v2557, 3
        %v2573 = vpop.permute.xlu0 %2572
        %vm2574 = vcmask 23552
        %v2575 = vsel %vm2574, %v2567, %v2569
        %v2576 = vsel %vm2574, %v2571, %v2573
        %v2579 = vmul.f32 %v2561, %v2575
        %v2580 = vmul.f32 %v2561, %v2576
        %v2581 = vld [vmem:[%s15 + $0x1] sm:$0x1]
        %v2582 = vlaneseq
        %v2583 = vshrl.u32 %v2582, 7
        %v2584 = vsub.s32 0, %v2583
        %v2585 = vrot.slane %v2581, %v2584
        %2586 = vrot.lane.b32.xlu0 %v2554, 2
        %v2587 = vpop.permute.xlu0 %2586
        %2588 = vrot.lane.b32.xlu0 %v2555, 2
        %v2589 = vpop.permute.xlu0 %2588
        %2590 = vrot.lane.b32.xlu0 %v2556, 2
        %v2591 = vpop.permute.xlu0 %2590
        %2592 = vrot.lane.b32.xlu0 %v2557, 2
        %v2593 = vpop.permute.xlu0 %2592
        %vm2594 = vcmask 15360
        %v2595 = vsel %vm2594, %v2587, %v2589
        %v2596 = vsel %vm2594, %v2591, %v2593
        %v2599 = vmul.f32 %v2585, %v2595
        %v2600 = vmul.f32 %v2585, %v2596
        %v2601 = vld [vmem:[%s15 + $0x2] sm:$0x1]
        %v2602 = vlaneseq
        %v2603 = vshrl.u32 %v2602, 7
        %v2604 = vsub.s32 0, %v2603
        %v2605 = vrot.slane %v2601, %v2604
        %2606 = vrot.lane.b32.xlu0 %v2554, 1
        %v2607 = vpop.permute.xlu0 %2606
        %2608 = vrot.lane.b32.xlu0 %v2555, 1
        %v2609 = vpop.permute.xlu0 %2608
        %2610 = vrot.lane.b32.xlu0 %v2556, 1
        %v2611 = vpop.permute.xlu0 %2610
        %2612 = vrot.lane.b32.xlu0 %v2557, 1
        %v2613 = vpop.permute.xlu0 %2612
        %vm2614 = vcmask 7168
        %v2615 = vsel %vm2614, %v2607, %v2609
        %v2616 = vsel %vm2614, %v2611, %v2613
        %v2619 = vmul.f32 %v2605, %v2615
        %v2620 = vmul.f32 %v2605, %v2616
        %v2621 = vld [vmem:[%s15 + $0x3] sm:$0x1]
        %v2622 = vlaneseq
        %v2623 = vshrl.u32 %v2622, 7
        %v2624 = vsub.s32 0, %v2623
        %v2625 = vrot.slane %v2621, %v2624
        %v2626 = vmul.f32 %v2625, %v2555
        %v2627 = vmul.f32 %v2625, %v2557
        %v2628 = vld [vmem:[%s15 + $0x4] sm:$0x1]
        %v2629 = vld [vmem:[#allocation2 + $0x28] sm:$0xff]
        %v2630 = vld [vmem:[#allocation2 + $0x40] sm:$0xff]
        %v2631 = vlaneseq
        %v2632 = vshrl.u32 %v2631, 7
        %v2633 = vsub.s32 0, %v2632
        %v2634 = vrot.slane %v2628, %v2633
        %2637 = vrot.lane.b32.xlu0 %v2555, 127
        %v2638 = vpop.permute.xlu0 %2637
        %2639 = vrot.lane.b32.xlu0 %v2629, 127
        %v2640 = vpop.permute.xlu0 %2639
        %2641 = vrot.lane.b32.xlu0 %v2557, 127
        %v2642 = vpop.permute.xlu0 %2641
        %2643 = vrot.lane.b32.xlu0 %v2630, 127
        %v2644 = vpop.permute.xlu0 %2643
        %vm2645 = vcmask 1039360
        %v2646 = vsel %vm2645, %v2638, %v2640
        %v2647 = vsel %vm2645, %v2642, %v2644
        %v2650 = vmul.f32 %v2634, %v2646
        %v2651 = vmul.f32 %v2634, %v2647
        %v2652 = vadd.f32 %v2579, %v2650
        %v2653 = vadd.f32 %v2580, %v2651
        %v2654 = vld [vmem:[%s15 + $0x5] sm:$0x1]
        %v2655 = vlaneseq
        %v2656 = vshrl.u32 %v2655, 7
        %v2657 = vsub.s32 0, %v2656
        %v2658 = vrot.slane %v2654, %v2657
        %2659 = vrot.lane.b32.xlu0 %v2555, 126
        %v2660 = vpop.permute.xlu0 %2659
        %2661 = vrot.lane.b32.xlu0 %v2629, 126
        %v2662 = vpop.permute.xlu0 %2661
        %2663 = vrot.lane.b32.xlu0 %v2557, 126
        %v2664 = vpop.permute.xlu0 %2663
        %2665 = vrot.lane.b32.xlu0 %v2630, 126
        %v2666 = vpop.permute.xlu0 %2665
        %vm2667 = vcmask 1031168
        %v2668 = vsel %vm2667, %v2660, %v2662
        %v2669 = vsel %vm2667, %v2664, %v2666
        %v2672 = vmul.f32 %v2658, %v2668
        %v2673 = vmul.f32 %v2658, %v2669
        %v2674 = vadd.f32 %v2599, %v2672
        %v2675 = vadd.f32 %v2600, %v2673
        %v2676 = vld [vmem:[%s15 + $0x6] sm:$0x1]
        %v2677 = vlaneseq
        %v2678 = vshrl.u32 %v2677, 7
        %v2679 = vsub.s32 0, %v2678
        %v2680 = vrot.slane %v2676, %v2679
        %2681 = vrot.lane.b32.xlu0 %v2555, 125
        %v2682 = vpop.permute.xlu0 %2681
        %2683 = vrot.lane.b32.xlu0 %v2629, 125
        %v2684 = vpop.permute.xlu0 %2683
        %2685 = vrot.lane.b32.xlu0 %v2557, 125
        %v2686 = vpop.permute.xlu0 %2685
        %2687 = vrot.lane.b32.xlu0 %v2630, 125
        %v2688 = vpop.permute.xlu0 %2687
        %vm2689 = vcmask 1022976
        %v2690 = vsel %vm2689, %v2682, %v2684
        %v2691 = vsel %vm2689, %v2686, %v2688
        %v2694 = vmul.f32 %v2680, %v2690
        %v2695 = vmul.f32 %v2680, %v2691
        %v2696 = vadd.f32 %v2619, %v2694
        %v2697 = vadd.f32 %v2620, %v2695
        %v2698 = vadd.f32 %v2652, %v2674
        %v2699 = vadd.f32 %v2653, %v2675
        %v2700 = vadd.f32 %v2696, %v2626
        %v2701 = vadd.f32 %v2697, %v2627
        %v2702 = vadd.f32 %v2698, %v2700
        %v2703 = vadd.f32 %v2699, %v2701
        %v2704 = vld [vmem:[%s16] sm:$0x1]
        %v2706 = vlaneseq
        %v2707 = vshrl.u32 %v2706, 7
        %v2708 = vsub.s32 0, %v2707
        %v2709 = vrot.slane %v2704, %v2708
        %v2711 = vadd.f32 %v2702, %v2709
        %v2712 = vadd.f32 %v2703, %v2709
        %v2713 = vmul.f32 %v2711, %v642
        %v2714 = vmul.f32 %v2712, %v643
        %2715 = vst [vmem:[%s619] sm:$0xff] %v2713
        %2716 = vst [vmem:[%s619 + $0x8] sm:$0xff] %v2714
        %s2717 = sand.u32 %s405, 1
        %s2718 = scalar_lea.sflag [#allocation6], %s2717
        %s2719 = sand.u32 %s405, 1
        %s2720 = smul.addr %s2719, 16
        %s2721 = scalar_lea.vmem [#allocation15], %s2720
        // Predicated region
        $region113: #{tpu_custom_call.1} parent=87 // pred_check
          %p2722 = pneg %p415
        $region114: #{tpu_custom_call.1} parent=87 // pred_check_branch
          %2724 = sbr.rel (%p2722) target = $region116
        $region115: #{tpu_custom_call.1} parent=87 // pred_region
          %s2726 = ssub.s32 256, 256
          %2727 = vsyncadd %s2718, %s2726
          %s2728 = smul.addr %s35, 2
          %s2729 = smul.addr %s2728, 128
          %s2730 = scalar_lea.hbm %s17, %s2729
          %s2731 = sshll.u32 %s2721, 4
          %s2732 = int_to_ptr.vmem [resolvable:$true] %s2731
          %2737 = dma.vmem_to_hbm [thread:$0]  %s2732, 256, %s2730, %s2718, 128, 128, 8
        $region116: #{tpu_custom_call.1} parent=87 // pred_fallthru
          _
      $region88: #{tpu_custom_call.1} parent=5 // pred_fallthru
        _
      %p2738 = scmp.le.s32.totalorder 2, %s30
      // Predicated region
      $region117: #{tpu_custom_call.1} parent=5 // pred_check
        %p2739 = pneg %p2738
      $region118: #{tpu_custom_call.1} parent=5 // pred_check_branch
        %2741 = sbr.rel (%p2739) target = $region120
      $region119: #{tpu_custom_call.1} parent=5 // pred_region
        %s2742 = ssub.s32 %s30, 2
        // Predicated region
        $region121: #{tpu_custom_call.1} parent=119 // pred_check
          %p2743 = pneg %p421
        $region122: #{tpu_custom_call.1} parent=119 // pred_check_branch
          %2745 = sbr.rel (%p2743) target = $region124
        $region123: #{tpu_custom_call.1} parent=119 // pred_region
          %s2746 = sand.u32 %s406, 1
          %s2747 = scalar_lea.sflag [#allocation6], %s2746
          %s2748 = sand.u32 %s406, 1
          %s2749 = smul.addr %s2748, 16
          %s2750 = scalar_lea.vmem [#allocation15], %s2749
          %2751 = dma.done %s2747, 256
        $region124: #{tpu_custom_call.1} parent=119 // pred_fallthru
          _
      $region120: #{tpu_custom_call.1} parent=5 // pred_fallthru
        _
    $region6: #{tpu_custom_call.1} parent=1 // loop_footer
      %s34 = sadd.s32 1, %s30
    $region7: #{tpu_custom_call.1} parent=1 // loop_footer_branch
      %29 = sbr.rel target = $region3
    $region8: #{tpu_custom_call.1} parent=1 // loop_exit
      _
    %2752 = vsyncpa [#allocation5], 1
    %s2753 = scalar_lea.sflag [#allocation5], 1
    %2754 = vsyncpa %s2753, 1
    %2755 = vsyncpa [#allocation8], 1
    %2756 = vsyncpa [#allocation11], 1
    %2757 = vsyncpa [#allocation14], 1
    %2758 = vsyncpa [#allocation6], 1
    %s2759 = scalar_lea.sflag [#allocation6], 1
    %2760 = vsyncpa %s2759, 1

</llo_original>
